<compile_context>
chip_gen: v6e
topology: v6e:2x2x1
jax: 0.10.0
libtpu: 0.0.40
codegen_flags: <defaults>
</compile_context>

<pallas_src>
import jax
import jax.numpy as jnp
from jax import lax
from jax.experimental import pallas as pl
from jax.experimental.pallas import tpu as pltpu


def _round_up(x, m):
    return ((x + m - 1) // m) * m


def _fused_upsample_conv_kernel(xm_ref, xh_ref, w_ref, b_ref, o_ref):
    # xm_ref: (1, TH, W+2, C)     rows [t*TH, t*TH+TH) of the zero-padded original-res input
    # xh_ref: (1, 2,  W+2, C)     the 2 halo rows [t*TH+TH, t*TH+TH+2)
    # w_ref : (8, 2C, C)          folded sub-pixel weights, index = 4a+2b+u, K order = v*C+cin
    # b_ref : (1, 2C)             bias tiled twice (lane order b*C + c), f32
    # o_ref : (1, TH, 2, W, 2C)   sub-row a in dim 2, lane = b*C + c  (memory order == NHWC)
    TH = xm_ref.shape[1]
    Wp = xm_ref.shape[2]
    C = xm_ref.shape[3]
    W = Wp - 2

    xm = xm_ref[0]                                   # (TH, Wp, C)
    xh = xh_ref[0]                                   # (2,  Wp, C)
    bias_row = b_ref[0].astype(jnp.float32)          # (2C,)

    # v-merged slabs, built straight from the two refs (no x_full intermediate copy):
    #   slabs[b][:, v*C:(v+1)*C] = padded columns (b+v) .. (b+v)+W of the tile (+halo rows).
    slabs = []
    for b in range(2):
        top = jnp.concatenate([xm[:, b:b + W, :], xm[:, b + 1:b + 1 + W, :]], axis=-1)
        bot = jnp.concatenate([xh[:, b:b + W, :], xh[:, b + 1:b + 1 + W, :]], axis=-1)
        slabs.append(jnp.concatenate([top, bot], axis=0).reshape((TH + 2) * W, 2 * C))

    # Each output sub-position (a, b) is a 2(u) x 2(v) conv over the original-res input; the
    # v taps are folded into K (K = 2C), leaving 2 MXU matmuls per sub-position (8 total).
    for a in range(2):
        accs = []
        for b in range(2):
            idx = 4 * a + 2 * b
            acc = jnp.dot(slabs[b][a * W:(a + TH) * W, :], w_ref[idx],
                          preferred_element_type=jnp.float32)
            acc = acc + jnp.dot(slabs[b][(a + 1) * W:(a + 1 + TH) * W, :], w_ref[idx + 1],
                                preferred_element_type=jnp.float32)
            accs.append(acc)                          # (TH*W, C)
        row = jnp.concatenate(accs, axis=-1) + bias_row          # (TH*W, 2C), lane = b*C + c
        o_ref[0, :, a] = row.reshape(TH, W, 2 * C).astype(o_ref.dtype)


def _device_vmem_capacity():
    try:
        info = pltpu.get_tpu_info()
        cap = int(getattr(info, "vmem_capacity_bytes", 0))
        if cap > 0:
            return cap
    except Exception:
        pass
    return 64 * 2 ** 20      # conservative default = v7x per-TensorCore VMEM


def _estimate_vmem(th, W8, C, out_itemsize):
    Wp8 = W8 + 2
    main_in = 2 * th * Wp8 * C * 2                     # double-buffered bf16 main tile
    halo_in = 2 * 2 * Wp8 * C * 2                      # double-buffered bf16 halo
    out_blk = 2 * th * 2 * W8 * 2 * C * out_itemsize   # double-buffered output block
    slab_b = 2 * (th + 2) * W8 * 2 * C * 2             # two v-merged bf16 slabs
    accs = 4 * th * W8 * C * 4                         # live f32 accumulators / row slab
    weights = 8 * 2 * C * C * 2 + 2 * C * 4            # single-buffered folded weights + bias
    return main_in + halo_in + out_blk + slab_b + accs + weights + (1 << 20)


def _pick_row_tile(N, H, W8, C, out_itemsize, requested, vmem_budget):
    """Row tile (multiple of 8) so the working set stays inside the per-device VMEM budget."""
    max_th = _round_up(H, 8)
    if requested is not None:
        th = min(max(8, _round_up(int(requested), 8)), max_th)
    else:
        th = min(max_th, 256)
        if N == 1 and max_th > 8:                       # keep >=2 row tiles so both v7x TCs work
            th = min(th, _round_up((H + 1) // 2, 8))
        while th > 8 and _estimate_vmem(th, W8, C, out_itemsize) > vmem_budget:
            th -= 8
        for cand in range(th, 7, -8):                   # prefer a tile that divides H (no dead rows)
            if H % cand == 0 and cand * 2 >= th:
                th = cand
                break
    assert th % 2 == 0
    return th


def upsample_block_forward(x_nchw, weight_oihw, bias, *, row_tile=None,
                           compute_dtype=jnp.bfloat16, output_format="NCHW"):
    """F.interpolate(x, scale_factor=2.0, mode='nearest') followed by Conv2d(C, C, 3, 1, 1).

    output_format="NHWC" skips the final (API-boundary) transpose entirely; the kernel's
    output memory order is already NHWC-compatible, so that path has zero extra HBM passes.
    """
    assert output_format in ("NCHW", "NHWC")
    N, C, H, W = x_nchw.shape
    out_dtype = x_nchw.dtype
    out_itemsize = jnp.dtype(out_dtype).itemsize

    W8 = _round_up(W, 8)            # always take the flattened big-M MXU path
    Wp8 = W8 + 2

    vmem_cap = _device_vmem_capacity()
    vmem_budget = int(min(max(0.40 * vmem_cap, 16 * 2 ** 20), 64 * 2 ** 20))
    TH = _pick_row_tile(N, H, W8, C, out_itemsize, row_tile, vmem_budget)
    H_pad = _round_up(H, TH)
    n_row_tiles = H_pad // TH

    # --- input glue: NCHW -> NHWC (channels on lanes), bf16 cast, zero-pad (1 + alignment).
    x_nhwc = jnp.transpose(x_nchw, (0, 2, 3, 1)).astype(compute_dtype)
    x_p = jnp.pad(x_nhwc, ((0, 0), (1, H_pad - H + 1), (1, W8 - W + 1), (0, 0)))

    # --- weights: fold nearest-2x upsample into 2x2 taps per sub-position, then fold the
    #     horizontal tap v into the contraction dim (K = 2C, order v*C + cin).
    fold = jnp.array([[[1., 0., 0.], [0., 1., 1.]],
                      [[1., 1., 0.], [0., 0., 1.]]], dtype=jnp.float32)    # [a|b, u|v, k]
    w_hwio = jnp.transpose(weight_oihw, (2, 3, 1, 0)).astype(jnp.float32)  # (3,3,Cin,Cout)
    w_sub = jnp.einsum('auy,bvx,yxio->abuvio', fold, fold, w_hwio,
                       precision=lax.Precision.HIGHEST)                    # (2,2,2,2,Cin,Cout)
    w_k = w_sub.reshape(8, 2 * C, C).astype(compute_dtype)                 # index = 4a+2b+u
    b2 = jnp.tile(bias.reshape(1, C).astype(jnp.float32), (1, 2))          # (1, 2C), lane b*C+c

    est = _estimate_vmem(TH, W8, C, out_itemsize)
    vmem_limit = int(min(int(0.875 * vmem_cap), max(32 * 2 ** 20, 2 * est)))

    def build(single_buffer_weights):
        if single_buffer_weights:
            const_kwargs = {"pipeline_mode": pl.Buffered(1)}   # constant index map -> 1 buffer
        else:
            const_kwargs = {}
        return pl.pallas_call(
            _fused_upsample_conv_kernel,
            out_shape=jax.ShapeDtypeStruct((N, H_pad, 2, W8, 2 * C), out_dtype),
            grid_spec=pltpu.PrefetchScalarGridSpec(
                num_scalar_prefetch=0,
                grid=(N, n_row_tiles),
                in_specs=[
                    # main row tile: padded rows [t*TH, t*TH + TH)
                    pl.BlockSpec((1, TH, Wp8, C), lambda n, t: (n, t, 0, 0)),
                    # 2-row halo: padded rows [(t+1)*TH, (t+1)*TH + 2); TH is forced even.
                    pl.BlockSpec((1, 2, Wp8, C), lambda n, t: (n, (t + 1) * (TH // 2), 0, 0)),
                    pl.BlockSpec((8, 2 * C, C), lambda n, t: (0, 0, 0), **const_kwargs),
                    pl.BlockSpec((1, 2 * C), lambda n, t: (0, 0), **const_kwargs),
                ],
                out_specs=pl.BlockSpec((1, TH, 2, W8, 2 * C), lambda n, t: (n, t, 0, 0, 0)),
            ),
            compiler_params=pltpu.CompilerParams(
                dimension_semantics=("parallel", "parallel"),
                vmem_limit_bytes=vmem_limit),
        )

    try:
        out5 = build(True)(x_p, x_p, w_k, b2)
    except Exception:
        # Fallback if single-buffered (pl.Buffered(1)) specs are rejected by this jax build.
        out5 = build(False)(x_p, x_p, w_k, b2)

    # (N, H_pad, 2, W8, 2C): memory order is n, (2i+a), w, (b, c) -> free reshape to NHWC.
    if H_pad != H:
        out5 = out5[:, :H]
    if W8 != W:
        out5 = out5[:, :, :, :W, :]
    out_nhwc = out5.reshape(N, 2 * H, 2 * W, C)

    if output_format == "NHWC":
        return out_nhwc
    return jnp.transpose(out_nhwc, (0, 3, 1, 2))      # only remaining HBM pass (API boundary)


def _reference_forward(x_nchw, weight_oihw, bias):
    """Pure-JAX f32 reference (nearest-2x upsample + lax.conv)."""
    x_up = jnp.repeat(jnp.repeat(x_nchw, 2, axis=2), 2, axis=3)
    out = lax.conv_general_dilated(
        x_up, weight_oihw,
        window_strides=(1, 1), padding=((1, 1), (1, 1)),
        dimension_numbers=("NCHW", "OIHW", "NCHW"),
        precision=lax.Precision.HIGHEST)
    return out + bias[None, :, None, None]


if __name__ == "__main__":
    key = jax.random.PRNGKey(0)
    k_x, k_w, k_b = jax.random.split(key, 3)

    N, C, H, W = 2, 4, 16, 16        # output is (2, 4, 32, 32)

    x = jax.random.normal(k_x, (N, C, H, W), dtype=jnp.float32)

    # Conv2d default init range: uniform(-1/sqrt(fan_in), +1/sqrt(fan_in)).
    fan_in = C * 3 * 3
    bound = 1.0 / float(fan_in) ** 0.5
    weight = jax.random.uniform(k_w, (C, C, 3, 3), jnp.float32, -bound, bound)   # OIHW
    bias = jax.random.uniform(k_b, (C,), jnp.float32, -bound, bound)

    ref = jax.block_until_ready(_reference_forward(x, weight, bias))

    # Multi-row-tile path (exercises the halo BlockSpec): grid (2, 2).
    out = jax.block_until_ready(upsample_block_forward(x, weight, bias, row_tile=8))
    assert out.shape == (N, C, 2 * H, 2 * W), out.shape
    err = float(jnp.max(jnp.abs(out - ref)))
    assert jnp.allclose(out, ref, atol=5e-2, rtol=5e-2), err

    # Auto-tiled path (device-aware tile pick, single row tile): grid (2, 1).
    out2 = jax.block_until_ready(upsample_block_forward(x, weight, bias))
    err2 = float(jnp.max(jnp.abs(out2 - ref)))
    assert jnp.allclose(out2, ref, atol=5e-2, rtol=5e-2), err2

    print("KERNEL_OK")
</pallas_src>

<mosaic_0001>
module attributes {stable_mosaic.version = 11 : i64} {
  func.func @_fused_upsample_conv_kernel(%arg0: i32, %arg1: i32, %arg2: memref<1x8x18x4xbf16, #tpu.memory_space<vmem>>, %arg3: memref<1x2x18x4xbf16, #tpu.memory_space<vmem>>, %arg4: memref<8x8x4xbf16, #tpu.memory_space<vmem>>, %arg5: memref<1x8xf32, #tpu.memory_space<vmem>>, %arg6: memref<1x8x2x16x8xf32, #tpu.memory_space<vmem>>) attributes {dimension_semantics = [#tpu.dimension_semantics<parallel>, #tpu.dimension_semantics<parallel>], iteration_bounds = array<i64: 2, 2>, scalar_prefetch = 0 : i64, scratch_operands = 0 : i64, tpu.core_type = #tpu.core_type<tc>, window_params = [{transform_indices = @transform_0, window_bounds = array<i64: 1, 8, 18, 4>}, {transform_indices = @transform_1, window_bounds = array<i64: 1, 2, 18, 4>}, {pipeline_mode = #tpu.pipeline_mode<synchronous>, transform_indices = @transform_2, window_bounds = array<i64: 8, 8, 4>}, {pipeline_mode = #tpu.pipeline_mode<synchronous>, transform_indices = @transform_3, window_bounds = array<i64: 1, 8>}, {transform_indices = @transform_4, window_bounds = array<i64: 1, 8, 2, 16, 8>}]} {
    %c0 = arith.constant 0 : index
    %c0_0 = arith.constant 0 : index
    %c0_1 = arith.constant 0 : index
    %c0_2 = arith.constant 0 : index
    %0 = vector.load %arg2[%c0, %c0_0, %c0_1, %c0_2] : memref<1x8x18x4xbf16, #tpu.memory_space<vmem>>, vector<1x8x18x4xbf16>
    %1 = vector.shape_cast %0 : vector<1x8x18x4xbf16> to vector<8x18x4xbf16>
    %c0_3 = arith.constant 0 : index
    %c0_4 = arith.constant 0 : index
    %c0_5 = arith.constant 0 : index
    %c0_6 = arith.constant 0 : index
    %2 = vector.load %arg3[%c0_3, %c0_4, %c0_5, %c0_6] : memref<1x2x18x4xbf16, #tpu.memory_space<vmem>>, vector<1x2x18x4xbf16>
    %3 = vector.shape_cast %2 : vector<1x2x18x4xbf16> to vector<2x18x4xbf16>
    %c0_7 = arith.constant 0 : index
    %c0_8 = arith.constant 0 : index
    %4 = vector.load %arg5[%c0_7, %c0_8] : memref<1x8xf32, #tpu.memory_space<vmem>>, vector<1x8xf32>
    %5 = vector.shape_cast %4 : vector<1x8xf32> to vector<8xf32>
    %6 = vector.extract_strided_slice %1 {offsets = [0, 0, 0], sizes = [8, 16, 4], strides = [1, 1, 1]} : vector<8x18x4xbf16> to vector<8x16x4xbf16>
    %7 = vector.extract_strided_slice %1 {offsets = [0, 1, 0], sizes = [8, 16, 4], strides = [1, 1, 1]} : vector<8x18x4xbf16> to vector<8x16x4xbf16>
    %8 = tpu.concatenate %6, %7 in 2 : vector<8x16x4xbf16>, vector<8x16x4xbf16> -> vector<8x16x8xbf16>
    %9 = vector.extract_strided_slice %3 {offsets = [0, 0, 0], sizes = [2, 16, 4], strides = [1, 1, 1]} : vector<2x18x4xbf16> to vector<2x16x4xbf16>
    %10 = vector.extract_strided_slice %3 {offsets = [0, 1, 0], sizes = [2, 16, 4], strides = [1, 1, 1]} : vector<2x18x4xbf16> to vector<2x16x4xbf16>
    %11 = tpu.concatenate %9, %10 in 2 : vector<2x16x4xbf16>, vector<2x16x4xbf16> -> vector<2x16x8xbf16>
    %12 = tpu.concatenate %8, %11 in 0 : vector<8x16x8xbf16>, vector<2x16x8xbf16> -> vector<10x16x8xbf16>
    %13 = vector.shape_cast %12 : vector<10x16x8xbf16> to vector<160x8xbf16>
    %14 = vector.extract_strided_slice %1 {offsets = [0, 1, 0], sizes = [8, 16, 4], strides = [1, 1, 1]} : vector<8x18x4xbf16> to vector<8x16x4xbf16>
    %15 = vector.extract_strided_slice %1 {offsets = [0, 2, 0], sizes = [8, 16, 4], strides = [1, 1, 1]} : vector<8x18x4xbf16> to vector<8x16x4xbf16>
    %16 = tpu.concatenate %14, %15 in 2 : vector<8x16x4xbf16>, vector<8x16x4xbf16> -> vector<8x16x8xbf16>
    %17 = vector.extract_strided_slice %3 {offsets = [0, 1, 0], sizes = [2, 16, 4], strides = [1, 1, 1]} : vector<2x18x4xbf16> to vector<2x16x4xbf16>
    %18 = vector.extract_strided_slice %3 {offsets = [0, 2, 0], sizes = [2, 16, 4], strides = [1, 1, 1]} : vector<2x18x4xbf16> to vector<2x16x4xbf16>
    %19 = tpu.concatenate %17, %18 in 2 : vector<2x16x4xbf16>, vector<2x16x4xbf16> -> vector<2x16x8xbf16>
    %20 = tpu.concatenate %16, %19 in 0 : vector<8x16x8xbf16>, vector<2x16x8xbf16> -> vector<10x16x8xbf16>
    %21 = vector.shape_cast %20 : vector<10x16x8xbf16> to vector<160x8xbf16>
    %22 = vector.extract_strided_slice %13 {offsets = [0, 0], sizes = [128, 8], strides = [1, 1]} : vector<160x8xbf16> to vector<128x8xbf16>
    %c0_9 = arith.constant 0 : index
    %c0_10 = arith.constant 0 : index
    %c0_11 = arith.constant 0 : index
    %23 = vector.load %arg4[%c0_9, %c0_10, %c0_11] : memref<8x8x4xbf16, #tpu.memory_space<vmem>>, vector<1x8x4xbf16>
    %24 = vector.shape_cast %23 : vector<1x8x4xbf16> to vector<8x4xbf16>
    %cst = arith.constant dense<0.000000e+00> : vector<128x4xf32>
    %25 = tpu.matmul %22, %24, %cst {dimension_numbers = #tpu.dot_dimension_numbers<[1], [0], [0], [1], [0, 0, 1, 1], [], []>} : vector<128x8xbf16>, vector<8x4xbf16>, vector<128x4xf32> -> vector<128x4xf32>
    %26 = vector.extract_strided_slice %13 {offsets = [16, 0], sizes = [128, 8], strides = [1, 1]} : vector<160x8xbf16> to vector<128x8xbf16>
    %c1 = arith.constant 1 : index
    %c0_12 = arith.constant 0 : index
    %c0_13 = arith.constant 0 : index
    %27 = vector.load %arg4[%c1, %c0_12, %c0_13] : memref<8x8x4xbf16, #tpu.memory_space<vmem>>, vector<1x8x4xbf16>
    %28 = vector.shape_cast %27 : vector<1x8x4xbf16> to vector<8x4xbf16>
    %cst_14 = arith.constant dense<0.000000e+00> : vector<128x4xf32>
    %29 = tpu.matmul %26, %28, %cst_14 {dimension_numbers = #tpu.dot_dimension_numbers<[1], [0], [0], [1], [0, 0, 1, 1], [], []>} : vector<128x8xbf16>, vector<8x4xbf16>, vector<128x4xf32> -> vector<128x4xf32>
    %30 = arith.addf %25, %29 : vector<128x4xf32>
    %31 = vector.extract_strided_slice %21 {offsets = [0, 0], sizes = [128, 8], strides = [1, 1]} : vector<160x8xbf16> to vector<128x8xbf16>
    %c2 = arith.constant 2 : index
    %c0_15 = arith.constant 0 : index
    %c0_16 = arith.constant 0 : index
    %32 = vector.load %arg4[%c2, %c0_15, %c0_16] : memref<8x8x4xbf16, #tpu.memory_space<vmem>>, vector<1x8x4xbf16>
    %33 = vector.shape_cast %32 : vector<1x8x4xbf16> to vector<8x4xbf16>
    %cst_17 = arith.constant dense<0.000000e+00> : vector<128x4xf32>
    %34 = tpu.matmul %31, %33, %cst_17 {dimension_numbers = #tpu.dot_dimension_numbers<[1], [0], [0], [1], [0, 0, 1, 1], [], []>} : vector<128x8xbf16>, vector<8x4xbf16>, vector<128x4xf32> -> vector<128x4xf32>
    %35 = vector.extract_strided_slice %21 {offsets = [16, 0], sizes = [128, 8], strides = [1, 1]} : vector<160x8xbf16> to vector<128x8xbf16>
    %c3 = arith.constant 3 : index
    %c0_18 = arith.constant 0 : index
    %c0_19 = arith.constant 0 : index
    %36 = vector.load %arg4[%c3, %c0_18, %c0_19] : memref<8x8x4xbf16, #tpu.memory_space<vmem>>, vector<1x8x4xbf16>
    %37 = vector.shape_cast %36 : vector<1x8x4xbf16> to vector<8x4xbf16>
    %cst_20 = arith.constant dense<0.000000e+00> : vector<128x4xf32>
    %38 = tpu.matmul %35, %37, %cst_20 {dimension_numbers = #tpu.dot_dimension_numbers<[1], [0], [0], [1], [0, 0, 1, 1], [], []>} : vector<128x8xbf16>, vector<8x4xbf16>, vector<128x4xf32> -> vector<128x4xf32>
    %39 = arith.addf %34, %38 : vector<128x4xf32>
    %40 = tpu.concatenate %30, %39 in 1 : vector<128x4xf32>, vector<128x4xf32> -> vector<128x8xf32>
    %41 = vector.shape_cast %5 : vector<8xf32> to vector<1x8xf32>
    %42 = vector.broadcast %41 : vector<1x8xf32> to vector<128x8xf32>
    %43 = arith.addf %40, %42 : vector<128x8xf32>
    %44 = vector.shape_cast %43 : vector<128x8xf32> to vector<8x16x8xf32>
    %c0_21 = arith.constant 0 : index
    %c0_22 = arith.constant 0 : index
    %c0_23 = arith.constant 0 : index
    %c0_24 = arith.constant 0 : index
    %c0_25 = arith.constant 0 : index
    %45 = vector.load %arg6[%c0_21, %c0_22, %c0_23, %c0_24, %c0_25] : memref<1x8x2x16x8xf32, #tpu.memory_space<vmem>>, vector<1x8x1x16x8xf32>
    %46 = vector.shape_cast %45 : vector<1x8x1x16x8xf32> to vector<8x16x8xf32>
    %47 = vector.shape_cast %44 : vector<8x16x8xf32> to vector<1x8x1x16x8xf32>
    tpu.vector_store %arg6[%c0_21, %c0_22, %c0_23, %c0_24, %c0_25], %47 {strides = array<i32>} : memref<1x8x2x16x8xf32, #tpu.memory_space<vmem>>, vector<1x8x1x16x8xf32>,
    %48 = vector.extract_strided_slice %13 {offsets = [16, 0], sizes = [128, 8], strides = [1, 1]} : vector<160x8xbf16> to vector<128x8xbf16>
    %c4 = arith.constant 4 : index
    %c0_26 = arith.constant 0 : index
    %c0_27 = arith.constant 0 : index
    %49 = vector.load %arg4[%c4, %c0_26, %c0_27] : memref<8x8x4xbf16, #tpu.memory_space<vmem>>, vector<1x8x4xbf16>
    %50 = vector.shape_cast %49 : vector<1x8x4xbf16> to vector<8x4xbf16>
    %cst_28 = arith.constant dense<0.000000e+00> : vector<128x4xf32>
    %51 = tpu.matmul %48, %50, %cst_28 {dimension_numbers = #tpu.dot_dimension_numbers<[1], [0], [0], [1], [0, 0, 1, 1], [], []>} : vector<128x8xbf16>, vector<8x4xbf16>, vector<128x4xf32> -> vector<128x4xf32>
    %52 = vector.extract_strided_slice %13 {offsets = [32, 0], sizes = [128, 8], strides = [1, 1]} : vector<160x8xbf16> to vector<128x8xbf16>
    %c5 = arith.constant 5 : index
    %c0_29 = arith.constant 0 : index
    %c0_30 = arith.constant 0 : index
    %53 = vector.load %arg4[%c5, %c0_29, %c0_30] : memref<8x8x4xbf16, #tpu.memory_space<vmem>>, vector<1x8x4xbf16>
    %54 = vector.shape_cast %53 : vector<1x8x4xbf16> to vector<8x4xbf16>
    %cst_31 = arith.constant dense<0.000000e+00> : vector<128x4xf32>
    %55 = tpu.matmul %52, %54, %cst_31 {dimension_numbers = #tpu.dot_dimension_numbers<[1], [0], [0], [1], [0, 0, 1, 1], [], []>} : vector<128x8xbf16>, vector<8x4xbf16>, vector<128x4xf32> -> vector<128x4xf32>
    %56 = arith.addf %51, %55 : vector<128x4xf32>
    %57 = vector.extract_strided_slice %21 {offsets = [16, 0], sizes = [128, 8], strides = [1, 1]} : vector<160x8xbf16> to vector<128x8xbf16>
    %c6 = arith.constant 6 : index
    %c0_32 = arith.constant 0 : index
    %c0_33 = arith.constant 0 : index
    %58 = vector.load %arg4[%c6, %c0_32, %c0_33] : memref<8x8x4xbf16, #tpu.memory_space<vmem>>, vector<1x8x4xbf16>
    %59 = vector.shape_cast %58 : vector<1x8x4xbf16> to vector<8x4xbf16>
    %cst_34 = arith.constant dense<0.000000e+00> : vector<128x4xf32>
    %60 = tpu.matmul %57, %59, %cst_34 {dimension_numbers = #tpu.dot_dimension_numbers<[1], [0], [0], [1], [0, 0, 1, 1], [], []>} : vector<128x8xbf16>, vector<8x4xbf16>, vector<128x4xf32> -> vector<128x4xf32>
    %61 = vector.extract_strided_slice %21 {offsets = [32, 0], sizes = [128, 8], strides = [1, 1]} : vector<160x8xbf16> to vector<128x8xbf16>
    %c7 = arith.constant 7 : index
    %c0_35 = arith.constant 0 : index
    %c0_36 = arith.constant 0 : index
    %62 = vector.load %arg4[%c7, %c0_35, %c0_36] : memref<8x8x4xbf16, #tpu.memory_space<vmem>>, vector<1x8x4xbf16>
    %63 = vector.shape_cast %62 : vector<1x8x4xbf16> to vector<8x4xbf16>
    %cst_37 = arith.constant dense<0.000000e+00> : vector<128x4xf32>
    %64 = tpu.matmul %61, %63, %cst_37 {dimension_numbers = #tpu.dot_dimension_numbers<[1], [0], [0], [1], [0, 0, 1, 1], [], []>} : vector<128x8xbf16>, vector<8x4xbf16>, vector<128x4xf32> -> vector<128x4xf32>
    %65 = arith.addf %60, %64 : vector<128x4xf32>
    %66 = tpu.concatenate %56, %65 in 1 : vector<128x4xf32>, vector<128x4xf32> -> vector<128x8xf32>
    %67 = vector.shape_cast %5 : vector<8xf32> to vector<1x8xf32>
    %68 = vector.broadcast %67 : vector<1x8xf32> to vector<128x8xf32>
    %69 = arith.addf %66, %68 : vector<128x8xf32>
    %70 = vector.shape_cast %69 : vector<128x8xf32> to vector<8x16x8xf32>
    %c0_38 = arith.constant 0 : index
    %c0_39 = arith.constant 0 : index
    %c1_40 = arith.constant 1 : index
    %c0_41 = arith.constant 0 : index
    %c0_42 = arith.constant 0 : index
    %71 = vector.load %arg6[%c0_38, %c0_39, %c1_40, %c0_41, %c0_42] : memref<1x8x2x16x8xf32, #tpu.memory_space<vmem>>, vector<1x8x1x16x8xf32>
    %72 = vector.shape_cast %71 : vector<1x8x1x16x8xf32> to vector<8x16x8xf32>
    %73 = vector.shape_cast %70 : vector<8x16x8xf32> to vector<1x8x1x16x8xf32>
    tpu.vector_store %arg6[%c0_38, %c0_39, %c1_40, %c0_41, %c0_42], %73 {strides = array<i32>} : memref<1x8x2x16x8xf32, #tpu.memory_space<vmem>>, vector<1x8x1x16x8xf32>,
    return
  }
  func.func @transform_0(%arg0: i32, %arg1: i32) -> (i32, i32, i32, i32) {
    %c0_i32 = arith.constant 0 : i32
    %c0_i32_0 = arith.constant 0 : i32
    %c0_i32_1 = arith.constant 0 : i32
    return %arg0, %arg1, %c0_i32, %c0_i32_0 : i32, i32, i32, i32
  }
  func.func @transform_1(%arg0: i32, %arg1: i32) -> (i32, i32, i32, i32) {
    %c1_i32 = arith.constant 1 : i32
    %0 = arith.addi %arg1, %c1_i32 : i32
    %c4_i32 = arith.constant 4 : i32
    %1 = arith.muli %0, %c4_i32 : i32
    %c0_i32 = arith.constant 0 : i32
    %c0_i32_0 = arith.constant 0 : i32
    %c0_i32_1 = arith.constant 0 : i32
    return %arg0, %1, %c0_i32, %c0_i32_0 : i32, i32, i32, i32
  }
  func.func @transform_2(%arg0: i32, %arg1: i32) -> (i32, i32, i32) {
    %c0_i32 = arith.constant 0 : i32
    %c0_i32_0 = arith.constant 0 : i32
    %c0_i32_1 = arith.constant 0 : i32
    %c0_i32_2 = arith.constant 0 : i32
    return %c0_i32, %c0_i32_0, %c0_i32_1 : i32, i32, i32
  }
  func.func @transform_3(%arg0: i32, %arg1: i32) -> (i32, i32) {
    %c0_i32 = arith.constant 0 : i32
    %c0_i32_0 = arith.constant 0 : i32
    %c0_i32_1 = arith.constant 0 : i32
    return %c0_i32, %c0_i32_0 : i32, i32
  }
  func.func @transform_4(%arg0: i32, %arg1: i32) -> (i32, i32, i32, i32, i32) {
    %c0_i32 = arith.constant 0 : i32
    %c0_i32_0 = arith.constant 0 : i32
    %c0_i32_1 = arith.constant 0 : i32
    %c0_i32_2 = arith.constant 0 : i32
    return %arg0, %arg1, %c0_i32, %c0_i32_0, %c0_i32_1 : i32, i32, i32, i32, i32
  }
}

module attributes {stable_mosaic.version = 11 : i64} {
  func.func @_fused_upsample_conv_kernel(%arg0: i32, %arg1: i32, %arg2: memref<1x8x18x4xbf16, #tpu.memory_space<vmem>>, %arg3: memref<1x2x18x4xbf16, #tpu.memory_space<vmem>>, %arg4: memref<8x8x4xbf16, #tpu.memory_space<vmem>>, %arg5: memref<1x8xf32, #tpu.memory_space<vmem>>, %arg6: memref<1x8x2x16x8xf32, #tpu.memory_space<vmem>>) attributes {dimension_semantics = [#tpu.dimension_semantics<parallel>, #tpu.dimension_semantics<parallel>], iteration_bounds = array<i64: 2, 2>, scalar_prefetch = 0 : i64, scratch_operands = 0 : i64, tpu.core_type = #tpu.core_type<tc>, window_params = [{transform_indices = @transform_0, window_bounds = array<i64: 1, 8, 18, 4>}, {transform_indices = @transform_1, window_bounds = array<i64: 1, 2, 18, 4>}, {pipeline_mode = #tpu.pipeline_mode<synchronous>, transform_indices = @transform_2, window_bounds = array<i64: 8, 8, 4>}, {pipeline_mode = #tpu.pipeline_mode<synchronous>, transform_indices = @transform_3, window_bounds = array<i64: 1, 8>}, {transform_indices = @transform_4, window_bounds = array<i64: 1, 8, 2, 16, 8>}]} {
    %c0 = arith.constant 0 : index
    %c0_0 = arith.constant 0 : index
    %c0_1 = arith.constant 0 : index
    %c0_2 = arith.constant 0 : index
    %0 = vector.load %arg2[%c0, %c0_0, %c0_1, %c0_2] : memref<1x8x18x4xbf16, #tpu.memory_space<vmem>>, vector<1x8x18x4xbf16>
    %1 = vector.shape_cast %0 : vector<1x8x18x4xbf16> to vector<8x18x4xbf16>
    %c0_3 = arith.constant 0 : index
    %c0_4 = arith.constant 0 : index
    %c0_5 = arith.constant 0 : index
    %c0_6 = arith.constant 0 : index
    %2 = vector.load %arg3[%c0_3, %c0_4, %c0_5, %c0_6] : memref<1x2x18x4xbf16, #tpu.memory_space<vmem>>, vector<1x2x18x4xbf16>
    %3 = vector.shape_cast %2 : vector<1x2x18x4xbf16> to vector<2x18x4xbf16>
    %c0_7 = arith.constant 0 : index
    %c0_8 = arith.constant 0 : index
    %4 = vector.load %arg5[%c0_7, %c0_8] : memref<1x8xf32, #tpu.memory_space<vmem>>, vector<1x8xf32>
    %5 = vector.shape_cast %4 : vector<1x8xf32> to vector<8xf32>
    %6 = vector.extract_strided_slice %1 {offsets = [0, 0, 0], sizes = [8, 16, 4], strides = [1, 1, 1]} : vector<8x18x4xbf16> to vector<8x16x4xbf16>
    %7 = vector.extract_strided_slice %1 {offsets = [0, 1, 0], sizes = [8, 16, 4], strides = [1, 1, 1]} : vector<8x18x4xbf16> to vector<8x16x4xbf16>
    %8 = tpu.concatenate %6, %7 in 2 : vector<8x16x4xbf16>, vector<8x16x4xbf16> -> vector<8x16x8xbf16>
    %9 = vector.extract_strided_slice %3 {offsets = [0, 0, 0], sizes = [2, 16, 4], strides = [1, 1, 1]} : vector<2x18x4xbf16> to vector<2x16x4xbf16>
    %10 = vector.extract_strided_slice %3 {offsets = [0, 1, 0], sizes = [2, 16, 4], strides = [1, 1, 1]} : vector<2x18x4xbf16> to vector<2x16x4xbf16>
    %11 = tpu.concatenate %9, %10 in 2 : vector<2x16x4xbf16>, vector<2x16x4xbf16> -> vector<2x16x8xbf16>
    %12 = tpu.concatenate %8, %11 in 0 : vector<8x16x8xbf16>, vector<2x16x8xbf16> -> vector<10x16x8xbf16>
    %13 = vector.shape_cast %12 : vector<10x16x8xbf16> to vector<160x8xbf16>
    %14 = vector.extract_strided_slice %1 {offsets = [0, 1, 0], sizes = [8, 16, 4], strides = [1, 1, 1]} : vector<8x18x4xbf16> to vector<8x16x4xbf16>
    %15 = vector.extract_strided_slice %1 {offsets = [0, 2, 0], sizes = [8, 16, 4], strides = [1, 1, 1]} : vector<8x18x4xbf16> to vector<8x16x4xbf16>
    %16 = tpu.concatenate %14, %15 in 2 : vector<8x16x4xbf16>, vector<8x16x4xbf16> -> vector<8x16x8xbf16>
    %17 = vector.extract_strided_slice %3 {offsets = [0, 1, 0], sizes = [2, 16, 4], strides = [1, 1, 1]} : vector<2x18x4xbf16> to vector<2x16x4xbf16>
    %18 = vector.extract_strided_slice %3 {offsets = [0, 2, 0], sizes = [2, 16, 4], strides = [1, 1, 1]} : vector<2x18x4xbf16> to vector<2x16x4xbf16>
    %19 = tpu.concatenate %17, %18 in 2 : vector<2x16x4xbf16>, vector<2x16x4xbf16> -> vector<2x16x8xbf16>
    %20 = tpu.concatenate %16, %19 in 0 : vector<8x16x8xbf16>, vector<2x16x8xbf16> -> vector<10x16x8xbf16>
    %21 = vector.shape_cast %20 : vector<10x16x8xbf16> to vector<160x8xbf16>
    %22 = vector.extract_strided_slice %13 {offsets = [0, 0], sizes = [128, 8], strides = [1, 1]} : vector<160x8xbf16> to vector<128x8xbf16>
    %c0_9 = arith.constant 0 : index
    %c0_10 = arith.constant 0 : index
    %c0_11 = arith.constant 0 : index
    %23 = vector.load %arg4[%c0_9, %c0_10, %c0_11] : memref<8x8x4xbf16, #tpu.memory_space<vmem>>, vector<1x8x4xbf16>
    %24 = vector.shape_cast %23 : vector<1x8x4xbf16> to vector<8x4xbf16>
    %cst = arith.constant dense<0.000000e+00> : vector<128x4xf32>
    %25 = tpu.matmul %22, %24, %cst {dimension_numbers = #tpu.dot_dimension_numbers<[1], [0], [0], [1], [0, 0, 1, 1], [], []>} : vector<128x8xbf16>, vector<8x4xbf16>, vector<128x4xf32> -> vector<128x4xf32>
    %26 = vector.extract_strided_slice %13 {offsets = [16, 0], sizes = [128, 8], strides = [1, 1]} : vector<160x8xbf16> to vector<128x8xbf16>
    %c1 = arith.constant 1 : index
    %c0_12 = arith.constant 0 : index
    %c0_13 = arith.constant 0 : index
    %27 = vector.load %arg4[%c1, %c0_12, %c0_13] : memref<8x8x4xbf16, #tpu.memory_space<vmem>>, vector<1x8x4xbf16>
    %28 = vector.shape_cast %27 : vector<1x8x4xbf16> to vector<8x4xbf16>
    %cst_14 = arith.constant dense<0.000000e+00> : vector<128x4xf32>
    %29 = tpu.matmul %26, %28, %cst_14 {dimension_numbers = #tpu.dot_dimension_numbers<[1], [0], [0], [1], [0, 0, 1, 1], [], []>} : vector<128x8xbf16>, vector<8x4xbf16>, vector<128x4xf32> -> vector<128x4xf32>
    %30 = arith.addf %25, %29 : vector<128x4xf32>
    %31 = vector.extract_strided_slice %21 {offsets = [0, 0], sizes = [128, 8], strides = [1, 1]} : vector<160x8xbf16> to vector<128x8xbf16>
    %c2 = arith.constant 2 : index
    %c0_15 = arith.constant 0 : index
    %c0_16 = arith.constant 0 : index
    %32 = vector.load %arg4[%c2, %c0_15, %c0_16] : memref<8x8x4xbf16, #tpu.memory_space<vmem>>, vector<1x8x4xbf16>
    %33 = vector.shape_cast %32 : vector<1x8x4xbf16> to vector<8x4xbf16>
    %cst_17 = arith.constant dense<0.000000e+00> : vector<128x4xf32>
    %34 = tpu.matmul %31, %33, %cst_17 {dimension_numbers = #tpu.dot_dimension_numbers<[1], [0], [0], [1], [0, 0, 1, 1], [], []>} : vector<128x8xbf16>, vector<8x4xbf16>, vector<128x4xf32> -> vector<128x4xf32>
    %35 = vector.extract_strided_slice %21 {offsets = [16, 0], sizes = [128, 8], strides = [1, 1]} : vector<160x8xbf16> to vector<128x8xbf16>
    %c3 = arith.constant 3 : index
    %c0_18 = arith.constant 0 : index
    %c0_19 = arith.constant 0 : index
    %36 = vector.load %arg4[%c3, %c0_18, %c0_19] : memref<8x8x4xbf16, #tpu.memory_space<vmem>>, vector<1x8x4xbf16>
    %37 = vector.shape_cast %36 : vector<1x8x4xbf16> to vector<8x4xbf16>
    %cst_20 = arith.constant dense<0.000000e+00> : vector<128x4xf32>
    %38 = tpu.matmul %35, %37, %cst_20 {dimension_numbers = #tpu.dot_dimension_numbers<[1], [0], [0], [1], [0, 0, 1, 1], [], []>} : vector<128x8xbf16>, vector<8x4xbf16>, vector<128x4xf32> -> vector<128x4xf32>
    %39 = arith.addf %34, %38 : vector<128x4xf32>
    %40 = tpu.concatenate %30, %39 in 1 : vector<128x4xf32>, vector<128x4xf32> -> vector<128x8xf32>
    %41 = vector.shape_cast %5 : vector<8xf32> to vector<1x8xf32>
    %42 = vector.broadcast %41 : vector<1x8xf32> to vector<128x8xf32>
    %43 = arith.addf %40, %42 : vector<128x8xf32>
    %44 = vector.shape_cast %43 : vector<128x8xf32> to vector<8x16x8xf32>
    %c0_21 = arith.constant 0 : index
    %c0_22 = arith.constant 0 : index
    %c0_23 = arith.constant 0 : index
    %c0_24 = arith.constant 0 : index
    %c0_25 = arith.constant 0 : index
    %45 = vector.load %arg6[%c0_21, %c0_22, %c0_23, %c0_24, %c0_25] : memref<1x8x2x16x8xf32, #tpu.memory_space<vmem>>, vector<1x8x1x16x8xf32>
    %46 = vector.shape_cast %45 : vector<1x8x1x16x8xf32> to vector<8x16x8xf32>
    %47 = vector.shape_cast %44 : vector<8x16x8xf32> to vector<1x8x1x16x8xf32>
    tpu.vector_store %arg6[%c0_21, %c0_22, %c0_23, %c0_24, %c0_25], %47 {strides = array<i32>} : memref<1x8x2x16x8xf32, #tpu.memory_space<vmem>>, vector<1x8x1x16x8xf32>,
    %48 = vector.extract_strided_slice %13 {offsets = [16, 0], sizes = [128, 8], strides = [1, 1]} : vector<160x8xbf16> to vector<128x8xbf16>
    %c4 = arith.constant 4 : index
    %c0_26 = arith.constant 0 : index
    %c0_27 = arith.constant 0 : index
    %49 = vector.load %arg4[%c4, %c0_26, %c0_27] : memref<8x8x4xbf16, #tpu.memory_space<vmem>>, vector<1x8x4xbf16>
    %50 = vector.shape_cast %49 : vector<1x8x4xbf16> to vector<8x4xbf16>
    %cst_28 = arith.constant dense<0.000000e+00> : vector<128x4xf32>
    %51 = tpu.matmul %48, %50, %cst_28 {dimension_numbers = #tpu.dot_dimension_numbers<[1], [0], [0], [1], [0, 0, 1, 1], [], []>} : vector<128x8xbf16>, vector<8x4xbf16>, vector<128x4xf32> -> vector<128x4xf32>
    %52 = vector.extract_strided_slice %13 {offsets = [32, 0], sizes = [128, 8], strides = [1, 1]} : vector<160x8xbf16> to vector<128x8xbf16>
    %c5 = arith.constant 5 : index
    %c0_29 = arith.constant 0 : index
    %c0_30 = arith.constant 0 : index
    %53 = vector.load %arg4[%c5, %c0_29, %c0_30] : memref<8x8x4xbf16, #tpu.memory_space<vmem>>, vector<1x8x4xbf16>
    %54 = vector.shape_cast %53 : vector<1x8x4xbf16> to vector<8x4xbf16>
    %cst_31 = arith.constant dense<0.000000e+00> : vector<128x4xf32>
    %55 = tpu.matmul %52, %54, %cst_31 {dimension_numbers = #tpu.dot_dimension_numbers<[1], [0], [0], [1], [0, 0, 1, 1], [], []>} : vector<128x8xbf16>, vector<8x4xbf16>, vector<128x4xf32> -> vector<128x4xf32>
    %56 = arith.addf %51, %55 : vector<128x4xf32>
    %57 = vector.extract_strided_slice %21 {offsets = [16, 0], sizes = [128, 8], strides = [1, 1]} : vector<160x8xbf16> to vector<128x8xbf16>
    %c6 = arith.constant 6 : index
    %c0_32 = arith.constant 0 : index
    %c0_33 = arith.constant 0 : index
    %58 = vector.load %arg4[%c6, %c0_32, %c0_33] : memref<8x8x4xbf16, #tpu.memory_space<vmem>>, vector<1x8x4xbf16>
    %59 = vector.shape_cast %58 : vector<1x8x4xbf16> to vector<8x4xbf16>
    %cst_34 = arith.constant dense<0.000000e+00> : vector<128x4xf32>
    %60 = tpu.matmul %57, %59, %cst_34 {dimension_numbers = #tpu.dot_dimension_numbers<[1], [0], [0], [1], [0, 0, 1, 1], [], []>} : vector<128x8xbf16>, vector<8x4xbf16>, vector<128x4xf32> -> vector<128x4xf32>
    %61 = vector.extract_strided_slice %21 {offsets = [32, 0], sizes = [128, 8], strides = [1, 1]} : vector<160x8xbf16> to vector<128x8xbf16>
    %c7 = arith.constant 7 : index
    %c0_35 = arith.constant 0 : index
    %c0_36 = arith.constant 0 : index
    %62 = vector.load %arg4[%c7, %c0_35, %c0_36] : memref<8x8x4xbf16, #tpu.memory_space<vmem>>, vector<1x8x4xbf16>
    %63 = vector.shape_cast %62 : vector<1x8x4xbf16> to vector<8x4xbf16>
    %cst_37 = arith.constant dense<0.000000e+00> : vector<128x4xf32>
    %64 = tpu.matmul %61, %63, %cst_37 {dimension_numbers = #tpu.dot_dimension_numbers<[1], [0], [0], [1], [0, 0, 1, 1], [], []>} : vector<128x8xbf16>, vector<8x4xbf16>, vector<128x4xf32> -> vector<128x4xf32>
    %65 = arith.addf %60, %64 : vector<128x4xf32>
    %66 = tpu.concatenate %56, %65 in 1 : vector<128x4xf32>, vector<128x4xf32> -> vector<128x8xf32>
    %67 = vector.shape_cast %5 : vector<8xf32> to vector<1x8xf32>
    %68 = vector.broadcast %67 : vector<1x8xf32> to vector<128x8xf32>
    %69 = arith.addf %66, %68 : vector<128x8xf32>
    %70 = vector.shape_cast %69 : vector<128x8xf32> to vector<8x16x8xf32>
    %c0_38 = arith.constant 0 : index
    %c0_39 = arith.constant 0 : index
    %c1_40 = arith.constant 1 : index
    %c0_41 = arith.constant 0 : index
    %c0_42 = arith.constant 0 : index
    %71 = vector.load %arg6[%c0_38, %c0_39, %c1_40, %c0_41, %c0_42] : memref<1x8x2x16x8xf32, #tpu.memory_space<vmem>>, vector<1x8x1x16x8xf32>
    %72 = vector.shape_cast %71 : vector<1x8x1x16x8xf32> to vector<8x16x8xf32>
    %73 = vector.shape_cast %70 : vector<8x16x8xf32> to vector<1x8x1x16x8xf32>
    tpu.vector_store %arg6[%c0_38, %c0_39, %c1_40, %c0_41, %c0_42], %73 {strides = array<i32>} : memref<1x8x2x16x8xf32, #tpu.memory_space<vmem>>, vector<1x8x1x16x8xf32>,
    return
  }
  func.func @transform_0(%arg0: i32, %arg1: i32) -> (i32, i32, i32, i32) {
    %c0_i32 = arith.constant 0 : i32
    %c0_i32_0 = arith.constant 0 : i32
    %c0_i32_1 = arith.constant 0 : i32
    return %arg0, %arg1, %c0_i32, %c0_i32_0 : i32, i32, i32, i32
  }
  func.func @transform_1(%arg0: i32, %arg1: i32) -> (i32, i32, i32, i32) {
    %c1_i32 = arith.constant 1 : i32
    %0 = arith.addi %arg1, %c1_i32 : i32
    %c4_i32 = arith.constant 4 : i32
    %1 = arith.muli %0, %c4_i32 : i32
    %c0_i32 = arith.constant 0 : i32
    %c0_i32_0 = arith.constant 0 : i32
    %c0_i32_1 = arith.constant 0 : i32
    return %arg0, %1, %c0_i32, %c0_i32_0 : i32, i32, i32, i32
  }
  func.func @transform_2(%arg0: i32, %arg1: i32) -> (i32, i32, i32) {
    %c0_i32 = arith.constant 0 : i32
    %c0_i32_0 = arith.constant 0 : i32
    %c0_i32_1 = arith.constant 0 : i32
    %c0_i32_2 = arith.constant 0 : i32
    return %c0_i32, %c0_i32_0, %c0_i32_1 : i32, i32, i32
  }
  func.func @transform_3(%arg0: i32, %arg1: i32) -> (i32, i32) {
    %c0_i32 = arith.constant 0 : i32
    %c0_i32_0 = arith.constant 0 : i32
    %c0_i32_1 = arith.constant 0 : i32
    return %c0_i32, %c0_i32_0 : i32, i32
  }
  func.func @transform_4(%arg0: i32, %arg1: i32) -> (i32, i32, i32, i32, i32) {
    %c0_i32 = arith.constant 0 : i32
    %c0_i32_0 = arith.constant 0 : i32
    %c0_i32_1 = arith.constant 0 : i32
    %c0_i32_2 = arith.constant 0 : i32
    return %arg0, %arg1, %c0_i32, %c0_i32_0, %c0_i32_1 : i32, i32, i32, i32, i32
  }
}

</mosaic_0001>

<llo_original>
// kernel: tpu_custom_call.1
$region0: #{tpu_custom_call.1}
  #allocation0 [shape = 'u32[]', space=smem, size = 0x4, offset = 0x4, fixed_abs, tag = 'smem constant byte address 0x4 - core index']
  #allocation1 [shape = 'u32[144,128]{1,0:T(1,128)}', space=vmem, size = 0x12000, scoped, tag = 'internal scratch']
  %s0 = inlined_call_operand.vmem [shape: bf16[2,18,18,4], index: 0, kind: input, shape index: {}]
  %s1 = inlined_call_operand.vmem [shape: bf16[2,18,18,4], index: 1, kind: input, shape index: {}]
  %s2 = inlined_call_operand.vmem [shape: bf16[8,8,4], index: 2, kind: input, shape index: {}]
  %s3 = inlined_call_operand.vmem [shape: f32[1,8], index: 3, kind: input, shape index: {}]
  %s4 = inlined_call_operand.vmem [shape: f32[2,16,2,16,8], index: 4, kind: output, shape index: {}]
  %s5 = sld [smem:[#allocation0]]
  $region49: #{tpu_custom_call.1} parent=0
    _
  %s7 = ssub.s32 1, %s5
  %s8 = scalar_select 0, %s7, %s5
  loop: start=0, step=1, limit=6
  $region2: #{tpu_custom_call.1} parent=0 // loop_pre_header
    _
  $region3: #{tpu_custom_call.1} parent=0 // loop_header
    %s10 = sphi 0, %s14
    %p11 = scmp.ge.s32.totalorder %s10, 6
    %s17 = sphi 0, %s29
    %s18 = sphi 0, %s25
    %s19 = sphi 0, %s17
    %s20 = sphi 0, %s18
    %s21 = sphi 0, %s19
    %s22 = sphi 0, %s20
    %s34 = sphi 0, %s36
    %s37 = sphi 0, %s34
    %s38 = sphi 0, %s37
    %s54 = sphi 0, %s38
    %s66 = sphi 0, %s68
    %s69 = sphi 0, %s66
    %s70 = sphi 0, %s69
    %s86 = sphi 0, %s70
    %s90 = sphi 0, %s90
    %s92 = sphi 0, %s90
    %s93 = sphi 0, %s92
    %s107 = sphi 0, %s93
    %s111 = sphi 0, %s111
    %s113 = sphi 0, %s111
    %s114 = sphi 0, %s113
    %s128 = sphi 0, %s114
    %s136 = sphi 0, %s138
    %s139 = sphi 0, %s136
    %s140 = sphi 0, %s139
    %s156 = sphi 0, %s140
  $region4: #{tpu_custom_call.1} parent=0 // loop_header_branch
    %13 = sbr.rel (%p11) target = $region8
  $region5: #{tpu_custom_call.1} parent=0 // loop_body
    %s15 = ssub.s32 %s10, 1
    %s16 = ssub.s32 %s10, 2
    %s23 = sadd.s32 1, %s18
    %p24 = scmp.ge.s32.totalorder %s23, 2
    %s25 = scalar_select %p24, 0, %s23
    %s26 = sadd.s32 1, %s17
    %s27 = scalar_select %p24, %s26, %s17
    %p28 = scmp.ge.s32.totalorder %s27, 2
    %s29 = scalar_select %p28, 0, %s27
    %s30 = ssub.s32 %s17, %s29
    %s31 = ssub.s32 %s18, %s25
    %s32 = sor.u32 %s30, %s31
    %p33 = scmp.eq.s32.totalorder %s32, 0
    %s35 = sadd.s32 %s34, 1
    %s36 = scalar_select %p33, %s34, %s35
    %p39 = pneg %p33
    %p40 = scmp.eq.s32.totalorder %s10, 3
    %p41 = por %p39, %p40
    %p42 = scmp.ne.s32.totalorder %s34, %s37
    %p43 = scmp.eq.s32.totalorder %s10, 0
    %p44 = por %p42, %p43
    %p45 = scmp.ne.s32.totalorder %s34, %s37
    %p46 = scmp.eq.s32.totalorder %s15, 3
    %p47 = por %p45, %p46
    %p48 = scmp.ne.s32.totalorder %s37, %s38
    %p49 = scmp.eq.s32.totalorder %s15, 0
    %p50 = por %p48, %p49
    %p51 = scmp.ne.s32.totalorder %s37, %s38
    %p52 = scmp.eq.s32.totalorder %s16, 3
    %p53 = por %p51, %p52
    %p55 = scmp.ne.s32.totalorder %s38, %s54
    %p56 = scmp.eq.s32.totalorder %s16, 0
    %p57 = por %p55, %p56
    %s58 = sadd.s32 %s18, 1
    %s59 = smul.u32 %s58, 4
    %s60 = sadd.s32 %s25, 1
    %s61 = smul.u32 %s60, 4
    %s62 = ssub.s32 %s17, %s29
    %s63 = ssub.s32 %s59, %s61
    %s64 = sor.u32 %s62, %s63
    %p65 = scmp.eq.s32.totalorder %s64, 0
    %s67 = sadd.s32 %s66, 1
    %s68 = scalar_select %p65, %s66, %s67
    %p71 = pneg %p65
    %p72 = scmp.eq.s32.totalorder %s10, 3
    %p73 = por %p71, %p72
    %p74 = scmp.ne.s32.totalorder %s66, %s69
    %p75 = scmp.eq.s32.totalorder %s10, 0
    %p76 = por %p74, %p75
    %p77 = scmp.ne.s32.totalorder %s66, %s69
    %p78 = scmp.eq.s32.totalorder %s15, 3
    %p79 = por %p77, %p78
    %p80 = scmp.ne.s32.totalorder %s69, %s70
    %p81 = scmp.eq.s32.totalorder %s15, 0
    %p82 = por %p80, %p81
    %p83 = scmp.ne.s32.totalorder %s69, %s70
    %p84 = scmp.eq.s32.totalorder %s16, 3
    %p85 = por %p83, %p84
    %p87 = scmp.ne.s32.totalorder %s70, %s86
    %p88 = scmp.eq.s32.totalorder %s16, 0
    %p89 = por %p87, %p88
    %s91 = sadd.s32 %s90, 1
    %p94 = scmp.eq.s32.totalorder %s10, 3
    %p95 = scmp.ne.s32.totalorder %s90, %s92
    %p96 = scmp.eq.s32.totalorder %s10, 0
    %p97 = por %p95, %p96
    %p98 = scmp.ne.s32.totalorder %s90, %s92
    %p99 = scmp.eq.s32.totalorder %s15, 3
    %p100 = por %p98, %p99
    %p101 = scmp.ne.s32.totalorder %s92, %s93
    %p102 = scmp.eq.s32.totalorder %s15, 0
    %p103 = por %p101, %p102
    %p104 = scmp.ne.s32.totalorder %s92, %s93
    %p105 = scmp.eq.s32.totalorder %s16, 3
    %p106 = por %p104, %p105
    %p108 = scmp.ne.s32.totalorder %s93, %s107
    %p109 = scmp.eq.s32.totalorder %s16, 0
    %p110 = por %p108, %p109
    %s112 = sadd.s32 %s111, 1
    %p115 = scmp.eq.s32.totalorder %s10, 3
    %p116 = scmp.ne.s32.totalorder %s111, %s113
    %p117 = scmp.eq.s32.totalorder %s10, 0
    %p118 = por %p116, %p117
    %p119 = scmp.ne.s32.totalorder %s111, %s113
    %p120 = scmp.eq.s32.totalorder %s15, 3
    %p121 = por %p119, %p120
    %p122 = scmp.ne.s32.totalorder %s113, %s114
    %p123 = scmp.eq.s32.totalorder %s15, 0
    %p124 = por %p122, %p123
    %p125 = scmp.ne.s32.totalorder %s113, %s114
    %p126 = scmp.eq.s32.totalorder %s16, 3
    %p127 = por %p125, %p126
    %p129 = scmp.ne.s32.totalorder %s114, %s128
    %p130 = scmp.eq.s32.totalorder %s16, 0
    %p131 = por %p129, %p130
    %s132 = ssub.s32 %s17, %s29
    %s133 = ssub.s32 %s18, %s25
    %s134 = sor.u32 %s132, %s133
    %p135 = scmp.eq.s32.totalorder %s134, 0
    %s137 = sadd.s32 %s136, 1
    %s138 = scalar_select %p135, %s136, %s137
    %p141 = pneg %p135
    %p142 = scmp.eq.s32.totalorder %s10, 3
    %p143 = por %p141, %p142
    %p144 = scmp.ne.s32.totalorder %s136, %s139
    %p145 = scmp.eq.s32.totalorder %s10, 0
    %p146 = por %p144, %p145
    %p147 = scmp.ne.s32.totalorder %s136, %s139
    %p148 = scmp.eq.s32.totalorder %s15, 3
    %p149 = por %p147, %p148
    %p150 = scmp.ne.s32.totalorder %s139, %s140
    %p151 = scmp.eq.s32.totalorder %s15, 0
    %p152 = por %p150, %p151
    %p153 = scmp.ne.s32.totalorder %s139, %s140
    %p154 = scmp.eq.s32.totalorder %s16, 3
    %p155 = por %p153, %p154
    %p157 = scmp.ne.s32.totalorder %s140, %s156
    %p158 = scmp.eq.s32.totalorder %s16, 0
    %p159 = por %p157, %p158
    %p160 = scmp.le.s32.totalorder 1, %s10
    %p161 = scmp.lt.s32.totalorder %s10, 5
    %p162 = pnand %p160, %p161
    %p163 = pneg %p162
    // Predicated region
    $region9: #{tpu_custom_call.1} parent=5 // pred_check
      _
    $region10: #{tpu_custom_call.1} parent=5 // pred_check_branch
      %165 = sbr.rel (%p162) target = $region12
    $region11: #{tpu_custom_call.1} parent=5 // pred_region
      %s166 = ssub.s32 %s10, 1
      // Predicated region
      $region13: #{tpu_custom_call.1} parent=11 // pred_check
        %p167 = pneg %p103
      $region14: #{tpu_custom_call.1} parent=11 // pred_check_branch
        %169 = sbr.rel (%p167) target = $region16
      $region15: #{tpu_custom_call.1} parent=11 // pred_region
        _
      $region16: #{tpu_custom_call.1} parent=11 // pred_fallthru
        _
      // Predicated region
      $region17: #{tpu_custom_call.1} parent=11 // pred_check
        %p170 = pneg %p124
      $region18: #{tpu_custom_call.1} parent=11 // pred_check_branch
        %172 = sbr.rel (%p170) target = $region20
      $region19: #{tpu_custom_call.1} parent=11 // pred_region
        _
      $region20: #{tpu_custom_call.1} parent=11 // pred_fallthru
        _
    $region12: #{tpu_custom_call.1} parent=5 // pred_fallthru
      _
    %p173 = scmp.lt.s32.totalorder %s10, 4
    // Predicated region
    $region21: #{tpu_custom_call.1} parent=5 // pred_check
      %p174 = pneg %p173
    $region22: #{tpu_custom_call.1} parent=5 // pred_check_branch
      %176 = sbr.rel (%p174) target = $region24
    $region23: #{tpu_custom_call.1} parent=5 // pred_region
      // Predicated region
      $region25: #{tpu_custom_call.1} parent=23 // pred_check
        %p177 = pneg %p44
      $region26: #{tpu_custom_call.1} parent=23 // pred_check_branch
        %179 = sbr.rel (%p177) target = $region28
      $region27: #{tpu_custom_call.1} parent=23 // pred_region
        %s180 = smul.u32 8, %s18
        %s181 = ssub.s32 18, %s180
        %p182 = scmp.lt.s32.totalorder %s181, 8
        %s183 = scalar_select %p182, %s181, 8
        %s184 = smul.u32 64, %s183
        %s185 = smul.u32 %s184, 3
        %p186 = scmp.lt.s32.totalorder %s17, 1
        %s187 = scalar_select %p186, %s17, 1
        %p188 = scmp.lt.s32.totalorder %s180, 17
        %s189 = scalar_select %p188, %s180, 17
        %s190 = smul.addr %s189, 3
        %s191 = smul.addr %s187, 54
        %s192 = sadd.s32 %s190, %s191
        %s193 = smul.addr %s192, 4
        %s194 = scalar_lea.vmem %s0, %s193
        %s195 = smul.u32 8, %s18
        %s196 = ssub.s32 18, %s195
        %p197 = scmp.lt.s32.totalorder %s196, 8
        %s198 = scalar_select %p197, %s196, 8
        %s199 = smul.u32 64, %s198
        %s200 = smul.u32 %s199, 3
      $region28: #{tpu_custom_call.1} parent=23 // pred_fallthru
        _
      // Predicated region
      $region29: #{tpu_custom_call.1} parent=23 // pred_check
        %p201 = pneg %p76
      $region30: #{tpu_custom_call.1} parent=23 // pred_check_branch
        %203 = sbr.rel (%p201) target = $region32
      $region31: #{tpu_custom_call.1} parent=23 // pred_region
        %s204 = sadd.s32 %s18, 1
        %s205 = smul.u32 %s204, 4
        %s206 = smul.u32 2, %s205
        %p207 = scmp.lt.s32.totalorder %s17, 1
        %s208 = scalar_select %p207, %s17, 1
        %p209 = scmp.lt.s32.totalorder %s206, 17
        %s210 = scalar_select %p209, %s206, 17
        %s211 = smul.addr %s210, 3
        %s212 = smul.addr %s208, 54
        %s213 = sadd.s32 %s211, %s212
        %s214 = smul.addr %s213, 4
        %s215 = scalar_lea.vmem %s1, %s214
        %s216 = sadd.s32 %s18, 1
        %s217 = smul.u32 %s216, 4
        %s218 = smul.u32 2, %s217
      $region32: #{tpu_custom_call.1} parent=23 // pred_fallthru
        _
    $region24: #{tpu_custom_call.1} parent=5 // pred_fallthru
      _
    %p219 = scmp.le.s32.totalorder 1, %s10
    %p220 = scmp.lt.s32.totalorder %s10, 5
    %p221 = pnand %p219, %p220
    %p222 = pneg %p221
    // Predicated region
    $region33: #{tpu_custom_call.1} parent=5 // pred_check
      _
    $region34: #{tpu_custom_call.1} parent=5 // pred_check_branch
      %224 = sbr.rel (%p221) target = $region36
    $region35: #{tpu_custom_call.1} parent=5 // pred_region
      %s225 = ssub.s32 %s10, 1
      %s226 = smul.u32 8, %s20
      %s227 = ssub.s32 18, %s226
      %p228 = scmp.lt.s32.totalorder %s227, 8
      %s229 = scalar_select %p228, %s227, 8
      %s230 = smul.u32 64, %s229
      %s231 = smul.u32 %s230, 3
      %p232 = scmp.lt.s32.totalorder %s19, 1
      %s233 = scalar_select %p232, %s19, 1
      %p234 = scmp.lt.s32.totalorder %s226, 17
      %s235 = scalar_select %p234, %s226, 17
      %s236 = smul.addr %s235, 3
      %s237 = smul.addr %s233, 54
      %s238 = sadd.s32 %s236, %s237
      %s239 = smul.addr %s238, 4
      %s240 = scalar_lea.vmem %s0, %s239
      %p241 = pneg %p50
      %p242 = pneg %p47
      %s243 = sadd.s32 %s20, 1
      %s244 = smul.u32 %s243, 4
      %s245 = smul.u32 2, %s244
      %p246 = scmp.lt.s32.totalorder %s19, 1
      %s247 = scalar_select %p246, %s19, 1
      %p248 = scmp.lt.s32.totalorder %s245, 17
      %s249 = scalar_select %p248, %s245, 17
      %s250 = smul.addr %s249, 3
      %s251 = smul.addr %s247, 54
      %s252 = sadd.s32 %s250, %s251
      %s253 = smul.addr %s252, 4
      %s254 = scalar_lea.vmem %s1, %s253
      %p255 = pneg %p82
      %p256 = pneg %p79
      %p257 = pneg %p103
      %p258 = pneg %p100
      %p259 = pneg %p124
      %p260 = pneg %p121
      %p261 = pneg %p152
      %p262 = pneg %p149
      %s263 = smul.u32 8, %s20
      %p264 = scmp.lt.s32.totalorder %s19, 1
      %s265 = scalar_select %p264, %s19, 1
      %p266 = scmp.lt.s32.totalorder %s263, 15
      %s267 = scalar_select %p266, %s263, 15
      %s268 = smul.addr %s267, 4
      %s269 = smul.addr %s265, 64
      %s270 = sadd.s32 %s268, %s269
      %s271 = smul.addr %s270, 8
      %s272 = scalar_lea.vmem %s4, %s271
      %s273 = smul.u32 8, %s20
      %s274 = ssub.s32 18, %s273
      %p275 = scmp.lt.s32.totalorder %s274, 8
      %s276 = scalar_select %p275, %s274, 8
      %s277 = smul.u32 64, %s276
      %s278 = smul.u32 %s277, 3
      %p279 = scmp.lt.s32.totalorder %s19, 1
      %s280 = scalar_select %p279, %s19, 1
      %p281 = scmp.lt.s32.totalorder %s273, 17
      %s282 = scalar_select %p281, %s273, 17
      %s283 = smul.addr %s282, 3
      %s284 = smul.addr %s280, 54
      %s285 = sadd.s32 %s283, %s284
      %s286 = smul.addr %s285, 4
      %s287 = scalar_lea.vmem %s0, %s286
      %s288 = smul.u32 8, %s20
      %s289 = ssub.s32 18, %s288
      %p290 = scmp.lt.s32.totalorder %s289, 8
      %s291 = scalar_select %p290, %s289, 8
      %s292 = smul.u32 64, %s291
      %s293 = smul.u32 %s292, 3
      %s294 = sadd.s32 %s20, 1
      %s295 = smul.u32 %s294, 4
      %s296 = smul.u32 2, %s295
      %p297 = scmp.lt.s32.totalorder %s19, 1
      %s298 = scalar_select %p297, %s19, 1
      %p299 = scmp.lt.s32.totalorder %s296, 17
      %s300 = scalar_select %p299, %s296, 17
      %s301 = smul.addr %s300, 3
      %s302 = smul.addr %s298, 54
      %s303 = sadd.s32 %s301, %s302
      %s304 = smul.addr %s303, 4
      %s305 = scalar_lea.vmem %s1, %s304
      %s306 = sadd.s32 %s20, 1
      %s307 = smul.u32 %s306, 4
      %s308 = smul.u32 2, %s307
      %s309 = smul.u32 8, %s20
      %p310 = scmp.lt.s32.totalorder %s19, 1
      %s311 = scalar_select %p310, %s19, 1
      %p312 = scmp.lt.s32.totalorder %s309, 15
      %s313 = scalar_select %p312, %s309, 15
      %s314 = smul.addr %s313, 4
      %s315 = smul.addr %s311, 64
      %s316 = sadd.s32 %s314, %s315
      %s317 = smul.addr %s316, 8
      %s318 = scalar_lea.vmem %s4, %s317
      %s319 = smul.u32 8, %s20
      %v321 = vld [vmem:[%s287] sm:$0xf]
      %v322 = vld [vmem:[%s287 + $0x4] sm:$0xf]
      %v323 = vld [vmem:[%s287 + $0x8] sm:$0x1]
      %v324 = vld [vmem:[%s287 + $0xc] sm:$0xf]
      %v325 = vld [vmem:[%s287 + $0x10] sm:$0xf]
      %v326 = vld [vmem:[%s287 + $0x14] sm:$0x1]
      %v327 = vld [vmem:[%s287 + $0x18] sm:$0xf]
      %v328 = vld [vmem:[%s287 + $0x1c] sm:$0xf]
      %v329 = vld [vmem:[%s287 + $0x20] sm:$0x1]
      %v330 = vld [vmem:[%s287 + $0x24] sm:$0xf]
      %v331 = vld [vmem:[%s287 + $0x28] sm:$0xf]
      %v332 = vld [vmem:[%s287 + $0x2c] sm:$0x1]
      %v333 = vld [vmem:[%s287 + $0x30] sm:$0xf]
      %v334 = vld [vmem:[%s287 + $0x34] sm:$0xf]
      %v335 = vld [vmem:[%s287 + $0x38] sm:$0x1]
      %v336 = vld [vmem:[%s287 + $0x3c] sm:$0xf]
      %v337 = vld [vmem:[%s287 + $0x40] sm:$0xf]
      %v338 = vld [vmem:[%s287 + $0x44] sm:$0x1]
      %v339 = vld [vmem:[%s287 + $0x48] sm:$0xf]
      %v340 = vld [vmem:[%s287 + $0x4c] sm:$0xf]
      %v341 = vld [vmem:[%s287 + $0x50] sm:$0x1]
      %v342 = vld [vmem:[%s287 + $0x54] sm:$0xf]
      %v343 = vld [vmem:[%s287 + $0x58] sm:$0xf]
      %v344 = vld [vmem:[%s287 + $0x5c] sm:$0x1]
      %v345 = vld [vmem:[%s305] sm:$0xf]
      %v346 = vld [vmem:[%s305 + $0x4] sm:$0xf]
      %v347 = vld [vmem:[%s305 + $0x8] sm:$0x1]
      %v348 = vld [vmem:[%s305 + $0xc] sm:$0xf]
      %v349 = vld [vmem:[%s305 + $0x10] sm:$0xf]
      %v350 = vld [vmem:[%s305 + $0x14] sm:$0x1]
      %v351 = vld [vmem:[%s3] sm:$0x1]
      %v368 = vunpack.c.l.b16 %v321
      %v369 = vunpack.c.l.b16 %v322
      %v370 = vunpack.c.l.b16 %v324
      %v371 = vunpack.c.l.b16 %v325
      %v372 = vunpack.c.l.b16 %v327
      %v373 = vunpack.c.l.b16 %v328
      %v374 = vunpack.c.l.b16 %v330
      %v375 = vunpack.c.l.b16 %v331
      %v376 = vunpack.c.l.b16 %v333
      %v377 = vunpack.c.l.b16 %v334
      %v378 = vunpack.c.l.b16 %v336
      %v379 = vunpack.c.l.b16 %v337
      %v380 = vunpack.c.l.b16 %v339
      %v381 = vunpack.c.l.b16 %v340
      %v382 = vunpack.c.l.b16 %v342
      %v383 = vunpack.c.l.b16 %v343
      %v384 = vpack.c.b16 %v369, %v368
      %v385 = vpack.c.b16 %v371, %v370
      %v386 = vpack.c.b16 %v373, %v372
      %v387 = vpack.c.b16 %v375, %v374
      %v388 = vpack.c.b16 %v377, %v376
      %v389 = vpack.c.b16 %v379, %v378
      %v390 = vpack.c.b16 %v381, %v380
      %v391 = vpack.c.b16 %v383, %v382
      %v400 = vunpack.c.l.b16 %v323
      %v401 = vunpack.c.l.b16 %v326
      %v402 = vunpack.c.l.b16 %v329
      %v403 = vunpack.c.l.b16 %v332
      %v404 = vunpack.c.l.b16 %v335
      %v405 = vunpack.c.l.b16 %v338
      %v406 = vunpack.c.l.b16 %v341
      %v407 = vunpack.c.l.b16 %v344
      %v408 = vpack.c.b16 %v400, %v400
      %v409 = vpack.c.b16 %v401, %v401
      %v410 = vpack.c.b16 %v402, %v402
      %v411 = vpack.c.b16 %v403, %v403
      %v412 = vpack.c.b16 %v404, %v404
      %v413 = vpack.c.b16 %v405, %v405
      %v414 = vpack.c.b16 %v406, %v406
      %v415 = vpack.c.b16 %v407, %v407
      %vm416 = vsmask.f32 7424
      %v418 = vshrl.u32 %v384, 16
      %v420 = vshll.u32 %v384, 16
      %v422 = vrot.slane %v420, 1
      %v423 = vor.u32 %v418, %v422
      %v425 = vshll.u32 %v408, 16
      %v427 = vrot.slane %v425, 1
      %v428 = vsel %vm416, %v423, %v427
      %v430 = vshrl.u32 %v385, 16
      %v432 = vshll.u32 %v385, 16
      %v434 = vrot.slane %v432, 1
      %v435 = vor.u32 %v430, %v434
      %v437 = vshll.u32 %v409, 16
      %v439 = vrot.slane %v437, 1
      %v440 = vsel %vm416, %v435, %v439
      %v442 = vshrl.u32 %v386, 16
      %v444 = vshll.u32 %v386, 16
      %v446 = vrot.slane %v444, 1
      %v447 = vor.u32 %v442, %v446
      %v449 = vshll.u32 %v410, 16
      %v451 = vrot.slane %v449, 1
      %v452 = vsel %vm416, %v447, %v451
      %v454 = vshrl.u32 %v387, 16
      %v456 = vshll.u32 %v387, 16
      %v458 = vrot.slane %v456, 1
      %v459 = vor.u32 %v454, %v458
      %v461 = vshll.u32 %v411, 16
      %v463 = vrot.slane %v461, 1
      %v464 = vsel %vm416, %v459, %v463
      %v466 = vshrl.u32 %v388, 16
      %v468 = vshll.u32 %v388, 16
      %v470 = vrot.slane %v468, 1
      %v471 = vor.u32 %v466, %v470
      %v473 = vshll.u32 %v412, 16
      %v475 = vrot.slane %v473, 1
      %v476 = vsel %vm416, %v471, %v475
      %v478 = vshrl.u32 %v389, 16
      %v480 = vshll.u32 %v389, 16
      %v482 = vrot.slane %v480, 1
      %v483 = vor.u32 %v478, %v482
      %v485 = vshll.u32 %v413, 16
      %v487 = vrot.slane %v485, 1
      %v488 = vsel %vm416, %v483, %v487
      %v490 = vshrl.u32 %v390, 16
      %v492 = vshll.u32 %v390, 16
      %v494 = vrot.slane %v492, 1
      %v495 = vor.u32 %v490, %v494
      %v497 = vshll.u32 %v414, 16
      %v499 = vrot.slane %v497, 1
      %v500 = vsel %vm416, %v495, %v499
      %v502 = vshrl.u32 %v391, 16
      %v504 = vshll.u32 %v391, 16
      %v506 = vrot.slane %v504, 1
      %v507 = vor.u32 %v502, %v506
      %v509 = vshll.u32 %v415, 16
      %v511 = vrot.slane %v509, 1
      %v512 = vsel %vm416, %v507, %v511
      %513 = vrot.lane.b32.xlu0 %v428, 4
      %v514 = vpop.permute.xlu0 %513
      %515 = vrot.lane.b32.xlu0 %v440, 4
      %v516 = vpop.permute.xlu0 %515
      %517 = vrot.lane.b32.xlu0 %v452, 4
      %v518 = vpop.permute.xlu0 %517
      %519 = vrot.lane.b32.xlu0 %v464, 4
      %v520 = vpop.permute.xlu0 %519
      %521 = vrot.lane.b32.xlu0 %v476, 4
      %v522 = vpop.permute.xlu0 %521
      %523 = vrot.lane.b32.xlu0 %v488, 4
      %v524 = vpop.permute.xlu0 %523
      %525 = vrot.lane.b32.xlu0 %v500, 4
      %v526 = vpop.permute.xlu0 %525
      %527 = vrot.lane.b32.xlu0 %v512, 4
      %v528 = vpop.permute.xlu0 %527
      %vm529 = vcmask 31744
      %v531 = vsel %vm529, %v384, %v514
      %v533 = vsel %vm529, %v385, %v516
      %v535 = vsel %vm529, %v386, %v518
      %v537 = vsel %vm529, %v387, %v520
      %v539 = vsel %vm529, %v388, %v522
      %v541 = vsel %vm529, %v389, %v524
      %v543 = vsel %vm529, %v390, %v526
      %v545 = vsel %vm529, %v391, %v528
      %v550 = vunpack.c.l.b16 %v345
      %v551 = vunpack.c.l.b16 %v346
      %v552 = vunpack.c.l.b16 %v348
      %v553 = vunpack.c.l.b16 %v349
      %v554 = vpack.c.b16 %v551, %v550
      %v555 = vpack.c.b16 %v553, %v552
      %v558 = vunpack.c.l.b16 %v347
      %v559 = vunpack.c.l.b16 %v350
      %v560 = vpack.c.b16 %v558, %v558
      %v561 = vpack.c.b16 %v559, %v559
      %v563 = vshrl.u32 %v554, 16
      %v565 = vshll.u32 %v554, 16
      %v567 = vrot.slane %v565, 1
      %v568 = vor.u32 %v563, %v567
      %v570 = vshll.u32 %v560, 16
      %v572 = vrot.slane %v570, 1
      %v573 = vsel %vm416, %v568, %v572
      %v575 = vshrl.u32 %v555, 16
      %v577 = vshll.u32 %v555, 16
      %v579 = vrot.slane %v577, 1
      %v580 = vor.u32 %v575, %v579
      %v582 = vshll.u32 %v561, 16
      %v584 = vrot.slane %v582, 1
      %v585 = vsel %vm416, %v580, %v584
      %586 = vrot.lane.b32.xlu0 %v573, 4
      %v587 = vpop.permute.xlu0 %586
      %588 = vrot.lane.b32.xlu0 %v585, 4
      %v589 = vpop.permute.xlu0 %588
      %v591 = vsel %vm529, %v554, %v587
      %v593 = vsel %vm529, %v555, %v589
      %v594 = vshrl.u32 %v408, 16
      %v596 = vshrl.u32 %v409, 16
      %v598 = vshrl.u32 %v410, 16
      %v600 = vshrl.u32 %v411, 16
      %v602 = vshrl.u32 %v412, 16
      %v604 = vshrl.u32 %v413, 16
      %v606 = vshrl.u32 %v414, 16
      %v608 = vshrl.u32 %v415, 16
      %610 = vrot.lane.b32.xlu0 %v594, 4
      %v611 = vpop.permute.xlu0 %610
      %612 = vrot.lane.b32.xlu0 %v596, 4
      %v613 = vpop.permute.xlu0 %612
      %614 = vrot.lane.b32.xlu0 %v598, 4
      %v615 = vpop.permute.xlu0 %614
      %616 = vrot.lane.b32.xlu0 %v600, 4
      %v617 = vpop.permute.xlu0 %616
      %618 = vrot.lane.b32.xlu0 %v602, 4
      %v619 = vpop.permute.xlu0 %618
      %620 = vrot.lane.b32.xlu0 %v604, 4
      %v621 = vpop.permute.xlu0 %620
      %622 = vrot.lane.b32.xlu0 %v606, 4
      %v623 = vpop.permute.xlu0 %622
      %624 = vrot.lane.b32.xlu0 %v608, 4
      %v625 = vpop.permute.xlu0 %624
      %v627 = vsel %vm529, %v408, %v611
      %v629 = vsel %vm529, %v409, %v613
      %v631 = vsel %vm529, %v410, %v615
      %v633 = vsel %vm529, %v411, %v617
      %v635 = vsel %vm529, %v412, %v619
      %v637 = vsel %vm529, %v413, %v621
      %v639 = vsel %vm529, %v414, %v623
      %v641 = vsel %vm529, %v415, %v625
      %v642 = vshrl.u32 %v560, 16
      %v644 = vshrl.u32 %v561, 16
      %646 = vrot.lane.b32.xlu0 %v642, 4
      %v647 = vpop.permute.xlu0 %646
      %648 = vrot.lane.b32.xlu0 %v644, 4
      %v649 = vpop.permute.xlu0 %648
      %v651 = vsel %vm529, %v560, %v647
      %v653 = vsel %vm529, %v561, %v649
      %v654 = vshrl.u32 %v531, 16
      %v656 = vshll.u32 %v531, 16
      %v658 = vrot.slane %v656, 1
      %v659 = vor.u32 %v654, %v658
      %v660 = vshll.u32 %v627, 16
      %v662 = vrot.slane %v660, 1
      %v663 = vsel %vm416, %v659, %v662
      %v664 = vshrl.u32 %v533, 16
      %v666 = vshll.u32 %v533, 16
      %v668 = vrot.slane %v666, 1
      %v669 = vor.u32 %v664, %v668
      %v670 = vshll.u32 %v629, 16
      %v672 = vrot.slane %v670, 1
      %v673 = vsel %vm416, %v669, %v672
      %v674 = vshrl.u32 %v535, 16
      %v676 = vshll.u32 %v535, 16
      %v678 = vrot.slane %v676, 1
      %v679 = vor.u32 %v674, %v678
      %v680 = vshll.u32 %v631, 16
      %v682 = vrot.slane %v680, 1
      %v683 = vsel %vm416, %v679, %v682
      %v684 = vshrl.u32 %v537, 16
      %v686 = vshll.u32 %v537, 16
      %v688 = vrot.slane %v686, 1
      %v689 = vor.u32 %v684, %v688
      %v690 = vshll.u32 %v633, 16
      %v692 = vrot.slane %v690, 1
      %v693 = vsel %vm416, %v689, %v692
      %v694 = vshrl.u32 %v539, 16
      %v696 = vshll.u32 %v539, 16
      %v698 = vrot.slane %v696, 1
      %v699 = vor.u32 %v694, %v698
      %v700 = vshll.u32 %v635, 16
      %v702 = vrot.slane %v700, 1
      %v703 = vsel %vm416, %v699, %v702
      %v704 = vshrl.u32 %v541, 16
      %v706 = vshll.u32 %v541, 16
      %v708 = vrot.slane %v706, 1
      %v709 = vor.u32 %v704, %v708
      %v710 = vshll.u32 %v637, 16
      %v712 = vrot.slane %v710, 1
      %v713 = vsel %vm416, %v709, %v712
      %v714 = vshrl.u32 %v543, 16
      %v716 = vshll.u32 %v543, 16
      %v718 = vrot.slane %v716, 1
      %v719 = vor.u32 %v714, %v718
      %v720 = vshll.u32 %v639, 16
      %v722 = vrot.slane %v720, 1
      %v723 = vsel %vm416, %v719, %v722
      %v724 = vshrl.u32 %v545, 16
      %v726 = vshll.u32 %v545, 16
      %v728 = vrot.slane %v726, 1
      %v729 = vor.u32 %v724, %v728
      %v730 = vshll.u32 %v641, 16
      %v732 = vrot.slane %v730, 1
      %v733 = vsel %vm416, %v729, %v732
      %v734 = vshrl.u32 %v591, 16
      %v736 = vshll.u32 %v591, 16
      %v738 = vrot.slane %v736, 1
      %v739 = vor.u32 %v734, %v738
      %v740 = vshll.u32 %v651, 16
      %v742 = vrot.slane %v740, 1
      %v743 = vsel %vm416, %v739, %v742
      %v744 = vshrl.u32 %v593, 16
      %v746 = vshll.u32 %v593, 16
      %v748 = vrot.slane %v746, 1
      %v749 = vor.u32 %v744, %v748
      %v750 = vshll.u32 %v653, 16
      %v752 = vrot.slane %v750, 1
      %v753 = vsel %vm416, %v749, %v752
      %v754 = vld [vmem:[%s2] sm:$0xf]
      %s755 = scalar_lea.vmem %s2, 4
      %v756 = vld [vmem:[%s755] sm:$0xf]
      %vm757 = vcmask 64512
      %v758 = vsel %vm757, %v533, 0
      %v760 = vsel %vm757, %v535, 0
      %v762 = vsel %vm757, %v537, 0
      %v764 = vsel %vm757, %v539, 0
      %v766 = vsel %vm757, %v541, 0
      %v768 = vsel %vm757, %v543, 0
      %v770 = vsel %vm757, %v545, 0
      %v772 = vsel %vm757, %v591, 0
      %vm774 = vcmask 1043456
      %v776 = vsel %vm774, %v756, 0
      %778 = vmatprep.subr.bf16.mxu0 0
      %779 = vmatpush1.bf16.msra.mxu0 0
      %780 = vmatprep.subr.bf16.mxu0 0
      %781 = vmatpush1.bf16.msra.mxu0 0
      %782 = vmatprep.subr.bf16.mxu0 0
      %783 = vmatpush1.bf16.msra.mxu0 0
      %784 = vmatprep.subr.bf16.mxu0 0
      %785 = vmatpush1.bf16.msra.mxu0 0
      %786 = vmatprep.subr.bf16.mxu0 0
      %787 = vmatpush1.bf16.msra.mxu0 0
      %788 = vmatprep.subr.bf16.mxu0 0
      %789 = vmatpush1.bf16.msra.mxu0 0
      %790 = vmatprep.subr.bf16.mxu0 0
      %791 = vmatpush1.bf16.msra.mxu0 0
      %792 = vmatprep.subr.bf16.mxu0 0
      %793 = vmatpush1.bf16.msra.mxu0 %v776
      %794 = vmatprep.subr.bf16.mxu0 0
      %795 = vmatpush2.bf16.msra.mxu0 0
      %796 = vmatprep.subr.bf16.mxu0 0
      %797 = vmatpush2.bf16.msra.mxu0 0
      %798 = vmatprep.subr.bf16.mxu0 0
      %799 = vmatpush2.bf16.msra.mxu0 0
      %800 = vmatprep.subr.bf16.mxu0 0
      %801 = vmatpush2.bf16.msra.mxu0 0
      %802 = vmatprep.subr.bf16.mxu0 0
      %803 = vmatpush2.bf16.msra.mxu0 0
      %804 = vmatprep.subr.bf16.mxu0 0
      %805 = vmatpush2.bf16.msra.mxu0 0
      %806 = vmatprep.subr.bf16.mxu0 0
      %807 = vmatpush2.bf16.msra.mxu0 0
      %808 = vmatprep.subr.bf16.mxu0 0
      %809 = vmatpush2.bf16.msra.mxu0 0
      %810 = vmatprep.mubr.bf16.mxu0 0
      %811 = vmatmul.mubr.bf16.gmra.mxu0 %v758
      %v812 = vpop.f32.mrf.mxu0
      %v813 = vadd.f32 0.0, %v812
      %v814 = vpop.f32.mrf.mxu0
      %v815 = vpop.f32.mrf.mxu0
      %v816 = vadd.f32 0.0, %v815
      %v817 = vpop.f32.mrf.mxu0
      %818 = vmatprep.mubr.bf16.mxu0 0
      %819 = vmatmul.mubr.bf16.gmra.mxu0 %v760
      %v820 = vpop.f32.mrf.mxu0
      %v821 = vadd.f32 0.0, %v820
      %v822 = vpop.f32.mrf.mxu0
      %v823 = vpop.f32.mrf.mxu0
      %v824 = vadd.f32 0.0, %v823
      %v825 = vpop.f32.mrf.mxu0
      %826 = vmatprep.mubr.bf16.mxu0 0
      %827 = vmatmul.mubr.bf16.gmra.mxu0 %v762
      %v828 = vpop.f32.mrf.mxu0
      %v829 = vadd.f32 0.0, %v828
      %v830 = vpop.f32.mrf.mxu0
      %v831 = vpop.f32.mrf.mxu0
      %v832 = vadd.f32 0.0, %v831
      %v833 = vpop.f32.mrf.mxu0
      %834 = vmatprep.mubr.bf16.mxu0 0
      %835 = vmatmul.mubr.bf16.gmra.mxu0 %v764
      %v836 = vpop.f32.mrf.mxu0
      %v837 = vadd.f32 0.0, %v836
      %v838 = vpop.f32.mrf.mxu0
      %v839 = vpop.f32.mrf.mxu0
      %v840 = vadd.f32 0.0, %v839
      %v841 = vpop.f32.mrf.mxu0
      %842 = vmatprep.mubr.bf16.mxu0 0
      %843 = vmatmul.mubr.bf16.gmra.mxu0 %v766
      %v844 = vpop.f32.mrf.mxu0
      %v845 = vadd.f32 0.0, %v844
      %v846 = vpop.f32.mrf.mxu0
      %v847 = vpop.f32.mrf.mxu0
      %v848 = vadd.f32 0.0, %v847
      %v849 = vpop.f32.mrf.mxu0
      %850 = vmatprep.mubr.bf16.mxu0 0
      %851 = vmatmul.mubr.bf16.gmra.mxu0 %v768
      %v852 = vpop.f32.mrf.mxu0
      %v853 = vadd.f32 0.0, %v852
      %v854 = vpop.f32.mrf.mxu0
      %v855 = vpop.f32.mrf.mxu0
      %v856 = vadd.f32 0.0, %v855
      %v857 = vpop.f32.mrf.mxu0
      %858 = vmatprep.mubr.bf16.mxu0 0
      %859 = vmatmul.mubr.bf16.gmra.mxu0 %v770
      %v860 = vpop.f32.mrf.mxu0
      %v861 = vadd.f32 0.0, %v860
      %v862 = vpop.f32.mrf.mxu0
      %v863 = vpop.f32.mrf.mxu0
      %v864 = vadd.f32 0.0, %v863
      %v865 = vpop.f32.mrf.mxu0
      %866 = vmatprep.mubr.bf16.mxu0 0
      %867 = vmatmul.mubr.bf16.gmra.mxu0 %v772
      %v868 = vpop.f32.mrf.mxu0
      %v869 = vadd.f32 0.0, %v868
      %v870 = vpop.f32.mrf.mxu0
      %v871 = vpop.f32.mrf.mxu0
      %v872 = vadd.f32 0.0, %v871
      %v873 = vpop.f32.mrf.mxu0
      %874 = vdwg.mxu0
      %v875 = vsel %vm757, %v531, 0
      %v878 = vsel %vm774, %v754, 0
      %880 = vmatprep.subr.bf16.mxu0 0
      %881 = vmatpush1.bf16.msra.mxu0 0
      %882 = vmatprep.subr.bf16.mxu0 0
      %883 = vmatpush1.bf16.msra.mxu0 0
      %884 = vmatprep.subr.bf16.mxu0 0
      %885 = vmatpush1.bf16.msra.mxu0 0
      %886 = vmatprep.subr.bf16.mxu0 0
      %887 = vmatpush1.bf16.msra.mxu0 0
      %888 = vmatprep.subr.bf16.mxu0 0
      %889 = vmatpush1.bf16.msra.mxu0 0
      %890 = vmatprep.subr.bf16.mxu0 0
      %891 = vmatpush1.bf16.msra.mxu0 0
      %892 = vmatprep.subr.bf16.mxu0 0
      %893 = vmatpush1.bf16.msra.mxu0 0
      %894 = vmatprep.subr.bf16.mxu0 0
      %895 = vmatpush1.bf16.msra.mxu0 %v878
      %896 = vmatprep.subr.bf16.mxu0 0
      %897 = vmatpush2.bf16.msra.mxu0 0
      %898 = vmatprep.subr.bf16.mxu0 0
      %899 = vmatpush2.bf16.msra.mxu0 0
      %900 = vmatprep.subr.bf16.mxu0 0
      %901 = vmatpush2.bf16.msra.mxu0 0
      %902 = vmatprep.subr.bf16.mxu0 0
      %903 = vmatpush2.bf16.msra.mxu0 0
      %904 = vmatprep.subr.bf16.mxu0 0
      %905 = vmatpush2.bf16.msra.mxu0 0
      %906 = vmatprep.subr.bf16.mxu0 0
      %907 = vmatpush2.bf16.msra.mxu0 0
      %908 = vmatprep.subr.bf16.mxu0 0
      %909 = vmatpush2.bf16.msra.mxu0 0
      %910 = vmatprep.subr.bf16.mxu0 0
      %911 = vmatpush2.bf16.msra.mxu0 0
      %912 = vmatprep.mubr.bf16.mxu0 0
      %913 = vmatmul.mubr.bf16.gmra.mxu0 %v875
      %v914 = vpop.f32.mrf.mxu0
      %v915 = vadd.f32 %v813, %v914
      %v916 = vpop.f32.mrf.mxu0
      %v917 = vpop.f32.mrf.mxu0
      %v918 = vadd.f32 %v816, %v917
      %v919 = vpop.f32.mrf.mxu0
      %920 = vmatprep.mubr.bf16.mxu0 0
      %921 = vmatmul.mubr.bf16.gmra.mxu0 %v758
      %v922 = vpop.f32.mrf.mxu0
      %v923 = vadd.f32 %v821, %v922
      %v924 = vpop.f32.mrf.mxu0
      %v925 = vpop.f32.mrf.mxu0
      %v926 = vadd.f32 %v824, %v925
      %v927 = vpop.f32.mrf.mxu0
      %928 = vmatprep.mubr.bf16.mxu0 0
      %929 = vmatmul.mubr.bf16.gmra.mxu0 %v760
      %v930 = vpop.f32.mrf.mxu0
      %v931 = vadd.f32 %v829, %v930
      %v932 = vpop.f32.mrf.mxu0
      %v933 = vpop.f32.mrf.mxu0
      %v934 = vadd.f32 %v832, %v933
      %v935 = vpop.f32.mrf.mxu0
      %936 = vmatprep.mubr.bf16.mxu0 0
      %937 = vmatmul.mubr.bf16.gmra.mxu0 %v762
      %v938 = vpop.f32.mrf.mxu0
      %v939 = vadd.f32 %v837, %v938
      %v940 = vpop.f32.mrf.mxu0
      %v941 = vpop.f32.mrf.mxu0
      %v942 = vadd.f32 %v840, %v941
      %v943 = vpop.f32.mrf.mxu0
      %944 = vmatprep.mubr.bf16.mxu0 0
      %945 = vmatmul.mubr.bf16.gmra.mxu0 %v764
      %v946 = vpop.f32.mrf.mxu0
      %v947 = vadd.f32 %v845, %v946
      %v948 = vpop.f32.mrf.mxu0
      %v949 = vpop.f32.mrf.mxu0
      %v950 = vadd.f32 %v848, %v949
      %v951 = vpop.f32.mrf.mxu0
      %952 = vmatprep.mubr.bf16.mxu0 0
      %953 = vmatmul.mubr.bf16.gmra.mxu0 %v766
      %v954 = vpop.f32.mrf.mxu0
      %v955 = vadd.f32 %v853, %v954
      %v956 = vpop.f32.mrf.mxu0
      %v957 = vpop.f32.mrf.mxu0
      %v958 = vadd.f32 %v856, %v957
      %v959 = vpop.f32.mrf.mxu0
      %960 = vmatprep.mubr.bf16.mxu0 0
      %961 = vmatmul.mubr.bf16.gmra.mxu0 %v768
      %v962 = vpop.f32.mrf.mxu0
      %v963 = vadd.f32 %v861, %v962
      %v964 = vpop.f32.mrf.mxu0
      %v965 = vpop.f32.mrf.mxu0
      %v966 = vadd.f32 %v864, %v965
      %v967 = vpop.f32.mrf.mxu0
      %968 = vmatprep.mubr.bf16.mxu0 0
      %969 = vmatmul.mubr.bf16.gmra.mxu0 %v770
      %v970 = vpop.f32.mrf.mxu0
      %v971 = vadd.f32 %v869, %v970
      %v972 = vpop.f32.mrf.mxu0
      %v973 = vpop.f32.mrf.mxu0
      %v974 = vadd.f32 %v872, %v973
      %v975 = vpop.f32.mrf.mxu0
      %976 = vdwg.mxu0
      %s977 = scalar_lea.vmem %s2, 8
      %v978 = vld [vmem:[%s977] sm:$0xf]
      %s979 = scalar_lea.vmem %s2, 12
      %v980 = vld [vmem:[%s979] sm:$0xf]
      %v982 = vsel %vm757, %v673, 0
      %v985 = vsel %vm757, %v683, 0
      %v988 = vsel %vm757, %v693, 0
      %v991 = vsel %vm757, %v703, 0
      %v994 = vsel %vm757, %v713, 0
      %v997 = vsel %vm757, %v723, 0
      %v1000 = vsel %vm757, %v733, 0
      %v1003 = vsel %vm757, %v743, 0
      %v1006 = vsel %vm774, %v980, 0
      %1008 = vmatprep.subr.bf16.mxu0 0
      %1009 = vmatpush1.bf16.msra.mxu0 0
      %1010 = vmatprep.subr.bf16.mxu0 0
      %1011 = vmatpush1.bf16.msra.mxu0 0
      %1012 = vmatprep.subr.bf16.mxu0 0
      %1013 = vmatpush1.bf16.msra.mxu0 0
      %1014 = vmatprep.subr.bf16.mxu0 0
      %1015 = vmatpush1.bf16.msra.mxu0 0
      %1016 = vmatprep.subr.bf16.mxu0 0
      %1017 = vmatpush1.bf16.msra.mxu0 0
      %1018 = vmatprep.subr.bf16.mxu0 0
      %1019 = vmatpush1.bf16.msra.mxu0 0
      %1020 = vmatprep.subr.bf16.mxu0 0
      %1021 = vmatpush1.bf16.msra.mxu0 0
      %1022 = vmatprep.subr.bf16.mxu0 0
      %1023 = vmatpush1.bf16.msra.mxu0 %v1006
      %1024 = vmatprep.subr.bf16.mxu0 0
      %1025 = vmatpush2.bf16.msra.mxu0 0
      %1026 = vmatprep.subr.bf16.mxu0 0
      %1027 = vmatpush2.bf16.msra.mxu0 0
      %1028 = vmatprep.subr.bf16.mxu0 0
      %1029 = vmatpush2.bf16.msra.mxu0 0
      %1030 = vmatprep.subr.bf16.mxu0 0
      %1031 = vmatpush2.bf16.msra.mxu0 0
      %1032 = vmatprep.subr.bf16.mxu0 0
      %1033 = vmatpush2.bf16.msra.mxu0 0
      %1034 = vmatprep.subr.bf16.mxu0 0
      %1035 = vmatpush2.bf16.msra.mxu0 0
      %1036 = vmatprep.subr.bf16.mxu0 0
      %1037 = vmatpush2.bf16.msra.mxu0 0
      %1038 = vmatprep.subr.bf16.mxu0 0
      %1039 = vmatpush2.bf16.msra.mxu0 0
      %1040 = vmatprep.mubr.bf16.mxu0 0
      %1041 = vmatmul.mubr.bf16.gmra.mxu0 %v982
      %v1042 = vpop.f32.mrf.mxu0
      %v1043 = vadd.f32 0.0, %v1042
      %v1044 = vpop.f32.mrf.mxu0
      %v1045 = vpop.f32.mrf.mxu0
      %v1046 = vadd.f32 0.0, %v1045
      %v1047 = vpop.f32.mrf.mxu0
      %1048 = vmatprep.mubr.bf16.mxu0 0
      %1049 = vmatmul.mubr.bf16.gmra.mxu0 %v985
      %v1050 = vpop.f32.mrf.mxu0
      %v1051 = vadd.f32 0.0, %v1050
      %v1052 = vpop.f32.mrf.mxu0
      %v1053 = vpop.f32.mrf.mxu0
      %v1054 = vadd.f32 0.0, %v1053
      %v1055 = vpop.f32.mrf.mxu0
      %1056 = vmatprep.mubr.bf16.mxu0 0
      %1057 = vmatmul.mubr.bf16.gmra.mxu0 %v988
      %v1058 = vpop.f32.mrf.mxu0
      %v1059 = vadd.f32 0.0, %v1058
      %v1060 = vpop.f32.mrf.mxu0
      %v1061 = vpop.f32.mrf.mxu0
      %v1062 = vadd.f32 0.0, %v1061
      %v1063 = vpop.f32.mrf.mxu0
      %1064 = vmatprep.mubr.bf16.mxu0 0
      %1065 = vmatmul.mubr.bf16.gmra.mxu0 %v991
      %v1066 = vpop.f32.mrf.mxu0
      %v1067 = vadd.f32 0.0, %v1066
      %v1068 = vpop.f32.mrf.mxu0
      %v1069 = vpop.f32.mrf.mxu0
      %v1070 = vadd.f32 0.0, %v1069
      %v1071 = vpop.f32.mrf.mxu0
      %1072 = vmatprep.mubr.bf16.mxu0 0
      %1073 = vmatmul.mubr.bf16.gmra.mxu0 %v994
      %v1074 = vpop.f32.mrf.mxu0
      %v1075 = vadd.f32 0.0, %v1074
      %v1076 = vpop.f32.mrf.mxu0
      %v1077 = vpop.f32.mrf.mxu0
      %v1078 = vadd.f32 0.0, %v1077
      %v1079 = vpop.f32.mrf.mxu0
      %1080 = vmatprep.mubr.bf16.mxu0 0
      %1081 = vmatmul.mubr.bf16.gmra.mxu0 %v997
      %v1082 = vpop.f32.mrf.mxu0
      %v1083 = vadd.f32 0.0, %v1082
      %v1084 = vpop.f32.mrf.mxu0
      %v1085 = vpop.f32.mrf.mxu0
      %v1086 = vadd.f32 0.0, %v1085
      %v1087 = vpop.f32.mrf.mxu0
      %1088 = vmatprep.mubr.bf16.mxu0 0
      %1089 = vmatmul.mubr.bf16.gmra.mxu0 %v1000
      %v1090 = vpop.f32.mrf.mxu0
      %v1091 = vadd.f32 0.0, %v1090
      %v1092 = vpop.f32.mrf.mxu0
      %v1093 = vpop.f32.mrf.mxu0
      %v1094 = vadd.f32 0.0, %v1093
      %v1095 = vpop.f32.mrf.mxu0
      %1096 = vmatprep.mubr.bf16.mxu0 0
      %1097 = vmatmul.mubr.bf16.gmra.mxu0 %v1003
      %v1098 = vpop.f32.mrf.mxu0
      %v1099 = vadd.f32 0.0, %v1098
      %v1100 = vpop.f32.mrf.mxu0
      %v1101 = vpop.f32.mrf.mxu0
      %v1102 = vadd.f32 0.0, %v1101
      %v1103 = vpop.f32.mrf.mxu0
      %1104 = vdwg.mxu0
      %v1106 = vsel %vm757, %v663, 0
      %v1109 = vsel %vm774, %v978, 0
      %1111 = vmatprep.subr.bf16.mxu0 0
      %1112 = vmatpush1.bf16.msra.mxu0 0
      %1113 = vmatprep.subr.bf16.mxu0 0
      %1114 = vmatpush1.bf16.msra.mxu0 0
      %1115 = vmatprep.subr.bf16.mxu0 0
      %1116 = vmatpush1.bf16.msra.mxu0 0
      %1117 = vmatprep.subr.bf16.mxu0 0
      %1118 = vmatpush1.bf16.msra.mxu0 0
      %1119 = vmatprep.subr.bf16.mxu0 0
      %1120 = vmatpush1.bf16.msra.mxu0 0
      %1121 = vmatprep.subr.bf16.mxu0 0
      %1122 = vmatpush1.bf16.msra.mxu0 0
      %1123 = vmatprep.subr.bf16.mxu0 0
      %1124 = vmatpush1.bf16.msra.mxu0 0
      %1125 = vmatprep.subr.bf16.mxu0 0
      %1126 = vmatpush1.bf16.msra.mxu0 %v1109
      %1127 = vmatprep.subr.bf16.mxu0 0
      %1128 = vmatpush2.bf16.msra.mxu0 0
      %1129 = vmatprep.subr.bf16.mxu0 0
      %1130 = vmatpush2.bf16.msra.mxu0 0
      %1131 = vmatprep.subr.bf16.mxu0 0
      %1132 = vmatpush2.bf16.msra.mxu0 0
      %1133 = vmatprep.subr.bf16.mxu0 0
      %1134 = vmatpush2.bf16.msra.mxu0 0
      %1135 = vmatprep.subr.bf16.mxu0 0
      %1136 = vmatpush2.bf16.msra.mxu0 0
      %1137 = vmatprep.subr.bf16.mxu0 0
      %1138 = vmatpush2.bf16.msra.mxu0 0
      %1139 = vmatprep.subr.bf16.mxu0 0
      %1140 = vmatpush2.bf16.msra.mxu0 0
      %1141 = vmatprep.subr.bf16.mxu0 0
      %1142 = vmatpush2.bf16.msra.mxu0 0
      %1143 = vmatprep.mubr.bf16.mxu0 0
      %1144 = vmatmul.mubr.bf16.gmra.mxu0 %v1106
      %v1145 = vpop.f32.mrf.mxu0
      %v1146 = vadd.f32 %v1043, %v1145
      %v1147 = vpop.f32.mrf.mxu0
      %v1148 = vpop.f32.mrf.mxu0
      %v1149 = vadd.f32 %v1046, %v1148
      %v1150 = vpop.f32.mrf.mxu0
      %1151 = vmatprep.mubr.bf16.mxu0 0
      %1152 = vmatmul.mubr.bf16.gmra.mxu0 %v982
      %v1153 = vpop.f32.mrf.mxu0
      %v1154 = vadd.f32 %v1051, %v1153
      %v1155 = vpop.f32.mrf.mxu0
      %v1156 = vpop.f32.mrf.mxu0
      %v1157 = vadd.f32 %v1054, %v1156
      %v1158 = vpop.f32.mrf.mxu0
      %1159 = vmatprep.mubr.bf16.mxu0 0
      %1160 = vmatmul.mubr.bf16.gmra.mxu0 %v985
      %v1161 = vpop.f32.mrf.mxu0
      %v1162 = vadd.f32 %v1059, %v1161
      %v1163 = vpop.f32.mrf.mxu0
      %v1164 = vpop.f32.mrf.mxu0
      %v1165 = vadd.f32 %v1062, %v1164
      %v1166 = vpop.f32.mrf.mxu0
      %1167 = vmatprep.mubr.bf16.mxu0 0
      %1168 = vmatmul.mubr.bf16.gmra.mxu0 %v988
      %v1169 = vpop.f32.mrf.mxu0
      %v1170 = vadd.f32 %v1067, %v1169
      %v1171 = vpop.f32.mrf.mxu0
      %v1172 = vpop.f32.mrf.mxu0
      %v1173 = vadd.f32 %v1070, %v1172
      %v1174 = vpop.f32.mrf.mxu0
      %1175 = vmatprep.mubr.bf16.mxu0 0
      %1176 = vmatmul.mubr.bf16.gmra.mxu0 %v991
      %v1177 = vpop.f32.mrf.mxu0
      %v1178 = vadd.f32 %v1075, %v1177
      %v1179 = vpop.f32.mrf.mxu0
      %v1180 = vpop.f32.mrf.mxu0
      %v1181 = vadd.f32 %v1078, %v1180
      %v1182 = vpop.f32.mrf.mxu0
      %1183 = vmatprep.mubr.bf16.mxu0 0
      %1184 = vmatmul.mubr.bf16.gmra.mxu0 %v994
      %v1185 = vpop.f32.mrf.mxu0
      %v1186 = vadd.f32 %v1083, %v1185
      %v1187 = vpop.f32.mrf.mxu0
      %v1188 = vpop.f32.mrf.mxu0
      %v1189 = vadd.f32 %v1086, %v1188
      %v1190 = vpop.f32.mrf.mxu0
      %1191 = vmatprep.mubr.bf16.mxu0 0
      %1192 = vmatmul.mubr.bf16.gmra.mxu0 %v997
      %v1193 = vpop.f32.mrf.mxu0
      %v1194 = vadd.f32 %v1091, %v1193
      %v1195 = vpop.f32.mrf.mxu0
      %v1196 = vpop.f32.mrf.mxu0
      %v1197 = vadd.f32 %v1094, %v1196
      %v1198 = vpop.f32.mrf.mxu0
      %1199 = vmatprep.mubr.bf16.mxu0 0
      %1200 = vmatmul.mubr.bf16.gmra.mxu0 %v1000
      %v1201 = vpop.f32.mrf.mxu0
      %v1202 = vadd.f32 %v1099, %v1201
      %v1203 = vpop.f32.mrf.mxu0
      %v1204 = vpop.f32.mrf.mxu0
      %v1205 = vadd.f32 %v1102, %v1204
      %v1206 = vpop.f32.mrf.mxu0
      %1207 = vdwg.mxu0
      %1224 = vrot.lane.b32.xlu0 %v1146, 4
      %v1225 = vpop.permute.xlu0 %1224
      %1226 = vrot.lane.b32.xlu0 %v1149, 4
      %v1227 = vpop.permute.xlu0 %1226
      %1228 = vrot.lane.b32.xlu0 %v1154, 4
      %v1229 = vpop.permute.xlu0 %1228
      %1230 = vrot.lane.b32.xlu0 %v1157, 4
      %v1231 = vpop.permute.xlu0 %1230
      %1232 = vrot.lane.b32.xlu0 %v1162, 4
      %v1233 = vpop.permute.xlu0 %1232
      %1234 = vrot.lane.b32.xlu0 %v1165, 4
      %v1235 = vpop.permute.xlu0 %1234
      %1236 = vrot.lane.b32.xlu0 %v1170, 4
      %v1237 = vpop.permute.xlu0 %1236
      %1238 = vrot.lane.b32.xlu0 %v1173, 4
      %v1239 = vpop.permute.xlu0 %1238
      %1240 = vrot.lane.b32.xlu0 %v1178, 4
      %v1241 = vpop.permute.xlu0 %1240
      %1242 = vrot.lane.b32.xlu0 %v1181, 4
      %v1243 = vpop.permute.xlu0 %1242
      %1244 = vrot.lane.b32.xlu0 %v1186, 4
      %v1245 = vpop.permute.xlu0 %1244
      %1246 = vrot.lane.b32.xlu0 %v1189, 4
      %v1247 = vpop.permute.xlu0 %1246
      %1248 = vrot.lane.b32.xlu0 %v1194, 4
      %v1249 = vpop.permute.xlu0 %1248
      %1250 = vrot.lane.b32.xlu0 %v1197, 4
      %v1251 = vpop.permute.xlu0 %1250
      %1252 = vrot.lane.b32.xlu0 %v1202, 4
      %v1253 = vpop.permute.xlu0 %1252
      %1254 = vrot.lane.b32.xlu0 %v1205, 4
      %v1255 = vpop.permute.xlu0 %1254
      %v1272 = vsel %vm529, %v915, %v1225
      %v1273 = vsel %vm529, %v918, %v1227
      %v1274 = vsel %vm529, %v923, %v1229
      %v1275 = vsel %vm529, %v926, %v1231
      %v1276 = vsel %vm529, %v931, %v1233
      %v1277 = vsel %vm529, %v934, %v1235
      %v1278 = vsel %vm529, %v939, %v1237
      %v1279 = vsel %vm529, %v942, %v1239
      %v1280 = vsel %vm529, %v947, %v1241
      %v1281 = vsel %vm529, %v950, %v1243
      %v1282 = vsel %vm529, %v955, %v1245
      %v1283 = vsel %vm529, %v958, %v1247
      %v1284 = vsel %vm529, %v963, %v1249
      %v1285 = vsel %vm529, %v966, %v1251
      %v1286 = vsel %vm529, %v971, %v1253
      %v1287 = vsel %vm529, %v974, %v1255
      %v1289 = vlaneseq
      %v1290 = vshrl.u32 %v1289, 7
      %v1291 = vsub.s32 0, %v1290
      %v1292 = vrot.slane %v351, %v1291
      %v1294 = vadd.f32 %v1272, %v1292
      %v1295 = vadd.f32 %v1273, %v1292
      %v1296 = vadd.f32 %v1274, %v1292
      %v1297 = vadd.f32 %v1275, %v1292
      %v1298 = vadd.f32 %v1276, %v1292
      %v1299 = vadd.f32 %v1277, %v1292
      %v1300 = vadd.f32 %v1278, %v1292
      %v1301 = vadd.f32 %v1279, %v1292
      %v1302 = vadd.f32 %v1280, %v1292
      %v1303 = vadd.f32 %v1281, %v1292
      %v1304 = vadd.f32 %v1282, %v1292
      %v1305 = vadd.f32 %v1283, %v1292
      %v1306 = vadd.f32 %v1284, %v1292
      %v1307 = vadd.f32 %v1285, %v1292
      %v1308 = vadd.f32 %v1286, %v1292
      %v1309 = vadd.f32 %v1287, %v1292
      %1310 = vst.msk [vmem:[%s318] sm:$0xff] %vm757, %v1294
      %1311 = vst.msk [vmem:[%s318 + $0x8] sm:$0xff] %vm757, %v1295
      %1312 = vst.msk [vmem:[%s318 + $0x20] sm:$0xff] %vm757, %v1296
      %1313 = vst.msk [vmem:[%s318 + $0x28] sm:$0xff] %vm757, %v1297
      %1314 = vst.msk [vmem:[%s318 + $0x40] sm:$0xff] %vm757, %v1298
      %1315 = vst.msk [vmem:[%s318 + $0x48] sm:$0xff] %vm757, %v1299
      %1316 = vst.msk [vmem:[%s318 + $0x60] sm:$0xff] %vm757, %v1300
      %1317 = vst.msk [vmem:[%s318 + $0x68] sm:$0xff] %vm757, %v1301
      %1318 = vst.msk [vmem:[%s318 + $0x80] sm:$0xff] %vm757, %v1302
      %1319 = vst.msk [vmem:[%s318 + $0x88] sm:$0xff] %vm757, %v1303
      %1320 = vst.msk [vmem:[%s318 + $0xa0] sm:$0xff] %vm757, %v1304
      %1321 = vst.msk [vmem:[%s318 + $0xa8] sm:$0xff] %vm757, %v1305
      %1322 = vst.msk [vmem:[%s318 + $0xc0] sm:$0xff] %vm757, %v1306
      %1323 = vst.msk [vmem:[%s318 + $0xc8] sm:$0xff] %vm757, %v1307
      %1324 = vst.msk [vmem:[%s318 + $0xe0] sm:$0xff] %vm757, %v1308
      %1325 = vst.msk [vmem:[%s318 + $0xe8] sm:$0xff] %vm757, %v1309
      %s1326 = scalar_lea.vmem %s2, 16
      %v1327 = vld [vmem:[%s1326] sm:$0xf]
      %s1328 = scalar_lea.vmem %s2, 20
      %v1329 = vld [vmem:[%s1328] sm:$0xf]
      %v1330 = vsel %vm757, %v593, 0
      %v1333 = vsel %vm774, %v1329, 0
      %1335 = vmatprep.subr.bf16.mxu0 0
      %1336 = vmatpush1.bf16.msra.mxu0 0
      %1337 = vmatprep.subr.bf16.mxu0 0
      %1338 = vmatpush1.bf16.msra.mxu0 0
      %1339 = vmatprep.subr.bf16.mxu0 0
      %1340 = vmatpush1.bf16.msra.mxu0 0
      %1341 = vmatprep.subr.bf16.mxu0 0
      %1342 = vmatpush1.bf16.msra.mxu0 0
      %1343 = vmatprep.subr.bf16.mxu0 0
      %1344 = vmatpush1.bf16.msra.mxu0 0
      %1345 = vmatprep.subr.bf16.mxu0 0
      %1346 = vmatpush1.bf16.msra.mxu0 0
      %1347 = vmatprep.subr.bf16.mxu0 0
      %1348 = vmatpush1.bf16.msra.mxu0 0
      %1349 = vmatprep.subr.bf16.mxu0 0
      %1350 = vmatpush1.bf16.msra.mxu0 %v1333
      %1351 = vmatprep.subr.bf16.mxu0 0
      %1352 = vmatpush2.bf16.msra.mxu0 0
      %1353 = vmatprep.subr.bf16.mxu0 0
      %1354 = vmatpush2.bf16.msra.mxu0 0
      %1355 = vmatprep.subr.bf16.mxu0 0
      %1356 = vmatpush2.bf16.msra.mxu0 0
      %1357 = vmatprep.subr.bf16.mxu0 0
      %1358 = vmatpush2.bf16.msra.mxu0 0
      %1359 = vmatprep.subr.bf16.mxu0 0
      %1360 = vmatpush2.bf16.msra.mxu0 0
      %1361 = vmatprep.subr.bf16.mxu0 0
      %1362 = vmatpush2.bf16.msra.mxu0 0
      %1363 = vmatprep.subr.bf16.mxu0 0
      %1364 = vmatpush2.bf16.msra.mxu0 0
      %1365 = vmatprep.subr.bf16.mxu0 0
      %1366 = vmatpush2.bf16.msra.mxu0 0
      %1367 = vmatprep.mubr.bf16.mxu0 0
      %1368 = vmatmul.mubr.bf16.gmra.mxu0 %v760
      %v1369 = vpop.f32.mrf.mxu0
      %v1370 = vadd.f32 0.0, %v1369
      %v1371 = vpop.f32.mrf.mxu0
      %v1372 = vpop.f32.mrf.mxu0
      %v1373 = vadd.f32 0.0, %v1372
      %v1374 = vpop.f32.mrf.mxu0
      %1375 = vmatprep.mubr.bf16.mxu0 0
      %1376 = vmatmul.mubr.bf16.gmra.mxu0 %v762
      %v1377 = vpop.f32.mrf.mxu0
      %v1378 = vadd.f32 0.0, %v1377
      %v1379 = vpop.f32.mrf.mxu0
      %v1380 = vpop.f32.mrf.mxu0
      %v1381 = vadd.f32 0.0, %v1380
      %v1382 = vpop.f32.mrf.mxu0
      %1383 = vmatprep.mubr.bf16.mxu0 0
      %1384 = vmatmul.mubr.bf16.gmra.mxu0 %v764
      %v1385 = vpop.f32.mrf.mxu0
      %v1386 = vadd.f32 0.0, %v1385
      %v1387 = vpop.f32.mrf.mxu0
      %v1388 = vpop.f32.mrf.mxu0
      %v1389 = vadd.f32 0.0, %v1388
      %v1390 = vpop.f32.mrf.mxu0
      %1391 = vmatprep.mubr.bf16.mxu0 0
      %1392 = vmatmul.mubr.bf16.gmra.mxu0 %v766
      %v1393 = vpop.f32.mrf.mxu0
      %v1394 = vadd.f32 0.0, %v1393
      %v1395 = vpop.f32.mrf.mxu0
      %v1396 = vpop.f32.mrf.mxu0
      %v1397 = vadd.f32 0.0, %v1396
      %v1398 = vpop.f32.mrf.mxu0
      %1399 = vmatprep.mubr.bf16.mxu0 0
      %1400 = vmatmul.mubr.bf16.gmra.mxu0 %v768
      %v1401 = vpop.f32.mrf.mxu0
      %v1402 = vadd.f32 0.0, %v1401
      %v1403 = vpop.f32.mrf.mxu0
      %v1404 = vpop.f32.mrf.mxu0
      %v1405 = vadd.f32 0.0, %v1404
      %v1406 = vpop.f32.mrf.mxu0
      %1407 = vmatprep.mubr.bf16.mxu0 0
      %1408 = vmatmul.mubr.bf16.gmra.mxu0 %v770
      %v1409 = vpop.f32.mrf.mxu0
      %v1410 = vadd.f32 0.0, %v1409
      %v1411 = vpop.f32.mrf.mxu0
      %v1412 = vpop.f32.mrf.mxu0
      %v1413 = vadd.f32 0.0, %v1412
      %v1414 = vpop.f32.mrf.mxu0
      %1415 = vmatprep.mubr.bf16.mxu0 0
      %1416 = vmatmul.mubr.bf16.gmra.mxu0 %v772
      %v1417 = vpop.f32.mrf.mxu0
      %v1418 = vadd.f32 0.0, %v1417
      %v1419 = vpop.f32.mrf.mxu0
      %v1420 = vpop.f32.mrf.mxu0
      %v1421 = vadd.f32 0.0, %v1420
      %v1422 = vpop.f32.mrf.mxu0
      %1423 = vmatprep.mubr.bf16.mxu0 0
      %1424 = vmatmul.mubr.bf16.gmra.mxu0 %v1330
      %v1425 = vpop.f32.mrf.mxu0
      %v1426 = vadd.f32 0.0, %v1425
      %v1427 = vpop.f32.mrf.mxu0
      %v1428 = vpop.f32.mrf.mxu0
      %v1429 = vadd.f32 0.0, %v1428
      %v1430 = vpop.f32.mrf.mxu0
      %1431 = vdwg.mxu0
      %v1433 = vsel %vm774, %v1327, 0
      %1435 = vmatprep.subr.bf16.mxu0 0
      %1436 = vmatpush1.bf16.msra.mxu0 0
      %1437 = vmatprep.subr.bf16.mxu0 0
      %1438 = vmatpush1.bf16.msra.mxu0 0
      %1439 = vmatprep.subr.bf16.mxu0 0
      %1440 = vmatpush1.bf16.msra.mxu0 0
      %1441 = vmatprep.subr.bf16.mxu0 0
      %1442 = vmatpush1.bf16.msra.mxu0 0
      %1443 = vmatprep.subr.bf16.mxu0 0
      %1444 = vmatpush1.bf16.msra.mxu0 0
      %1445 = vmatprep.subr.bf16.mxu0 0
      %1446 = vmatpush1.bf16.msra.mxu0 0
      %1447 = vmatprep.subr.bf16.mxu0 0
      %1448 = vmatpush1.bf16.msra.mxu0 0
      %1449 = vmatprep.subr.bf16.mxu0 0
      %1450 = vmatpush1.bf16.msra.mxu0 %v1433
      %1451 = vmatprep.subr.bf16.mxu0 0
      %1452 = vmatpush2.bf16.msra.mxu0 0
      %1453 = vmatprep.subr.bf16.mxu0 0
      %1454 = vmatpush2.bf16.msra.mxu0 0
      %1455 = vmatprep.subr.bf16.mxu0 0
      %1456 = vmatpush2.bf16.msra.mxu0 0
      %1457 = vmatprep.subr.bf16.mxu0 0
      %1458 = vmatpush2.bf16.msra.mxu0 0
      %1459 = vmatprep.subr.bf16.mxu0 0
      %1460 = vmatpush2.bf16.msra.mxu0 0
      %1461 = vmatprep.subr.bf16.mxu0 0
      %1462 = vmatpush2.bf16.msra.mxu0 0
      %1463 = vmatprep.subr.bf16.mxu0 0
      %1464 = vmatpush2.bf16.msra.mxu0 0
      %1465 = vmatprep.subr.bf16.mxu0 0
      %1466 = vmatpush2.bf16.msra.mxu0 0
      %1467 = vmatprep.mubr.bf16.mxu0 0
      %1468 = vmatmul.mubr.bf16.gmra.mxu0 %v758
      %v1469 = vpop.f32.mrf.mxu0
      %v1470 = vadd.f32 %v1370, %v1469
      %v1471 = vpop.f32.mrf.mxu0
      %v1472 = vpop.f32.mrf.mxu0
      %v1473 = vadd.f32 %v1373, %v1472
      %v1474 = vpop.f32.mrf.mxu0
      %1475 = vmatprep.mubr.bf16.mxu0 0
      %1476 = vmatmul.mubr.bf16.gmra.mxu0 %v760
      %v1477 = vpop.f32.mrf.mxu0
      %v1478 = vadd.f32 %v1378, %v1477
      %v1479 = vpop.f32.mrf.mxu0
      %v1480 = vpop.f32.mrf.mxu0
      %v1481 = vadd.f32 %v1381, %v1480
      %v1482 = vpop.f32.mrf.mxu0
      %1483 = vmatprep.mubr.bf16.mxu0 0
      %1484 = vmatmul.mubr.bf16.gmra.mxu0 %v762
      %v1485 = vpop.f32.mrf.mxu0
      %v1486 = vadd.f32 %v1386, %v1485
      %v1487 = vpop.f32.mrf.mxu0
      %v1488 = vpop.f32.mrf.mxu0
      %v1489 = vadd.f32 %v1389, %v1488
      %v1490 = vpop.f32.mrf.mxu0
      %1491 = vmatprep.mubr.bf16.mxu0 0
      %1492 = vmatmul.mubr.bf16.gmra.mxu0 %v764
      %v1493 = vpop.f32.mrf.mxu0
      %v1494 = vadd.f32 %v1394, %v1493
      %v1495 = vpop.f32.mrf.mxu0
      %v1496 = vpop.f32.mrf.mxu0
      %v1497 = vadd.f32 %v1397, %v1496
      %v1498 = vpop.f32.mrf.mxu0
      %1499 = vmatprep.mubr.bf16.mxu0 0
      %1500 = vmatmul.mubr.bf16.gmra.mxu0 %v766
      %v1501 = vpop.f32.mrf.mxu0
      %v1502 = vadd.f32 %v1402, %v1501
      %v1503 = vpop.f32.mrf.mxu0
      %v1504 = vpop.f32.mrf.mxu0
      %v1505 = vadd.f32 %v1405, %v1504
      %v1506 = vpop.f32.mrf.mxu0
      %1507 = vmatprep.mubr.bf16.mxu0 0
      %1508 = vmatmul.mubr.bf16.gmra.mxu0 %v768
      %v1509 = vpop.f32.mrf.mxu0
      %v1510 = vadd.f32 %v1410, %v1509
      %v1511 = vpop.f32.mrf.mxu0
      %v1512 = vpop.f32.mrf.mxu0
      %v1513 = vadd.f32 %v1413, %v1512
      %v1514 = vpop.f32.mrf.mxu0
      %1515 = vmatprep.mubr.bf16.mxu0 0
      %1516 = vmatmul.mubr.bf16.gmra.mxu0 %v770
      %v1517 = vpop.f32.mrf.mxu0
      %v1518 = vadd.f32 %v1418, %v1517
      %v1519 = vpop.f32.mrf.mxu0
      %v1520 = vpop.f32.mrf.mxu0
      %v1521 = vadd.f32 %v1421, %v1520
      %v1522 = vpop.f32.mrf.mxu0
      %1523 = vmatprep.mubr.bf16.mxu0 0
      %1524 = vmatmul.mubr.bf16.gmra.mxu0 %v772
      %v1525 = vpop.f32.mrf.mxu0
      %v1526 = vadd.f32 %v1426, %v1525
      %v1527 = vpop.f32.mrf.mxu0
      %v1528 = vpop.f32.mrf.mxu0
      %v1529 = vadd.f32 %v1429, %v1528
      %v1530 = vpop.f32.mrf.mxu0
      %1531 = vdwg.mxu0
      %s1532 = scalar_lea.vmem %s2, 24
      %v1533 = vld [vmem:[%s1532] sm:$0xf]
      %s1534 = scalar_lea.vmem %s2, 28
      %v1535 = vld [vmem:[%s1534] sm:$0xf]
      %v1537 = vsel %vm757, %v753, 0
      %v1540 = vsel %vm774, %v1535, 0
      %1542 = vmatprep.subr.bf16.mxu0 0
      %1543 = vmatpush1.bf16.msra.mxu0 0
      %1544 = vmatprep.subr.bf16.mxu0 0
      %1545 = vmatpush1.bf16.msra.mxu0 0
      %1546 = vmatprep.subr.bf16.mxu0 0
      %1547 = vmatpush1.bf16.msra.mxu0 0
      %1548 = vmatprep.subr.bf16.mxu0 0
      %1549 = vmatpush1.bf16.msra.mxu0 0
      %1550 = vmatprep.subr.bf16.mxu0 0
      %1551 = vmatpush1.bf16.msra.mxu0 0
      %1552 = vmatprep.subr.bf16.mxu0 0
      %1553 = vmatpush1.bf16.msra.mxu0 0
      %1554 = vmatprep.subr.bf16.mxu0 0
      %1555 = vmatpush1.bf16.msra.mxu0 0
      %1556 = vmatprep.subr.bf16.mxu0 0
      %1557 = vmatpush1.bf16.msra.mxu0 %v1540
      %1558 = vmatprep.subr.bf16.mxu0 0
      %1559 = vmatpush2.bf16.msra.mxu0 0
      %1560 = vmatprep.subr.bf16.mxu0 0
      %1561 = vmatpush2.bf16.msra.mxu0 0
      %1562 = vmatprep.subr.bf16.mxu0 0
      %1563 = vmatpush2.bf16.msra.mxu0 0
      %1564 = vmatprep.subr.bf16.mxu0 0
      %1565 = vmatpush2.bf16.msra.mxu0 0
      %1566 = vmatprep.subr.bf16.mxu0 0
      %1567 = vmatpush2.bf16.msra.mxu0 0
      %1568 = vmatprep.subr.bf16.mxu0 0
      %1569 = vmatpush2.bf16.msra.mxu0 0
      %1570 = vmatprep.subr.bf16.mxu0 0
      %1571 = vmatpush2.bf16.msra.mxu0 0
      %1572 = vmatprep.subr.bf16.mxu0 0
      %1573 = vmatpush2.bf16.msra.mxu0 0
      %1574 = vmatprep.mubr.bf16.mxu0 0
      %1575 = vmatmul.mubr.bf16.gmra.mxu0 %v985
      %v1576 = vpop.f32.mrf.mxu0
      %v1577 = vadd.f32 0.0, %v1576
      %v1578 = vpop.f32.mrf.mxu0
      %v1579 = vpop.f32.mrf.mxu0
      %v1580 = vadd.f32 0.0, %v1579
      %v1581 = vpop.f32.mrf.mxu0
      %1582 = vmatprep.mubr.bf16.mxu0 0
      %1583 = vmatmul.mubr.bf16.gmra.mxu0 %v988
      %v1584 = vpop.f32.mrf.mxu0
      %v1585 = vadd.f32 0.0, %v1584
      %v1586 = vpop.f32.mrf.mxu0
      %v1587 = vpop.f32.mrf.mxu0
      %v1588 = vadd.f32 0.0, %v1587
      %v1589 = vpop.f32.mrf.mxu0
      %1590 = vmatprep.mubr.bf16.mxu0 0
      %1591 = vmatmul.mubr.bf16.gmra.mxu0 %v991
      %v1592 = vpop.f32.mrf.mxu0
      %v1593 = vadd.f32 0.0, %v1592
      %v1594 = vpop.f32.mrf.mxu0
      %v1595 = vpop.f32.mrf.mxu0
      %v1596 = vadd.f32 0.0, %v1595
      %v1597 = vpop.f32.mrf.mxu0
      %1598 = vmatprep.mubr.bf16.mxu0 0
      %1599 = vmatmul.mubr.bf16.gmra.mxu0 %v994
      %v1600 = vpop.f32.mrf.mxu0
      %v1601 = vadd.f32 0.0, %v1600
      %v1602 = vpop.f32.mrf.mxu0
      %v1603 = vpop.f32.mrf.mxu0
      %v1604 = vadd.f32 0.0, %v1603
      %v1605 = vpop.f32.mrf.mxu0
      %1606 = vmatprep.mubr.bf16.mxu0 0
      %1607 = vmatmul.mubr.bf16.gmra.mxu0 %v997
      %v1608 = vpop.f32.mrf.mxu0
      %v1609 = vadd.f32 0.0, %v1608
      %v1610 = vpop.f32.mrf.mxu0
      %v1611 = vpop.f32.mrf.mxu0
      %v1612 = vadd.f32 0.0, %v1611
      %v1613 = vpop.f32.mrf.mxu0
      %1614 = vmatprep.mubr.bf16.mxu0 0
      %1615 = vmatmul.mubr.bf16.gmra.mxu0 %v1000
      %v1616 = vpop.f32.mrf.mxu0
      %v1617 = vadd.f32 0.0, %v1616
      %v1618 = vpop.f32.mrf.mxu0
      %v1619 = vpop.f32.mrf.mxu0
      %v1620 = vadd.f32 0.0, %v1619
      %v1621 = vpop.f32.mrf.mxu0
      %1622 = vmatprep.mubr.bf16.mxu0 0
      %1623 = vmatmul.mubr.bf16.gmra.mxu0 %v1003
      %v1624 = vpop.f32.mrf.mxu0
      %v1625 = vadd.f32 0.0, %v1624
      %v1626 = vpop.f32.mrf.mxu0
      %v1627 = vpop.f32.mrf.mxu0
      %v1628 = vadd.f32 0.0, %v1627
      %v1629 = vpop.f32.mrf.mxu0
      %1630 = vmatprep.mubr.bf16.mxu0 0
      %1631 = vmatmul.mubr.bf16.gmra.mxu0 %v1537
      %v1632 = vpop.f32.mrf.mxu0
      %v1633 = vadd.f32 0.0, %v1632
      %v1634 = vpop.f32.mrf.mxu0
      %v1635 = vpop.f32.mrf.mxu0
      %v1636 = vadd.f32 0.0, %v1635
      %v1637 = vpop.f32.mrf.mxu0
      %1638 = vdwg.mxu0
      %v1640 = vsel %vm774, %v1533, 0
      %1642 = vmatprep.subr.bf16.mxu0 0
      %1643 = vmatpush1.bf16.msra.mxu0 0
      %1644 = vmatprep.subr.bf16.mxu0 0
      %1645 = vmatpush1.bf16.msra.mxu0 0
      %1646 = vmatprep.subr.bf16.mxu0 0
      %1647 = vmatpush1.bf16.msra.mxu0 0
      %1648 = vmatprep.subr.bf16.mxu0 0
      %1649 = vmatpush1.bf16.msra.mxu0 0
      %1650 = vmatprep.subr.bf16.mxu0 0
      %1651 = vmatpush1.bf16.msra.mxu0 0
      %1652 = vmatprep.subr.bf16.mxu0 0
      %1653 = vmatpush1.bf16.msra.mxu0 0
      %1654 = vmatprep.subr.bf16.mxu0 0
      %1655 = vmatpush1.bf16.msra.mxu0 0
      %1656 = vmatprep.subr.bf16.mxu0 0
      %1657 = vmatpush1.bf16.msra.mxu0 %v1640
      %1658 = vmatprep.subr.bf16.mxu0 0
      %1659 = vmatpush2.bf16.msra.mxu0 0
      %1660 = vmatprep.subr.bf16.mxu0 0
      %1661 = vmatpush2.bf16.msra.mxu0 0
      %1662 = vmatprep.subr.bf16.mxu0 0
      %1663 = vmatpush2.bf16.msra.mxu0 0
      %1664 = vmatprep.subr.bf16.mxu0 0
      %1665 = vmatpush2.bf16.msra.mxu0 0
      %1666 = vmatprep.subr.bf16.mxu0 0
      %1667 = vmatpush2.bf16.msra.mxu0 0
      %1668 = vmatprep.subr.bf16.mxu0 0
      %1669 = vmatpush2.bf16.msra.mxu0 0
      %1670 = vmatprep.subr.bf16.mxu0 0
      %1671 = vmatpush2.bf16.msra.mxu0 0
      %1672 = vmatprep.subr.bf16.mxu0 0
      %1673 = vmatpush2.bf16.msra.mxu0 0
      %1674 = vmatprep.mubr.bf16.mxu0 0
      %1675 = vmatmul.mubr.bf16.gmra.mxu0 %v982
      %v1676 = vpop.f32.mrf.mxu0
      %v1677 = vadd.f32 %v1577, %v1676
      %v1678 = vpop.f32.mrf.mxu0
      %v1679 = vpop.f32.mrf.mxu0
      %v1680 = vadd.f32 %v1580, %v1679
      %v1681 = vpop.f32.mrf.mxu0
      %1682 = vmatprep.mubr.bf16.mxu0 0
      %1683 = vmatmul.mubr.bf16.gmra.mxu0 %v985
      %v1684 = vpop.f32.mrf.mxu0
      %v1685 = vadd.f32 %v1585, %v1684
      %v1686 = vpop.f32.mrf.mxu0
      %v1687 = vpop.f32.mrf.mxu0
      %v1688 = vadd.f32 %v1588, %v1687
      %v1689 = vpop.f32.mrf.mxu0
      %1690 = vmatprep.mubr.bf16.mxu0 0
      %1691 = vmatmul.mubr.bf16.gmra.mxu0 %v988
      %v1692 = vpop.f32.mrf.mxu0
      %v1693 = vadd.f32 %v1593, %v1692
      %v1694 = vpop.f32.mrf.mxu0
      %v1695 = vpop.f32.mrf.mxu0
      %v1696 = vadd.f32 %v1596, %v1695
      %v1697 = vpop.f32.mrf.mxu0
      %1698 = vmatprep.mubr.bf16.mxu0 0
      %1699 = vmatmul.mubr.bf16.gmra.mxu0 %v991
      %v1700 = vpop.f32.mrf.mxu0
      %v1701 = vadd.f32 %v1601, %v1700
      %v1702 = vpop.f32.mrf.mxu0
      %v1703 = vpop.f32.mrf.mxu0
      %v1704 = vadd.f32 %v1604, %v1703
      %v1705 = vpop.f32.mrf.mxu0
      %1706 = vmatprep.mubr.bf16.mxu0 0
      %1707 = vmatmul.mubr.bf16.gmra.mxu0 %v994
      %v1708 = vpop.f32.mrf.mxu0
      %v1709 = vadd.f32 %v1609, %v1708
      %v1710 = vpop.f32.mrf.mxu0
      %v1711 = vpop.f32.mrf.mxu0
      %v1712 = vadd.f32 %v1612, %v1711
      %v1713 = vpop.f32.mrf.mxu0
      %1714 = vmatprep.mubr.bf16.mxu0 0
      %1715 = vmatmul.mubr.bf16.gmra.mxu0 %v997
      %v1716 = vpop.f32.mrf.mxu0
      %v1717 = vadd.f32 %v1617, %v1716
      %v1718 = vpop.f32.mrf.mxu0
      %v1719 = vpop.f32.mrf.mxu0
      %v1720 = vadd.f32 %v1620, %v1719
      %v1721 = vpop.f32.mrf.mxu0
      %1722 = vmatprep.mubr.bf16.mxu0 0
      %1723 = vmatmul.mubr.bf16.gmra.mxu0 %v1000
      %v1724 = vpop.f32.mrf.mxu0
      %v1725 = vadd.f32 %v1625, %v1724
      %v1726 = vpop.f32.mrf.mxu0
      %v1727 = vpop.f32.mrf.mxu0
      %v1728 = vadd.f32 %v1628, %v1727
      %v1729 = vpop.f32.mrf.mxu0
      %1730 = vmatprep.mubr.bf16.mxu0 0
      %1731 = vmatmul.mubr.bf16.gmra.mxu0 %v1003
      %v1732 = vpop.f32.mrf.mxu0
      %v1733 = vadd.f32 %v1633, %v1732
      %v1734 = vpop.f32.mrf.mxu0
      %v1735 = vpop.f32.mrf.mxu0
      %v1736 = vadd.f32 %v1636, %v1735
      %v1737 = vpop.f32.mrf.mxu0
      %1738 = vdwg.mxu0
      %1755 = vrot.lane.b32.xlu0 %v1677, 4
      %v1756 = vpop.permute.xlu0 %1755
      %1757 = vrot.lane.b32.xlu0 %v1680, 4
      %v1758 = vpop.permute.xlu0 %1757
      %1759 = vrot.lane.b32.xlu0 %v1685, 4
      %v1760 = vpop.permute.xlu0 %1759
      %1761 = vrot.lane.b32.xlu0 %v1688, 4
      %v1762 = vpop.permute.xlu0 %1761
      %1763 = vrot.lane.b32.xlu0 %v1693, 4
      %v1764 = vpop.permute.xlu0 %1763
      %1765 = vrot.lane.b32.xlu0 %v1696, 4
      %v1766 = vpop.permute.xlu0 %1765
      %1767 = vrot.lane.b32.xlu0 %v1701, 4
      %v1768 = vpop.permute.xlu0 %1767
      %1769 = vrot.lane.b32.xlu0 %v1704, 4
      %v1770 = vpop.permute.xlu0 %1769
      %1771 = vrot.lane.b32.xlu0 %v1709, 4
      %v1772 = vpop.permute.xlu0 %1771
      %1773 = vrot.lane.b32.xlu0 %v1712, 4
      %v1774 = vpop.permute.xlu0 %1773
      %1775 = vrot.lane.b32.xlu0 %v1717, 4
      %v1776 = vpop.permute.xlu0 %1775
      %1777 = vrot.lane.b32.xlu0 %v1720, 4
      %v1778 = vpop.permute.xlu0 %1777
      %1779 = vrot.lane.b32.xlu0 %v1725, 4
      %v1780 = vpop.permute.xlu0 %1779
      %1781 = vrot.lane.b32.xlu0 %v1728, 4
      %v1782 = vpop.permute.xlu0 %1781
      %1783 = vrot.lane.b32.xlu0 %v1733, 4
      %v1784 = vpop.permute.xlu0 %1783
      %1785 = vrot.lane.b32.xlu0 %v1736, 4
      %v1786 = vpop.permute.xlu0 %1785
      %v1803 = vsel %vm529, %v1470, %v1756
      %v1804 = vsel %vm529, %v1473, %v1758
      %v1805 = vsel %vm529, %v1478, %v1760
      %v1806 = vsel %vm529, %v1481, %v1762
      %v1807 = vsel %vm529, %v1486, %v1764
      %v1808 = vsel %vm529, %v1489, %v1766
      %v1809 = vsel %vm529, %v1494, %v1768
      %v1810 = vsel %vm529, %v1497, %v1770
      %v1811 = vsel %vm529, %v1502, %v1772
      %v1812 = vsel %vm529, %v1505, %v1774
      %v1813 = vsel %vm529, %v1510, %v1776
      %v1814 = vsel %vm529, %v1513, %v1778
      %v1815 = vsel %vm529, %v1518, %v1780
      %v1816 = vsel %vm529, %v1521, %v1782
      %v1817 = vsel %vm529, %v1526, %v1784
      %v1818 = vsel %vm529, %v1529, %v1786
      %v1819 = vadd.f32 %v1803, %v1292
      %v1820 = vadd.f32 %v1804, %v1292
      %v1821 = vadd.f32 %v1805, %v1292
      %v1822 = vadd.f32 %v1806, %v1292
      %v1823 = vadd.f32 %v1807, %v1292
      %v1824 = vadd.f32 %v1808, %v1292
      %v1825 = vadd.f32 %v1809, %v1292
      %v1826 = vadd.f32 %v1810, %v1292
      %v1827 = vadd.f32 %v1811, %v1292
      %v1828 = vadd.f32 %v1812, %v1292
      %v1829 = vadd.f32 %v1813, %v1292
      %v1830 = vadd.f32 %v1814, %v1292
      %v1831 = vadd.f32 %v1815, %v1292
      %v1832 = vadd.f32 %v1816, %v1292
      %v1833 = vadd.f32 %v1817, %v1292
      %v1834 = vadd.f32 %v1818, %v1292
      %s1835 = scalar_lea.vmem %s318, 16
      %1836 = vst.msk [vmem:[%s1835] sm:$0xff] %vm757, %v1819
      %1837 = vst.msk [vmem:[%s1835 + $0x8] sm:$0xff] %vm757, %v1820
      %1838 = vst.msk [vmem:[%s1835 + $0x20] sm:$0xff] %vm757, %v1821
      %1839 = vst.msk [vmem:[%s1835 + $0x28] sm:$0xff] %vm757, %v1822
      %1840 = vst.msk [vmem:[%s1835 + $0x40] sm:$0xff] %vm757, %v1823
      %1841 = vst.msk [vmem:[%s1835 + $0x48] sm:$0xff] %vm757, %v1824
      %1842 = vst.msk [vmem:[%s1835 + $0x60] sm:$0xff] %vm757, %v1825
      %1843 = vst.msk [vmem:[%s1835 + $0x68] sm:$0xff] %vm757, %v1826
      %1844 = vst.msk [vmem:[%s1835 + $0x80] sm:$0xff] %vm757, %v1827
      %1845 = vst.msk [vmem:[%s1835 + $0x88] sm:$0xff] %vm757, %v1828
      %1846 = vst.msk [vmem:[%s1835 + $0xa0] sm:$0xff] %vm757, %v1829
      %1847 = vst.msk [vmem:[%s1835 + $0xa8] sm:$0xff] %vm757, %v1830
      %1848 = vst.msk [vmem:[%s1835 + $0xc0] sm:$0xff] %vm757, %v1831
      %1849 = vst.msk [vmem:[%s1835 + $0xc8] sm:$0xff] %vm757, %v1832
      %1850 = vst.msk [vmem:[%s1835 + $0xe0] sm:$0xff] %vm757, %v1833
      %1851 = vst.msk [vmem:[%s1835 + $0xe8] sm:$0xff] %vm757, %v1834
      %s1852 = smul.u32 8, %s20
      %p1853 = scmp.lt.s32.totalorder %s19, 1
      %s1854 = scalar_select %p1853, %s19, 1
      %p1855 = scmp.lt.s32.totalorder %s1852, 15
      %s1856 = scalar_select %p1855, %s1852, 15
      %s1857 = smul.addr %s1856, 4
      %s1858 = smul.addr %s1854, 64
      %s1859 = sadd.s32 %s1857, %s1858
      %s1860 = smul.addr %s1859, 8
      %s1861 = scalar_lea.vmem %s4, %s1860
      // Predicated region
      $region37: #{tpu_custom_call.1} parent=35 // pred_check
        %p1862 = pneg %p149
      $region38: #{tpu_custom_call.1} parent=35 // pred_check_branch
        %1864 = sbr.rel (%p1862) target = $region40
      $region39: #{tpu_custom_call.1} parent=35 // pred_region
        %s1865 = smul.u32 8, %s20
      $region40: #{tpu_custom_call.1} parent=35 // pred_fallthru
        _
    $region36: #{tpu_custom_call.1} parent=5 // pred_fallthru
      _
    %p1866 = scmp.le.s32.totalorder 2, %s10
    // Predicated region
    $region41: #{tpu_custom_call.1} parent=5 // pred_check
      %p1867 = pneg %p1866
    $region42: #{tpu_custom_call.1} parent=5 // pred_check_branch
      %1869 = sbr.rel (%p1867) target = $region44
    $region43: #{tpu_custom_call.1} parent=5 // pred_region
      %s1870 = ssub.s32 %s10, 2
      // Predicated region
      $region45: #{tpu_custom_call.1} parent=43 // pred_check
        %p1871 = pneg %p155
      $region46: #{tpu_custom_call.1} parent=43 // pred_check_branch
        %1873 = sbr.rel (%p1871) target = $region48
      $region47: #{tpu_custom_call.1} parent=43 // pred_region
        %s1874 = smul.u32 8, %s22
        %p1875 = scmp.lt.s32.totalorder %s21, 1
        %s1876 = scalar_select %p1875, %s21, 1
        %p1877 = scmp.lt.s32.totalorder %s1874, 15
        %s1878 = scalar_select %p1877, %s1874, 15
        %s1879 = smul.addr %s1878, 4
        %s1880 = smul.addr %s1876, 64
        %s1881 = sadd.s32 %s1879, %s1880
        %s1882 = smul.addr %s1881, 8
        %s1883 = scalar_lea.vmem %s4, %s1882
      $region48: #{tpu_custom_call.1} parent=43 // pred_fallthru
        _
    $region44: #{tpu_custom_call.1} parent=5 // pred_fallthru
      _
  $region6: #{tpu_custom_call.1} parent=0 // loop_footer
    %s14 = sadd.s32 1, %s10
  $region7: #{tpu_custom_call.1} parent=0 // loop_footer_branch
    %9 = sbr.rel target = $region3
  $region8: #{tpu_custom_call.1} parent=0 // loop_exit
    _

// kernel: tpu_custom_call.1
$region0: #{tpu_custom_call.1}
  #allocation0 [shape = 'u32[]', space=smem, size = 0x4, offset = 0x4, fixed_abs, tag = 'smem constant byte address 0x4 - core index']
  #allocation1 [shape = 'u32[144,128]{1,0:T(1,128)}', space=vmem, size = 0x12000, scoped, tag = 'internal scratch']
  %s0 = inlined_call_operand.vmem [shape: bf16[2,18,18,4], index: 0, kind: input, shape index: {}]
  %s1 = inlined_call_operand.vmem [shape: bf16[2,18,18,4], index: 1, kind: input, shape index: {}]
  %s2 = inlined_call_operand.vmem [shape: bf16[8,8,4], index: 2, kind: input, shape index: {}]
  %s3 = inlined_call_operand.vmem [shape: f32[1,8], index: 3, kind: input, shape index: {}]
  %s4 = inlined_call_operand.vmem [shape: f32[2,16,2,16,8], index: 4, kind: output, shape index: {}]
  %s5 = sld [smem:[#allocation0]]
  $region49: #{tpu_custom_call.1} parent=0
    _
  %s7 = ssub.s32 1, %s5
  %s8 = scalar_select 0, %s7, %s5
  loop: start=0, step=1, limit=6
  $region2: #{tpu_custom_call.1} parent=0 // loop_pre_header
    _
  $region3: #{tpu_custom_call.1} parent=0 // loop_header
    %s10 = sphi 0, %s14
    %p11 = scmp.ge.s32.totalorder %s10, 6
    %s17 = sphi 0, %s29
    %s18 = sphi 0, %s25
    %s19 = sphi 0, %s17
    %s20 = sphi 0, %s18
    %s21 = sphi 0, %s19
    %s22 = sphi 0, %s20
    %s34 = sphi 0, %s36
    %s37 = sphi 0, %s34
    %s38 = sphi 0, %s37
    %s54 = sphi 0, %s38
    %s66 = sphi 0, %s68
    %s69 = sphi 0, %s66
    %s70 = sphi 0, %s69
    %s86 = sphi 0, %s70
    %s90 = sphi 0, %s90
    %s92 = sphi 0, %s90
    %s93 = sphi 0, %s92
    %s107 = sphi 0, %s93
    %s111 = sphi 0, %s111
    %s113 = sphi 0, %s111
    %s114 = sphi 0, %s113
    %s128 = sphi 0, %s114
    %s136 = sphi 0, %s138
    %s139 = sphi 0, %s136
    %s140 = sphi 0, %s139
    %s156 = sphi 0, %s140
  $region4: #{tpu_custom_call.1} parent=0 // loop_header_branch
    %13 = sbr.rel (%p11) target = $region8
  $region5: #{tpu_custom_call.1} parent=0 // loop_body
    %s15 = ssub.s32 %s10, 1
    %s16 = ssub.s32 %s10, 2
    %s23 = sadd.s32 1, %s18
    %p24 = scmp.ge.s32.totalorder %s23, 2
    %s25 = scalar_select %p24, 0, %s23
    %s26 = sadd.s32 1, %s17
    %s27 = scalar_select %p24, %s26, %s17
    %p28 = scmp.ge.s32.totalorder %s27, 2
    %s29 = scalar_select %p28, 0, %s27
    %s30 = ssub.s32 %s17, %s29
    %s31 = ssub.s32 %s18, %s25
    %s32 = sor.u32 %s30, %s31
    %p33 = scmp.eq.s32.totalorder %s32, 0
    %s35 = sadd.s32 %s34, 1
    %s36 = scalar_select %p33, %s34, %s35
    %p39 = pneg %p33
    %p40 = scmp.eq.s32.totalorder %s10, 3
    %p41 = por %p39, %p40
    %p42 = scmp.ne.s32.totalorder %s34, %s37
    %p43 = scmp.eq.s32.totalorder %s10, 0
    %p44 = por %p42, %p43
    %p45 = scmp.ne.s32.totalorder %s34, %s37
    %p46 = scmp.eq.s32.totalorder %s15, 3
    %p47 = por %p45, %p46
    %p48 = scmp.ne.s32.totalorder %s37, %s38
    %p49 = scmp.eq.s32.totalorder %s15, 0
    %p50 = por %p48, %p49
    %p51 = scmp.ne.s32.totalorder %s37, %s38
    %p52 = scmp.eq.s32.totalorder %s16, 3
    %p53 = por %p51, %p52
    %p55 = scmp.ne.s32.totalorder %s38, %s54
    %p56 = scmp.eq.s32.totalorder %s16, 0
    %p57 = por %p55, %p56
    %s58 = sadd.s32 %s18, 1
    %s59 = smul.u32 %s58, 4
    %s60 = sadd.s32 %s25, 1
    %s61 = smul.u32 %s60, 4
    %s62 = ssub.s32 %s17, %s29
    %s63 = ssub.s32 %s59, %s61
    %s64 = sor.u32 %s62, %s63
    %p65 = scmp.eq.s32.totalorder %s64, 0
    %s67 = sadd.s32 %s66, 1
    %s68 = scalar_select %p65, %s66, %s67
    %p71 = pneg %p65
    %p72 = scmp.eq.s32.totalorder %s10, 3
    %p73 = por %p71, %p72
    %p74 = scmp.ne.s32.totalorder %s66, %s69
    %p75 = scmp.eq.s32.totalorder %s10, 0
    %p76 = por %p74, %p75
    %p77 = scmp.ne.s32.totalorder %s66, %s69
    %p78 = scmp.eq.s32.totalorder %s15, 3
    %p79 = por %p77, %p78
    %p80 = scmp.ne.s32.totalorder %s69, %s70
    %p81 = scmp.eq.s32.totalorder %s15, 0
    %p82 = por %p80, %p81
    %p83 = scmp.ne.s32.totalorder %s69, %s70
    %p84 = scmp.eq.s32.totalorder %s16, 3
    %p85 = por %p83, %p84
    %p87 = scmp.ne.s32.totalorder %s70, %s86
    %p88 = scmp.eq.s32.totalorder %s16, 0
    %p89 = por %p87, %p88
    %s91 = sadd.s32 %s90, 1
    %p94 = scmp.eq.s32.totalorder %s10, 3
    %p95 = scmp.ne.s32.totalorder %s90, %s92
    %p96 = scmp.eq.s32.totalorder %s10, 0
    %p97 = por %p95, %p96
    %p98 = scmp.ne.s32.totalorder %s90, %s92
    %p99 = scmp.eq.s32.totalorder %s15, 3
    %p100 = por %p98, %p99
    %p101 = scmp.ne.s32.totalorder %s92, %s93
    %p102 = scmp.eq.s32.totalorder %s15, 0
    %p103 = por %p101, %p102
    %p104 = scmp.ne.s32.totalorder %s92, %s93
    %p105 = scmp.eq.s32.totalorder %s16, 3
    %p106 = por %p104, %p105
    %p108 = scmp.ne.s32.totalorder %s93, %s107
    %p109 = scmp.eq.s32.totalorder %s16, 0
    %p110 = por %p108, %p109
    %s112 = sadd.s32 %s111, 1
    %p115 = scmp.eq.s32.totalorder %s10, 3
    %p116 = scmp.ne.s32.totalorder %s111, %s113
    %p117 = scmp.eq.s32.totalorder %s10, 0
    %p118 = por %p116, %p117
    %p119 = scmp.ne.s32.totalorder %s111, %s113
    %p120 = scmp.eq.s32.totalorder %s15, 3
    %p121 = por %p119, %p120
    %p122 = scmp.ne.s32.totalorder %s113, %s114
    %p123 = scmp.eq.s32.totalorder %s15, 0
    %p124 = por %p122, %p123
    %p125 = scmp.ne.s32.totalorder %s113, %s114
    %p126 = scmp.eq.s32.totalorder %s16, 3
    %p127 = por %p125, %p126
    %p129 = scmp.ne.s32.totalorder %s114, %s128
    %p130 = scmp.eq.s32.totalorder %s16, 0
    %p131 = por %p129, %p130
    %s132 = ssub.s32 %s17, %s29
    %s133 = ssub.s32 %s18, %s25
    %s134 = sor.u32 %s132, %s133
    %p135 = scmp.eq.s32.totalorder %s134, 0
    %s137 = sadd.s32 %s136, 1
    %s138 = scalar_select %p135, %s136, %s137
    %p141 = pneg %p135
    %p142 = scmp.eq.s32.totalorder %s10, 3
    %p143 = por %p141, %p142
    %p144 = scmp.ne.s32.totalorder %s136, %s139
    %p145 = scmp.eq.s32.totalorder %s10, 0
    %p146 = por %p144, %p145
    %p147 = scmp.ne.s32.totalorder %s136, %s139
    %p148 = scmp.eq.s32.totalorder %s15, 3
    %p149 = por %p147, %p148
    %p150 = scmp.ne.s32.totalorder %s139, %s140
    %p151 = scmp.eq.s32.totalorder %s15, 0
    %p152 = por %p150, %p151
    %p153 = scmp.ne.s32.totalorder %s139, %s140
    %p154 = scmp.eq.s32.totalorder %s16, 3
    %p155 = por %p153, %p154
    %p157 = scmp.ne.s32.totalorder %s140, %s156
    %p158 = scmp.eq.s32.totalorder %s16, 0
    %p159 = por %p157, %p158
    %p160 = scmp.le.s32.totalorder 1, %s10
    %p161 = scmp.lt.s32.totalorder %s10, 5
    %p162 = pnand %p160, %p161
    %p163 = pneg %p162
    // Predicated region
    $region9: #{tpu_custom_call.1} parent=5 // pred_check
      _
    $region10: #{tpu_custom_call.1} parent=5 // pred_check_branch
      %165 = sbr.rel (%p162) target = $region12
    $region11: #{tpu_custom_call.1} parent=5 // pred_region
      %s166 = ssub.s32 %s10, 1
      // Predicated region
      $region13: #{tpu_custom_call.1} parent=11 // pred_check
        %p167 = pneg %p103
      $region14: #{tpu_custom_call.1} parent=11 // pred_check_branch
        %169 = sbr.rel (%p167) target = $region16
      $region15: #{tpu_custom_call.1} parent=11 // pred_region
        _
      $region16: #{tpu_custom_call.1} parent=11 // pred_fallthru
        _
      // Predicated region
      $region17: #{tpu_custom_call.1} parent=11 // pred_check
        %p170 = pneg %p124
      $region18: #{tpu_custom_call.1} parent=11 // pred_check_branch
        %172 = sbr.rel (%p170) target = $region20
      $region19: #{tpu_custom_call.1} parent=11 // pred_region
        _
      $region20: #{tpu_custom_call.1} parent=11 // pred_fallthru
        _
    $region12: #{tpu_custom_call.1} parent=5 // pred_fallthru
      _
    %p173 = scmp.lt.s32.totalorder %s10, 4
    // Predicated region
    $region21: #{tpu_custom_call.1} parent=5 // pred_check
      %p174 = pneg %p173
    $region22: #{tpu_custom_call.1} parent=5 // pred_check_branch
      %176 = sbr.rel (%p174) target = $region24
    $region23: #{tpu_custom_call.1} parent=5 // pred_region
      // Predicated region
      $region25: #{tpu_custom_call.1} parent=23 // pred_check
        %p177 = pneg %p44
      $region26: #{tpu_custom_call.1} parent=23 // pred_check_branch
        %179 = sbr.rel (%p177) target = $region28
      $region27: #{tpu_custom_call.1} parent=23 // pred_region
        %s180 = smul.u32 8, %s18
        %s181 = ssub.s32 18, %s180
        %p182 = scmp.lt.s32.totalorder %s181, 8
        %s183 = scalar_select %p182, %s181, 8
        %s184 = smul.u32 64, %s183
        %s185 = smul.u32 %s184, 3
        %p186 = scmp.lt.s32.totalorder %s17, 1
        %s187 = scalar_select %p186, %s17, 1
        %p188 = scmp.lt.s32.totalorder %s180, 17
        %s189 = scalar_select %p188, %s180, 17
        %s190 = smul.addr %s189, 3
        %s191 = smul.addr %s187, 54
        %s192 = sadd.s32 %s190, %s191
        %s193 = smul.addr %s192, 4
        %s194 = scalar_lea.vmem %s0, %s193
        %s195 = smul.u32 8, %s18
        %s196 = ssub.s32 18, %s195
        %p197 = scmp.lt.s32.totalorder %s196, 8
        %s198 = scalar_select %p197, %s196, 8
        %s199 = smul.u32 64, %s198
        %s200 = smul.u32 %s199, 3
      $region28: #{tpu_custom_call.1} parent=23 // pred_fallthru
        _
      // Predicated region
      $region29: #{tpu_custom_call.1} parent=23 // pred_check
        %p201 = pneg %p76
      $region30: #{tpu_custom_call.1} parent=23 // pred_check_branch
        %203 = sbr.rel (%p201) target = $region32
      $region31: #{tpu_custom_call.1} parent=23 // pred_region
        %s204 = sadd.s32 %s18, 1
        %s205 = smul.u32 %s204, 4
        %s206 = smul.u32 2, %s205
        %p207 = scmp.lt.s32.totalorder %s17, 1
        %s208 = scalar_select %p207, %s17, 1
        %p209 = scmp.lt.s32.totalorder %s206, 17
        %s210 = scalar_select %p209, %s206, 17
        %s211 = smul.addr %s210, 3
        %s212 = smul.addr %s208, 54
        %s213 = sadd.s32 %s211, %s212
        %s214 = smul.addr %s213, 4
        %s215 = scalar_lea.vmem %s1, %s214
        %s216 = sadd.s32 %s18, 1
        %s217 = smul.u32 %s216, 4
        %s218 = smul.u32 2, %s217
      $region32: #{tpu_custom_call.1} parent=23 // pred_fallthru
        _
    $region24: #{tpu_custom_call.1} parent=5 // pred_fallthru
      _
    %p219 = scmp.le.s32.totalorder 1, %s10
    %p220 = scmp.lt.s32.totalorder %s10, 5
    %p221 = pnand %p219, %p220
    %p222 = pneg %p221
    // Predicated region
    $region33: #{tpu_custom_call.1} parent=5 // pred_check
      _
    $region34: #{tpu_custom_call.1} parent=5 // pred_check_branch
      %224 = sbr.rel (%p221) target = $region36
    $region35: #{tpu_custom_call.1} parent=5 // pred_region
      %s225 = ssub.s32 %s10, 1
      %s226 = smul.u32 8, %s20
      %s227 = ssub.s32 18, %s226
      %p228 = scmp.lt.s32.totalorder %s227, 8
      %s229 = scalar_select %p228, %s227, 8
      %s230 = smul.u32 64, %s229
      %s231 = smul.u32 %s230, 3
      %p232 = scmp.lt.s32.totalorder %s19, 1
      %s233 = scalar_select %p232, %s19, 1
      %p234 = scmp.lt.s32.totalorder %s226, 17
      %s235 = scalar_select %p234, %s226, 17
      %s236 = smul.addr %s235, 3
      %s237 = smul.addr %s233, 54
      %s238 = sadd.s32 %s236, %s237
      %s239 = smul.addr %s238, 4
      %s240 = scalar_lea.vmem %s0, %s239
      %p241 = pneg %p50
      %p242 = pneg %p47
      %s243 = sadd.s32 %s20, 1
      %s244 = smul.u32 %s243, 4
      %s245 = smul.u32 2, %s244
      %p246 = scmp.lt.s32.totalorder %s19, 1
      %s247 = scalar_select %p246, %s19, 1
      %p248 = scmp.lt.s32.totalorder %s245, 17
      %s249 = scalar_select %p248, %s245, 17
      %s250 = smul.addr %s249, 3
      %s251 = smul.addr %s247, 54
      %s252 = sadd.s32 %s250, %s251
      %s253 = smul.addr %s252, 4
      %s254 = scalar_lea.vmem %s1, %s253
      %p255 = pneg %p82
      %p256 = pneg %p79
      %p257 = pneg %p103
      %p258 = pneg %p100
      %p259 = pneg %p124
      %p260 = pneg %p121
      %p261 = pneg %p152
      %p262 = pneg %p149
      %s263 = smul.u32 8, %s20
      %p264 = scmp.lt.s32.totalorder %s19, 1
      %s265 = scalar_select %p264, %s19, 1
      %p266 = scmp.lt.s32.totalorder %s263, 15
      %s267 = scalar_select %p266, %s263, 15
      %s268 = smul.addr %s267, 4
      %s269 = smul.addr %s265, 64
      %s270 = sadd.s32 %s268, %s269
      %s271 = smul.addr %s270, 8
      %s272 = scalar_lea.vmem %s4, %s271
      %s273 = smul.u32 8, %s20
      %s274 = ssub.s32 18, %s273
      %p275 = scmp.lt.s32.totalorder %s274, 8
      %s276 = scalar_select %p275, %s274, 8
      %s277 = smul.u32 64, %s276
      %s278 = smul.u32 %s277, 3
      %p279 = scmp.lt.s32.totalorder %s19, 1
      %s280 = scalar_select %p279, %s19, 1
      %p281 = scmp.lt.s32.totalorder %s273, 17
      %s282 = scalar_select %p281, %s273, 17
      %s283 = smul.addr %s282, 3
      %s284 = smul.addr %s280, 54
      %s285 = sadd.s32 %s283, %s284
      %s286 = smul.addr %s285, 4
      %s287 = scalar_lea.vmem %s0, %s286
      %s288 = smul.u32 8, %s20
      %s289 = ssub.s32 18, %s288
      %p290 = scmp.lt.s32.totalorder %s289, 8
      %s291 = scalar_select %p290, %s289, 8
      %s292 = smul.u32 64, %s291
      %s293 = smul.u32 %s292, 3
      %s294 = sadd.s32 %s20, 1
      %s295 = smul.u32 %s294, 4
      %s296 = smul.u32 2, %s295
      %p297 = scmp.lt.s32.totalorder %s19, 1
      %s298 = scalar_select %p297, %s19, 1
      %p299 = scmp.lt.s32.totalorder %s296, 17
      %s300 = scalar_select %p299, %s296, 17
      %s301 = smul.addr %s300, 3
      %s302 = smul.addr %s298, 54
      %s303 = sadd.s32 %s301, %s302
      %s304 = smul.addr %s303, 4
      %s305 = scalar_lea.vmem %s1, %s304
      %s306 = sadd.s32 %s20, 1
      %s307 = smul.u32 %s306, 4
      %s308 = smul.u32 2, %s307
      %s309 = smul.u32 8, %s20
      %p310 = scmp.lt.s32.totalorder %s19, 1
      %s311 = scalar_select %p310, %s19, 1
      %p312 = scmp.lt.s32.totalorder %s309, 15
      %s313 = scalar_select %p312, %s309, 15
      %s314 = smul.addr %s313, 4
      %s315 = smul.addr %s311, 64
      %s316 = sadd.s32 %s314, %s315
      %s317 = smul.addr %s316, 8
      %s318 = scalar_lea.vmem %s4, %s317
      %s319 = smul.u32 8, %s20
      %v321 = vld [vmem:[%s287] sm:$0xf]
      %v322 = vld [vmem:[%s287 + $0x4] sm:$0xf]
      %v323 = vld [vmem:[%s287 + $0x8] sm:$0x1]
      %v324 = vld [vmem:[%s287 + $0xc] sm:$0xf]
      %v325 = vld [vmem:[%s287 + $0x10] sm:$0xf]
      %v326 = vld [vmem:[%s287 + $0x14] sm:$0x1]
      %v327 = vld [vmem:[%s287 + $0x18] sm:$0xf]
      %v328 = vld [vmem:[%s287 + $0x1c] sm:$0xf]
      %v329 = vld [vmem:[%s287 + $0x20] sm:$0x1]
      %v330 = vld [vmem:[%s287 + $0x24] sm:$0xf]
      %v331 = vld [vmem:[%s287 + $0x28] sm:$0xf]
      %v332 = vld [vmem:[%s287 + $0x2c] sm:$0x1]
      %v333 = vld [vmem:[%s287 + $0x30] sm:$0xf]
      %v334 = vld [vmem:[%s287 + $0x34] sm:$0xf]
      %v335 = vld [vmem:[%s287 + $0x38] sm:$0x1]
      %v336 = vld [vmem:[%s287 + $0x3c] sm:$0xf]
      %v337 = vld [vmem:[%s287 + $0x40] sm:$0xf]
      %v338 = vld [vmem:[%s287 + $0x44] sm:$0x1]
      %v339 = vld [vmem:[%s287 + $0x48] sm:$0xf]
      %v340 = vld [vmem:[%s287 + $0x4c] sm:$0xf]
      %v341 = vld [vmem:[%s287 + $0x50] sm:$0x1]
      %v342 = vld [vmem:[%s287 + $0x54] sm:$0xf]
      %v343 = vld [vmem:[%s287 + $0x58] sm:$0xf]
      %v344 = vld [vmem:[%s287 + $0x5c] sm:$0x1]
      %v345 = vld [vmem:[%s305] sm:$0xf]
      %v346 = vld [vmem:[%s305 + $0x4] sm:$0xf]
      %v347 = vld [vmem:[%s305 + $0x8] sm:$0x1]
      %v348 = vld [vmem:[%s305 + $0xc] sm:$0xf]
      %v349 = vld [vmem:[%s305 + $0x10] sm:$0xf]
      %v350 = vld [vmem:[%s305 + $0x14] sm:$0x1]
      %v351 = vld [vmem:[%s3] sm:$0x1]
      %v368 = vunpack.c.l.b16 %v321
      %v369 = vunpack.c.l.b16 %v322
      %v370 = vunpack.c.l.b16 %v324
      %v371 = vunpack.c.l.b16 %v325
      %v372 = vunpack.c.l.b16 %v327
      %v373 = vunpack.c.l.b16 %v328
      %v374 = vunpack.c.l.b16 %v330
      %v375 = vunpack.c.l.b16 %v331
      %v376 = vunpack.c.l.b16 %v333
      %v377 = vunpack.c.l.b16 %v334
      %v378 = vunpack.c.l.b16 %v336
      %v379 = vunpack.c.l.b16 %v337
      %v380 = vunpack.c.l.b16 %v339
      %v381 = vunpack.c.l.b16 %v340
      %v382 = vunpack.c.l.b16 %v342
      %v383 = vunpack.c.l.b16 %v343
      %v384 = vpack.c.b16 %v369, %v368
      %v385 = vpack.c.b16 %v371, %v370
      %v386 = vpack.c.b16 %v373, %v372
      %v387 = vpack.c.b16 %v375, %v374
      %v388 = vpack.c.b16 %v377, %v376
      %v389 = vpack.c.b16 %v379, %v378
      %v390 = vpack.c.b16 %v381, %v380
      %v391 = vpack.c.b16 %v383, %v382
      %v400 = vunpack.c.l.b16 %v323
      %v401 = vunpack.c.l.b16 %v326
      %v402 = vunpack.c.l.b16 %v329
      %v403 = vunpack.c.l.b16 %v332
      %v404 = vunpack.c.l.b16 %v335
      %v405 = vunpack.c.l.b16 %v338
      %v406 = vunpack.c.l.b16 %v341
      %v407 = vunpack.c.l.b16 %v344
      %v408 = vpack.c.b16 %v400, %v400
      %v409 = vpack.c.b16 %v401, %v401
      %v410 = vpack.c.b16 %v402, %v402
      %v411 = vpack.c.b16 %v403, %v403
      %v412 = vpack.c.b16 %v404, %v404
      %v413 = vpack.c.b16 %v405, %v405
      %v414 = vpack.c.b16 %v406, %v406
      %v415 = vpack.c.b16 %v407, %v407
      %vm416 = vsmask.f32 7424
      %v418 = vshrl.u32 %v384, 16
      %v420 = vshll.u32 %v384, 16
      %v422 = vrot.slane %v420, 1
      %v423 = vor.u32 %v418, %v422
      %v425 = vshll.u32 %v408, 16
      %v427 = vrot.slane %v425, 1
      %v428 = vsel %vm416, %v423, %v427
      %v430 = vshrl.u32 %v385, 16
      %v432 = vshll.u32 %v385, 16
      %v434 = vrot.slane %v432, 1
      %v435 = vor.u32 %v430, %v434
      %v437 = vshll.u32 %v409, 16
      %v439 = vrot.slane %v437, 1
      %v440 = vsel %vm416, %v435, %v439
      %v442 = vshrl.u32 %v386, 16
      %v444 = vshll.u32 %v386, 16
      %v446 = vrot.slane %v444, 1
      %v447 = vor.u32 %v442, %v446
      %v449 = vshll.u32 %v410, 16
      %v451 = vrot.slane %v449, 1
      %v452 = vsel %vm416, %v447, %v451
      %v454 = vshrl.u32 %v387, 16
      %v456 = vshll.u32 %v387, 16
      %v458 = vrot.slane %v456, 1
      %v459 = vor.u32 %v454, %v458
      %v461 = vshll.u32 %v411, 16
      %v463 = vrot.slane %v461, 1
      %v464 = vsel %vm416, %v459, %v463
      %v466 = vshrl.u32 %v388, 16
      %v468 = vshll.u32 %v388, 16
      %v470 = vrot.slane %v468, 1
      %v471 = vor.u32 %v466, %v470
      %v473 = vshll.u32 %v412, 16
      %v475 = vrot.slane %v473, 1
      %v476 = vsel %vm416, %v471, %v475
      %v478 = vshrl.u32 %v389, 16
      %v480 = vshll.u32 %v389, 16
      %v482 = vrot.slane %v480, 1
      %v483 = vor.u32 %v478, %v482
      %v485 = vshll.u32 %v413, 16
      %v487 = vrot.slane %v485, 1
      %v488 = vsel %vm416, %v483, %v487
      %v490 = vshrl.u32 %v390, 16
      %v492 = vshll.u32 %v390, 16
      %v494 = vrot.slane %v492, 1
      %v495 = vor.u32 %v490, %v494
      %v497 = vshll.u32 %v414, 16
      %v499 = vrot.slane %v497, 1
      %v500 = vsel %vm416, %v495, %v499
      %v502 = vshrl.u32 %v391, 16
      %v504 = vshll.u32 %v391, 16
      %v506 = vrot.slane %v504, 1
      %v507 = vor.u32 %v502, %v506
      %v509 = vshll.u32 %v415, 16
      %v511 = vrot.slane %v509, 1
      %v512 = vsel %vm416, %v507, %v511
      %513 = vrot.lane.b32.xlu0 %v428, 4
      %v514 = vpop.permute.xlu0 %513
      %515 = vrot.lane.b32.xlu0 %v440, 4
      %v516 = vpop.permute.xlu0 %515
      %517 = vrot.lane.b32.xlu0 %v452, 4
      %v518 = vpop.permute.xlu0 %517
      %519 = vrot.lane.b32.xlu0 %v464, 4
      %v520 = vpop.permute.xlu0 %519
      %521 = vrot.lane.b32.xlu0 %v476, 4
      %v522 = vpop.permute.xlu0 %521
      %523 = vrot.lane.b32.xlu0 %v488, 4
      %v524 = vpop.permute.xlu0 %523
      %525 = vrot.lane.b32.xlu0 %v500, 4
      %v526 = vpop.permute.xlu0 %525
      %527 = vrot.lane.b32.xlu0 %v512, 4
      %v528 = vpop.permute.xlu0 %527
      %vm529 = vcmask 31744
      %v531 = vsel %vm529, %v384, %v514
      %v533 = vsel %vm529, %v385, %v516
      %v535 = vsel %vm529, %v386, %v518
      %v537 = vsel %vm529, %v387, %v520
      %v539 = vsel %vm529, %v388, %v522
      %v541 = vsel %vm529, %v389, %v524
      %v543 = vsel %vm529, %v390, %v526
      %v545 = vsel %vm529, %v391, %v528
      %v550 = vunpack.c.l.b16 %v345
      %v551 = vunpack.c.l.b16 %v346
      %v552 = vunpack.c.l.b16 %v348
      %v553 = vunpack.c.l.b16 %v349
      %v554 = vpack.c.b16 %v551, %v550
      %v555 = vpack.c.b16 %v553, %v552
      %v558 = vunpack.c.l.b16 %v347
      %v559 = vunpack.c.l.b16 %v350
      %v560 = vpack.c.b16 %v558, %v558
      %v561 = vpack.c.b16 %v559, %v559
      %v563 = vshrl.u32 %v554, 16
      %v565 = vshll.u32 %v554, 16
      %v567 = vrot.slane %v565, 1
      %v568 = vor.u32 %v563, %v567
      %v570 = vshll.u32 %v560, 16
      %v572 = vrot.slane %v570, 1
      %v573 = vsel %vm416, %v568, %v572
      %v575 = vshrl.u32 %v555, 16
      %v577 = vshll.u32 %v555, 16
      %v579 = vrot.slane %v577, 1
      %v580 = vor.u32 %v575, %v579
      %v582 = vshll.u32 %v561, 16
      %v584 = vrot.slane %v582, 1
      %v585 = vsel %vm416, %v580, %v584
      %586 = vrot.lane.b32.xlu0 %v573, 4
      %v587 = vpop.permute.xlu0 %586
      %588 = vrot.lane.b32.xlu0 %v585, 4
      %v589 = vpop.permute.xlu0 %588
      %v591 = vsel %vm529, %v554, %v587
      %v593 = vsel %vm529, %v555, %v589
      %v594 = vshrl.u32 %v408, 16
      %v596 = vshrl.u32 %v409, 16
      %v598 = vshrl.u32 %v410, 16
      %v600 = vshrl.u32 %v411, 16
      %v602 = vshrl.u32 %v412, 16
      %v604 = vshrl.u32 %v413, 16
      %v606 = vshrl.u32 %v414, 16
      %v608 = vshrl.u32 %v415, 16
      %610 = vrot.lane.b32.xlu0 %v594, 4
      %v611 = vpop.permute.xlu0 %610
      %612 = vrot.lane.b32.xlu0 %v596, 4
      %v613 = vpop.permute.xlu0 %612
      %614 = vrot.lane.b32.xlu0 %v598, 4
      %v615 = vpop.permute.xlu0 %614
      %616 = vrot.lane.b32.xlu0 %v600, 4
      %v617 = vpop.permute.xlu0 %616
      %618 = vrot.lane.b32.xlu0 %v602, 4
      %v619 = vpop.permute.xlu0 %618
      %620 = vrot.lane.b32.xlu0 %v604, 4
      %v621 = vpop.permute.xlu0 %620
      %622 = vrot.lane.b32.xlu0 %v606, 4
      %v623 = vpop.permute.xlu0 %622
      %624 = vrot.lane.b32.xlu0 %v608, 4
      %v625 = vpop.permute.xlu0 %624
      %v627 = vsel %vm529, %v408, %v611
      %v629 = vsel %vm529, %v409, %v613
      %v631 = vsel %vm529, %v410, %v615
      %v633 = vsel %vm529, %v411, %v617
      %v635 = vsel %vm529, %v412, %v619
      %v637 = vsel %vm529, %v413, %v621
      %v639 = vsel %vm529, %v414, %v623
      %v641 = vsel %vm529, %v415, %v625
      %v642 = vshrl.u32 %v560, 16
      %v644 = vshrl.u32 %v561, 16
      %646 = vrot.lane.b32.xlu0 %v642, 4
      %v647 = vpop.permute.xlu0 %646
      %648 = vrot.lane.b32.xlu0 %v644, 4
      %v649 = vpop.permute.xlu0 %648
      %v651 = vsel %vm529, %v560, %v647
      %v653 = vsel %vm529, %v561, %v649
      %v654 = vshrl.u32 %v531, 16
      %v656 = vshll.u32 %v531, 16
      %v658 = vrot.slane %v656, 1
      %v659 = vor.u32 %v654, %v658
      %v660 = vshll.u32 %v627, 16
      %v662 = vrot.slane %v660, 1
      %v663 = vsel %vm416, %v659, %v662
      %v664 = vshrl.u32 %v533, 16
      %v666 = vshll.u32 %v533, 16
      %v668 = vrot.slane %v666, 1
      %v669 = vor.u32 %v664, %v668
      %v670 = vshll.u32 %v629, 16
      %v672 = vrot.slane %v670, 1
      %v673 = vsel %vm416, %v669, %v672
      %v674 = vshrl.u32 %v535, 16
      %v676 = vshll.u32 %v535, 16
      %v678 = vrot.slane %v676, 1
      %v679 = vor.u32 %v674, %v678
      %v680 = vshll.u32 %v631, 16
      %v682 = vrot.slane %v680, 1
      %v683 = vsel %vm416, %v679, %v682
      %v684 = vshrl.u32 %v537, 16
      %v686 = vshll.u32 %v537, 16
      %v688 = vrot.slane %v686, 1
      %v689 = vor.u32 %v684, %v688
      %v690 = vshll.u32 %v633, 16
      %v692 = vrot.slane %v690, 1
      %v693 = vsel %vm416, %v689, %v692
      %v694 = vshrl.u32 %v539, 16
      %v696 = vshll.u32 %v539, 16
      %v698 = vrot.slane %v696, 1
      %v699 = vor.u32 %v694, %v698
      %v700 = vshll.u32 %v635, 16
      %v702 = vrot.slane %v700, 1
      %v703 = vsel %vm416, %v699, %v702
      %v704 = vshrl.u32 %v541, 16
      %v706 = vshll.u32 %v541, 16
      %v708 = vrot.slane %v706, 1
      %v709 = vor.u32 %v704, %v708
      %v710 = vshll.u32 %v637, 16
      %v712 = vrot.slane %v710, 1
      %v713 = vsel %vm416, %v709, %v712
      %v714 = vshrl.u32 %v543, 16
      %v716 = vshll.u32 %v543, 16
      %v718 = vrot.slane %v716, 1
      %v719 = vor.u32 %v714, %v718
      %v720 = vshll.u32 %v639, 16
      %v722 = vrot.slane %v720, 1
      %v723 = vsel %vm416, %v719, %v722
      %v724 = vshrl.u32 %v545, 16
      %v726 = vshll.u32 %v545, 16
      %v728 = vrot.slane %v726, 1
      %v729 = vor.u32 %v724, %v728
      %v730 = vshll.u32 %v641, 16
      %v732 = vrot.slane %v730, 1
      %v733 = vsel %vm416, %v729, %v732
      %v734 = vshrl.u32 %v591, 16
      %v736 = vshll.u32 %v591, 16
      %v738 = vrot.slane %v736, 1
      %v739 = vor.u32 %v734, %v738
      %v740 = vshll.u32 %v651, 16
      %v742 = vrot.slane %v740, 1
      %v743 = vsel %vm416, %v739, %v742
      %v744 = vshrl.u32 %v593, 16
      %v746 = vshll.u32 %v593, 16
      %v748 = vrot.slane %v746, 1
      %v749 = vor.u32 %v744, %v748
      %v750 = vshll.u32 %v653, 16
      %v752 = vrot.slane %v750, 1
      %v753 = vsel %vm416, %v749, %v752
      %v754 = vld [vmem:[%s2] sm:$0xf]
      %s755 = scalar_lea.vmem %s2, 4
      %v756 = vld [vmem:[%s755] sm:$0xf]
      %vm757 = vcmask 64512
      %v758 = vsel %vm757, %v533, 0
      %v760 = vsel %vm757, %v535, 0
      %v762 = vsel %vm757, %v537, 0
      %v764 = vsel %vm757, %v539, 0
      %v766 = vsel %vm757, %v541, 0
      %v768 = vsel %vm757, %v543, 0
      %v770 = vsel %vm757, %v545, 0
      %v772 = vsel %vm757, %v591, 0
      %vm774 = vcmask 1043456
      %v776 = vsel %vm774, %v756, 0
      %778 = vmatprep.subr.bf16.mxu0 0
      %779 = vmatpush1.bf16.msra.mxu0 0
      %780 = vmatprep.subr.bf16.mxu0 0
      %781 = vmatpush1.bf16.msra.mxu0 0
      %782 = vmatprep.subr.bf16.mxu0 0
      %783 = vmatpush1.bf16.msra.mxu0 0
      %784 = vmatprep.subr.bf16.mxu0 0
      %785 = vmatpush1.bf16.msra.mxu0 0
      %786 = vmatprep.subr.bf16.mxu0 0
      %787 = vmatpush1.bf16.msra.mxu0 0
      %788 = vmatprep.subr.bf16.mxu0 0
      %789 = vmatpush1.bf16.msra.mxu0 0
      %790 = vmatprep.subr.bf16.mxu0 0
      %791 = vmatpush1.bf16.msra.mxu0 0
      %792 = vmatprep.subr.bf16.mxu0 0
      %793 = vmatpush1.bf16.msra.mxu0 %v776
      %794 = vmatprep.subr.bf16.mxu0 0
      %795 = vmatpush2.bf16.msra.mxu0 0
      %796 = vmatprep.subr.bf16.mxu0 0
      %797 = vmatpush2.bf16.msra.mxu0 0
      %798 = vmatprep.subr.bf16.mxu0 0
      %799 = vmatpush2.bf16.msra.mxu0 0
      %800 = vmatprep.subr.bf16.mxu0 0
      %801 = vmatpush2.bf16.msra.mxu0 0
      %802 = vmatprep.subr.bf16.mxu0 0
      %803 = vmatpush2.bf16.msra.mxu0 0
      %804 = vmatprep.subr.bf16.mxu0 0
      %805 = vmatpush2.bf16.msra.mxu0 0
      %806 = vmatprep.subr.bf16.mxu0 0
      %807 = vmatpush2.bf16.msra.mxu0 0
      %808 = vmatprep.subr.bf16.mxu0 0
      %809 = vmatpush2.bf16.msra.mxu0 0
      %810 = vmatprep.mubr.bf16.mxu0 0
      %811 = vmatmul.mubr.bf16.gmra.mxu0 %v758
      %v812 = vpop.f32.mrf.mxu0
      %v813 = vadd.f32 0.0, %v812
      %v814 = vpop.f32.mrf.mxu0
      %v815 = vpop.f32.mrf.mxu0
      %v816 = vadd.f32 0.0, %v815
      %v817 = vpop.f32.mrf.mxu0
      %818 = vmatprep.mubr.bf16.mxu0 0
      %819 = vmatmul.mubr.bf16.gmra.mxu0 %v760
      %v820 = vpop.f32.mrf.mxu0
      %v821 = vadd.f32 0.0, %v820
      %v822 = vpop.f32.mrf.mxu0
      %v823 = vpop.f32.mrf.mxu0
      %v824 = vadd.f32 0.0, %v823
      %v825 = vpop.f32.mrf.mxu0
      %826 = vmatprep.mubr.bf16.mxu0 0
      %827 = vmatmul.mubr.bf16.gmra.mxu0 %v762
      %v828 = vpop.f32.mrf.mxu0
      %v829 = vadd.f32 0.0, %v828
      %v830 = vpop.f32.mrf.mxu0
      %v831 = vpop.f32.mrf.mxu0
      %v832 = vadd.f32 0.0, %v831
      %v833 = vpop.f32.mrf.mxu0
      %834 = vmatprep.mubr.bf16.mxu0 0
      %835 = vmatmul.mubr.bf16.gmra.mxu0 %v764
      %v836 = vpop.f32.mrf.mxu0
      %v837 = vadd.f32 0.0, %v836
      %v838 = vpop.f32.mrf.mxu0
      %v839 = vpop.f32.mrf.mxu0
      %v840 = vadd.f32 0.0, %v839
      %v841 = vpop.f32.mrf.mxu0
      %842 = vmatprep.mubr.bf16.mxu0 0
      %843 = vmatmul.mubr.bf16.gmra.mxu0 %v766
      %v844 = vpop.f32.mrf.mxu0
      %v845 = vadd.f32 0.0, %v844
      %v846 = vpop.f32.mrf.mxu0
      %v847 = vpop.f32.mrf.mxu0
      %v848 = vadd.f32 0.0, %v847
      %v849 = vpop.f32.mrf.mxu0
      %850 = vmatprep.mubr.bf16.mxu0 0
      %851 = vmatmul.mubr.bf16.gmra.mxu0 %v768
      %v852 = vpop.f32.mrf.mxu0
      %v853 = vadd.f32 0.0, %v852
      %v854 = vpop.f32.mrf.mxu0
      %v855 = vpop.f32.mrf.mxu0
      %v856 = vadd.f32 0.0, %v855
      %v857 = vpop.f32.mrf.mxu0
      %858 = vmatprep.mubr.bf16.mxu0 0
      %859 = vmatmul.mubr.bf16.gmra.mxu0 %v770
      %v860 = vpop.f32.mrf.mxu0
      %v861 = vadd.f32 0.0, %v860
      %v862 = vpop.f32.mrf.mxu0
      %v863 = vpop.f32.mrf.mxu0
      %v864 = vadd.f32 0.0, %v863
      %v865 = vpop.f32.mrf.mxu0
      %866 = vmatprep.mubr.bf16.mxu0 0
      %867 = vmatmul.mubr.bf16.gmra.mxu0 %v772
      %v868 = vpop.f32.mrf.mxu0
      %v869 = vadd.f32 0.0, %v868
      %v870 = vpop.f32.mrf.mxu0
      %v871 = vpop.f32.mrf.mxu0
      %v872 = vadd.f32 0.0, %v871
      %v873 = vpop.f32.mrf.mxu0
      %874 = vdwg.mxu0
      %v875 = vsel %vm757, %v531, 0
      %v878 = vsel %vm774, %v754, 0
      %880 = vmatprep.subr.bf16.mxu0 0
      %881 = vmatpush1.bf16.msra.mxu0 0
      %882 = vmatprep.subr.bf16.mxu0 0
      %883 = vmatpush1.bf16.msra.mxu0 0
      %884 = vmatprep.subr.bf16.mxu0 0
      %885 = vmatpush1.bf16.msra.mxu0 0
      %886 = vmatprep.subr.bf16.mxu0 0
      %887 = vmatpush1.bf16.msra.mxu0 0
      %888 = vmatprep.subr.bf16.mxu0 0
      %889 = vmatpush1.bf16.msra.mxu0 0
      %890 = vmatprep.subr.bf16.mxu0 0
      %891 = vmatpush1.bf16.msra.mxu0 0
      %892 = vmatprep.subr.bf16.mxu0 0
      %893 = vmatpush1.bf16.msra.mxu0 0
      %894 = vmatprep.subr.bf16.mxu0 0
      %895 = vmatpush1.bf16.msra.mxu0 %v878
      %896 = vmatprep.subr.bf16.mxu0 0
      %897 = vmatpush2.bf16.msra.mxu0 0
      %898 = vmatprep.subr.bf16.mxu0 0
      %899 = vmatpush2.bf16.msra.mxu0 0
      %900 = vmatprep.subr.bf16.mxu0 0
      %901 = vmatpush2.bf16.msra.mxu0 0
      %902 = vmatprep.subr.bf16.mxu0 0
      %903 = vmatpush2.bf16.msra.mxu0 0
      %904 = vmatprep.subr.bf16.mxu0 0
      %905 = vmatpush2.bf16.msra.mxu0 0
      %906 = vmatprep.subr.bf16.mxu0 0
      %907 = vmatpush2.bf16.msra.mxu0 0
      %908 = vmatprep.subr.bf16.mxu0 0
      %909 = vmatpush2.bf16.msra.mxu0 0
      %910 = vmatprep.subr.bf16.mxu0 0
      %911 = vmatpush2.bf16.msra.mxu0 0
      %912 = vmatprep.mubr.bf16.mxu0 0
      %913 = vmatmul.mubr.bf16.gmra.mxu0 %v875
      %v914 = vpop.f32.mrf.mxu0
      %v915 = vadd.f32 %v813, %v914
      %v916 = vpop.f32.mrf.mxu0
      %v917 = vpop.f32.mrf.mxu0
      %v918 = vadd.f32 %v816, %v917
      %v919 = vpop.f32.mrf.mxu0
      %920 = vmatprep.mubr.bf16.mxu0 0
      %921 = vmatmul.mubr.bf16.gmra.mxu0 %v758
      %v922 = vpop.f32.mrf.mxu0
      %v923 = vadd.f32 %v821, %v922
      %v924 = vpop.f32.mrf.mxu0
      %v925 = vpop.f32.mrf.mxu0
      %v926 = vadd.f32 %v824, %v925
      %v927 = vpop.f32.mrf.mxu0
      %928 = vmatprep.mubr.bf16.mxu0 0
      %929 = vmatmul.mubr.bf16.gmra.mxu0 %v760
      %v930 = vpop.f32.mrf.mxu0
      %v931 = vadd.f32 %v829, %v930
      %v932 = vpop.f32.mrf.mxu0
      %v933 = vpop.f32.mrf.mxu0
      %v934 = vadd.f32 %v832, %v933
      %v935 = vpop.f32.mrf.mxu0
      %936 = vmatprep.mubr.bf16.mxu0 0
      %937 = vmatmul.mubr.bf16.gmra.mxu0 %v762
      %v938 = vpop.f32.mrf.mxu0
      %v939 = vadd.f32 %v837, %v938
      %v940 = vpop.f32.mrf.mxu0
      %v941 = vpop.f32.mrf.mxu0
      %v942 = vadd.f32 %v840, %v941
      %v943 = vpop.f32.mrf.mxu0
      %944 = vmatprep.mubr.bf16.mxu0 0
      %945 = vmatmul.mubr.bf16.gmra.mxu0 %v764
      %v946 = vpop.f32.mrf.mxu0
      %v947 = vadd.f32 %v845, %v946
      %v948 = vpop.f32.mrf.mxu0
      %v949 = vpop.f32.mrf.mxu0
      %v950 = vadd.f32 %v848, %v949
      %v951 = vpop.f32.mrf.mxu0
      %952 = vmatprep.mubr.bf16.mxu0 0
      %953 = vmatmul.mubr.bf16.gmra.mxu0 %v766
      %v954 = vpop.f32.mrf.mxu0
      %v955 = vadd.f32 %v853, %v954
      %v956 = vpop.f32.mrf.mxu0
      %v957 = vpop.f32.mrf.mxu0
      %v958 = vadd.f32 %v856, %v957
      %v959 = vpop.f32.mrf.mxu0
      %960 = vmatprep.mubr.bf16.mxu0 0
      %961 = vmatmul.mubr.bf16.gmra.mxu0 %v768
      %v962 = vpop.f32.mrf.mxu0
      %v963 = vadd.f32 %v861, %v962
      %v964 = vpop.f32.mrf.mxu0
      %v965 = vpop.f32.mrf.mxu0
      %v966 = vadd.f32 %v864, %v965
      %v967 = vpop.f32.mrf.mxu0
      %968 = vmatprep.mubr.bf16.mxu0 0
      %969 = vmatmul.mubr.bf16.gmra.mxu0 %v770
      %v970 = vpop.f32.mrf.mxu0
      %v971 = vadd.f32 %v869, %v970
      %v972 = vpop.f32.mrf.mxu0
      %v973 = vpop.f32.mrf.mxu0
      %v974 = vadd.f32 %v872, %v973
      %v975 = vpop.f32.mrf.mxu0
      %976 = vdwg.mxu0
      %s977 = scalar_lea.vmem %s2, 8
      %v978 = vld [vmem:[%s977] sm:$0xf]
      %s979 = scalar_lea.vmem %s2, 12
      %v980 = vld [vmem:[%s979] sm:$0xf]
      %v982 = vsel %vm757, %v673, 0
      %v985 = vsel %vm757, %v683, 0
      %v988 = vsel %vm757, %v693, 0
      %v991 = vsel %vm757, %v703, 0
      %v994 = vsel %vm757, %v713, 0
      %v997 = vsel %vm757, %v723, 0
      %v1000 = vsel %vm757, %v733, 0
      %v1003 = vsel %vm757, %v743, 0
      %v1006 = vsel %vm774, %v980, 0
      %1008 = vmatprep.subr.bf16.mxu0 0
      %1009 = vmatpush1.bf16.msra.mxu0 0
      %1010 = vmatprep.subr.bf16.mxu0 0
      %1011 = vmatpush1.bf16.msra.mxu0 0
      %1012 = vmatprep.subr.bf16.mxu0 0
      %1013 = vmatpush1.bf16.msra.mxu0 0
      %1014 = vmatprep.subr.bf16.mxu0 0
      %1015 = vmatpush1.bf16.msra.mxu0 0
      %1016 = vmatprep.subr.bf16.mxu0 0
      %1017 = vmatpush1.bf16.msra.mxu0 0
      %1018 = vmatprep.subr.bf16.mxu0 0
      %1019 = vmatpush1.bf16.msra.mxu0 0
      %1020 = vmatprep.subr.bf16.mxu0 0
      %1021 = vmatpush1.bf16.msra.mxu0 0
      %1022 = vmatprep.subr.bf16.mxu0 0
      %1023 = vmatpush1.bf16.msra.mxu0 %v1006
      %1024 = vmatprep.subr.bf16.mxu0 0
      %1025 = vmatpush2.bf16.msra.mxu0 0
      %1026 = vmatprep.subr.bf16.mxu0 0
      %1027 = vmatpush2.bf16.msra.mxu0 0
      %1028 = vmatprep.subr.bf16.mxu0 0
      %1029 = vmatpush2.bf16.msra.mxu0 0
      %1030 = vmatprep.subr.bf16.mxu0 0
      %1031 = vmatpush2.bf16.msra.mxu0 0
      %1032 = vmatprep.subr.bf16.mxu0 0
      %1033 = vmatpush2.bf16.msra.mxu0 0
      %1034 = vmatprep.subr.bf16.mxu0 0
      %1035 = vmatpush2.bf16.msra.mxu0 0
      %1036 = vmatprep.subr.bf16.mxu0 0
      %1037 = vmatpush2.bf16.msra.mxu0 0
      %1038 = vmatprep.subr.bf16.mxu0 0
      %1039 = vmatpush2.bf16.msra.mxu0 0
      %1040 = vmatprep.mubr.bf16.mxu0 0
      %1041 = vmatmul.mubr.bf16.gmra.mxu0 %v982
      %v1042 = vpop.f32.mrf.mxu0
      %v1043 = vadd.f32 0.0, %v1042
      %v1044 = vpop.f32.mrf.mxu0
      %v1045 = vpop.f32.mrf.mxu0
      %v1046 = vadd.f32 0.0, %v1045
      %v1047 = vpop.f32.mrf.mxu0
      %1048 = vmatprep.mubr.bf16.mxu0 0
      %1049 = vmatmul.mubr.bf16.gmra.mxu0 %v985
      %v1050 = vpop.f32.mrf.mxu0
      %v1051 = vadd.f32 0.0, %v1050
      %v1052 = vpop.f32.mrf.mxu0
      %v1053 = vpop.f32.mrf.mxu0
      %v1054 = vadd.f32 0.0, %v1053
      %v1055 = vpop.f32.mrf.mxu0
      %1056 = vmatprep.mubr.bf16.mxu0 0
      %1057 = vmatmul.mubr.bf16.gmra.mxu0 %v988
      %v1058 = vpop.f32.mrf.mxu0
      %v1059 = vadd.f32 0.0, %v1058
      %v1060 = vpop.f32.mrf.mxu0
      %v1061 = vpop.f32.mrf.mxu0
      %v1062 = vadd.f32 0.0, %v1061
      %v1063 = vpop.f32.mrf.mxu0
      %1064 = vmatprep.mubr.bf16.mxu0 0
      %1065 = vmatmul.mubr.bf16.gmra.mxu0 %v991
      %v1066 = vpop.f32.mrf.mxu0
      %v1067 = vadd.f32 0.0, %v1066
      %v1068 = vpop.f32.mrf.mxu0
      %v1069 = vpop.f32.mrf.mxu0
      %v1070 = vadd.f32 0.0, %v1069
      %v1071 = vpop.f32.mrf.mxu0
      %1072 = vmatprep.mubr.bf16.mxu0 0
      %1073 = vmatmul.mubr.bf16.gmra.mxu0 %v994
      %v1074 = vpop.f32.mrf.mxu0
      %v1075 = vadd.f32 0.0, %v1074
      %v1076 = vpop.f32.mrf.mxu0
      %v1077 = vpop.f32.mrf.mxu0
      %v1078 = vadd.f32 0.0, %v1077
      %v1079 = vpop.f32.mrf.mxu0
      %1080 = vmatprep.mubr.bf16.mxu0 0
      %1081 = vmatmul.mubr.bf16.gmra.mxu0 %v997
      %v1082 = vpop.f32.mrf.mxu0
      %v1083 = vadd.f32 0.0, %v1082
      %v1084 = vpop.f32.mrf.mxu0
      %v1085 = vpop.f32.mrf.mxu0
      %v1086 = vadd.f32 0.0, %v1085
      %v1087 = vpop.f32.mrf.mxu0
      %1088 = vmatprep.mubr.bf16.mxu0 0
      %1089 = vmatmul.mubr.bf16.gmra.mxu0 %v1000
      %v1090 = vpop.f32.mrf.mxu0
      %v1091 = vadd.f32 0.0, %v1090
      %v1092 = vpop.f32.mrf.mxu0
      %v1093 = vpop.f32.mrf.mxu0
      %v1094 = vadd.f32 0.0, %v1093
      %v1095 = vpop.f32.mrf.mxu0
      %1096 = vmatprep.mubr.bf16.mxu0 0
      %1097 = vmatmul.mubr.bf16.gmra.mxu0 %v1003
      %v1098 = vpop.f32.mrf.mxu0
      %v1099 = vadd.f32 0.0, %v1098
      %v1100 = vpop.f32.mrf.mxu0
      %v1101 = vpop.f32.mrf.mxu0
      %v1102 = vadd.f32 0.0, %v1101
      %v1103 = vpop.f32.mrf.mxu0
      %1104 = vdwg.mxu0
      %v1106 = vsel %vm757, %v663, 0
      %v1109 = vsel %vm774, %v978, 0
      %1111 = vmatprep.subr.bf16.mxu0 0
      %1112 = vmatpush1.bf16.msra.mxu0 0
      %1113 = vmatprep.subr.bf16.mxu0 0
      %1114 = vmatpush1.bf16.msra.mxu0 0
      %1115 = vmatprep.subr.bf16.mxu0 0
      %1116 = vmatpush1.bf16.msra.mxu0 0
      %1117 = vmatprep.subr.bf16.mxu0 0
      %1118 = vmatpush1.bf16.msra.mxu0 0
      %1119 = vmatprep.subr.bf16.mxu0 0
      %1120 = vmatpush1.bf16.msra.mxu0 0
      %1121 = vmatprep.subr.bf16.mxu0 0
      %1122 = vmatpush1.bf16.msra.mxu0 0
      %1123 = vmatprep.subr.bf16.mxu0 0
      %1124 = vmatpush1.bf16.msra.mxu0 0
      %1125 = vmatprep.subr.bf16.mxu0 0
      %1126 = vmatpush1.bf16.msra.mxu0 %v1109
      %1127 = vmatprep.subr.bf16.mxu0 0
      %1128 = vmatpush2.bf16.msra.mxu0 0
      %1129 = vmatprep.subr.bf16.mxu0 0
      %1130 = vmatpush2.bf16.msra.mxu0 0
      %1131 = vmatprep.subr.bf16.mxu0 0
      %1132 = vmatpush2.bf16.msra.mxu0 0
      %1133 = vmatprep.subr.bf16.mxu0 0
      %1134 = vmatpush2.bf16.msra.mxu0 0
      %1135 = vmatprep.subr.bf16.mxu0 0
      %1136 = vmatpush2.bf16.msra.mxu0 0
      %1137 = vmatprep.subr.bf16.mxu0 0
      %1138 = vmatpush2.bf16.msra.mxu0 0
      %1139 = vmatprep.subr.bf16.mxu0 0
      %1140 = vmatpush2.bf16.msra.mxu0 0
      %1141 = vmatprep.subr.bf16.mxu0 0
      %1142 = vmatpush2.bf16.msra.mxu0 0
      %1143 = vmatprep.mubr.bf16.mxu0 0
      %1144 = vmatmul.mubr.bf16.gmra.mxu0 %v1106
      %v1145 = vpop.f32.mrf.mxu0
      %v1146 = vadd.f32 %v1043, %v1145
      %v1147 = vpop.f32.mrf.mxu0
      %v1148 = vpop.f32.mrf.mxu0
      %v1149 = vadd.f32 %v1046, %v1148
      %v1150 = vpop.f32.mrf.mxu0
      %1151 = vmatprep.mubr.bf16.mxu0 0
      %1152 = vmatmul.mubr.bf16.gmra.mxu0 %v982
      %v1153 = vpop.f32.mrf.mxu0
      %v1154 = vadd.f32 %v1051, %v1153
      %v1155 = vpop.f32.mrf.mxu0
      %v1156 = vpop.f32.mrf.mxu0
      %v1157 = vadd.f32 %v1054, %v1156
      %v1158 = vpop.f32.mrf.mxu0
      %1159 = vmatprep.mubr.bf16.mxu0 0
      %1160 = vmatmul.mubr.bf16.gmra.mxu0 %v985
      %v1161 = vpop.f32.mrf.mxu0
      %v1162 = vadd.f32 %v1059, %v1161
      %v1163 = vpop.f32.mrf.mxu0
      %v1164 = vpop.f32.mrf.mxu0
      %v1165 = vadd.f32 %v1062, %v1164
      %v1166 = vpop.f32.mrf.mxu0
      %1167 = vmatprep.mubr.bf16.mxu0 0
      %1168 = vmatmul.mubr.bf16.gmra.mxu0 %v988
      %v1169 = vpop.f32.mrf.mxu0
      %v1170 = vadd.f32 %v1067, %v1169
      %v1171 = vpop.f32.mrf.mxu0
      %v1172 = vpop.f32.mrf.mxu0
      %v1173 = vadd.f32 %v1070, %v1172
      %v1174 = vpop.f32.mrf.mxu0
      %1175 = vmatprep.mubr.bf16.mxu0 0
      %1176 = vmatmul.mubr.bf16.gmra.mxu0 %v991
      %v1177 = vpop.f32.mrf.mxu0
      %v1178 = vadd.f32 %v1075, %v1177
      %v1179 = vpop.f32.mrf.mxu0
      %v1180 = vpop.f32.mrf.mxu0
      %v1181 = vadd.f32 %v1078, %v1180
      %v1182 = vpop.f32.mrf.mxu0
      %1183 = vmatprep.mubr.bf16.mxu0 0
      %1184 = vmatmul.mubr.bf16.gmra.mxu0 %v994
      %v1185 = vpop.f32.mrf.mxu0
      %v1186 = vadd.f32 %v1083, %v1185
      %v1187 = vpop.f32.mrf.mxu0
      %v1188 = vpop.f32.mrf.mxu0
      %v1189 = vadd.f32 %v1086, %v1188
      %v1190 = vpop.f32.mrf.mxu0
      %1191 = vmatprep.mubr.bf16.mxu0 0
      %1192 = vmatmul.mubr.bf16.gmra.mxu0 %v997
      %v1193 = vpop.f32.mrf.mxu0
      %v1194 = vadd.f32 %v1091, %v1193
      %v1195 = vpop.f32.mrf.mxu0
      %v1196 = vpop.f32.mrf.mxu0
      %v1197 = vadd.f32 %v1094, %v1196
      %v1198 = vpop.f32.mrf.mxu0
      %1199 = vmatprep.mubr.bf16.mxu0 0
      %1200 = vmatmul.mubr.bf16.gmra.mxu0 %v1000
      %v1201 = vpop.f32.mrf.mxu0
      %v1202 = vadd.f32 %v1099, %v1201
      %v1203 = vpop.f32.mrf.mxu0
      %v1204 = vpop.f32.mrf.mxu0
      %v1205 = vadd.f32 %v1102, %v1204
      %v1206 = vpop.f32.mrf.mxu0
      %1207 = vdwg.mxu0
      %1224 = vrot.lane.b32.xlu0 %v1146, 4
      %v1225 = vpop.permute.xlu0 %1224
      %1226 = vrot.lane.b32.xlu0 %v1149, 4
      %v1227 = vpop.permute.xlu0 %1226
      %1228 = vrot.lane.b32.xlu0 %v1154, 4
      %v1229 = vpop.permute.xlu0 %1228
      %1230 = vrot.lane.b32.xlu0 %v1157, 4
      %v1231 = vpop.permute.xlu0 %1230
      %1232 = vrot.lane.b32.xlu0 %v1162, 4
      %v1233 = vpop.permute.xlu0 %1232
      %1234 = vrot.lane.b32.xlu0 %v1165, 4
      %v1235 = vpop.permute.xlu0 %1234
      %1236 = vrot.lane.b32.xlu0 %v1170, 4
      %v1237 = vpop.permute.xlu0 %1236
      %1238 = vrot.lane.b32.xlu0 %v1173, 4
      %v1239 = vpop.permute.xlu0 %1238
      %1240 = vrot.lane.b32.xlu0 %v1178, 4
      %v1241 = vpop.permute.xlu0 %1240
      %1242 = vrot.lane.b32.xlu0 %v1181, 4
      %v1243 = vpop.permute.xlu0 %1242
      %1244 = vrot.lane.b32.xlu0 %v1186, 4
      %v1245 = vpop.permute.xlu0 %1244
      %1246 = vrot.lane.b32.xlu0 %v1189, 4
      %v1247 = vpop.permute.xlu0 %1246
      %1248 = vrot.lane.b32.xlu0 %v1194, 4
      %v1249 = vpop.permute.xlu0 %1248
      %1250 = vrot.lane.b32.xlu0 %v1197, 4
      %v1251 = vpop.permute.xlu0 %1250
      %1252 = vrot.lane.b32.xlu0 %v1202, 4
      %v1253 = vpop.permute.xlu0 %1252
      %1254 = vrot.lane.b32.xlu0 %v1205, 4
      %v1255 = vpop.permute.xlu0 %1254
      %v1272 = vsel %vm529, %v915, %v1225
      %v1273 = vsel %vm529, %v918, %v1227
      %v1274 = vsel %vm529, %v923, %v1229
      %v1275 = vsel %vm529, %v926, %v1231
      %v1276 = vsel %vm529, %v931, %v1233
      %v1277 = vsel %vm529, %v934, %v1235
      %v1278 = vsel %vm529, %v939, %v1237
      %v1279 = vsel %vm529, %v942, %v1239
      %v1280 = vsel %vm529, %v947, %v1241
      %v1281 = vsel %vm529, %v950, %v1243
      %v1282 = vsel %vm529, %v955, %v1245
      %v1283 = vsel %vm529, %v958, %v1247
      %v1284 = vsel %vm529, %v963, %v1249
      %v1285 = vsel %vm529, %v966, %v1251
      %v1286 = vsel %vm529, %v971, %v1253
      %v1287 = vsel %vm529, %v974, %v1255
      %v1289 = vlaneseq
      %v1290 = vshrl.u32 %v1289, 7
      %v1291 = vsub.s32 0, %v1290
      %v1292 = vrot.slane %v351, %v1291
      %v1294 = vadd.f32 %v1272, %v1292
      %v1295 = vadd.f32 %v1273, %v1292
      %v1296 = vadd.f32 %v1274, %v1292
      %v1297 = vadd.f32 %v1275, %v1292
      %v1298 = vadd.f32 %v1276, %v1292
      %v1299 = vadd.f32 %v1277, %v1292
      %v1300 = vadd.f32 %v1278, %v1292
      %v1301 = vadd.f32 %v1279, %v1292
      %v1302 = vadd.f32 %v1280, %v1292
      %v1303 = vadd.f32 %v1281, %v1292
      %v1304 = vadd.f32 %v1282, %v1292
      %v1305 = vadd.f32 %v1283, %v1292
      %v1306 = vadd.f32 %v1284, %v1292
      %v1307 = vadd.f32 %v1285, %v1292
      %v1308 = vadd.f32 %v1286, %v1292
      %v1309 = vadd.f32 %v1287, %v1292
      %1310 = vst.msk [vmem:[%s318] sm:$0xff] %vm757, %v1294
      %1311 = vst.msk [vmem:[%s318 + $0x8] sm:$0xff] %vm757, %v1295
      %1312 = vst.msk [vmem:[%s318 + $0x20] sm:$0xff] %vm757, %v1296
      %1313 = vst.msk [vmem:[%s318 + $0x28] sm:$0xff] %vm757, %v1297
      %1314 = vst.msk [vmem:[%s318 + $0x40] sm:$0xff] %vm757, %v1298
      %1315 = vst.msk [vmem:[%s318 + $0x48] sm:$0xff] %vm757, %v1299
      %1316 = vst.msk [vmem:[%s318 + $0x60] sm:$0xff] %vm757, %v1300
      %1317 = vst.msk [vmem:[%s318 + $0x68] sm:$0xff] %vm757, %v1301
      %1318 = vst.msk [vmem:[%s318 + $0x80] sm:$0xff] %vm757, %v1302
      %1319 = vst.msk [vmem:[%s318 + $0x88] sm:$0xff] %vm757, %v1303
      %1320 = vst.msk [vmem:[%s318 + $0xa0] sm:$0xff] %vm757, %v1304
      %1321 = vst.msk [vmem:[%s318 + $0xa8] sm:$0xff] %vm757, %v1305
      %1322 = vst.msk [vmem:[%s318 + $0xc0] sm:$0xff] %vm757, %v1306
      %1323 = vst.msk [vmem:[%s318 + $0xc8] sm:$0xff] %vm757, %v1307
      %1324 = vst.msk [vmem:[%s318 + $0xe0] sm:$0xff] %vm757, %v1308
      %1325 = vst.msk [vmem:[%s318 + $0xe8] sm:$0xff] %vm757, %v1309
      %s1326 = scalar_lea.vmem %s2, 16
      %v1327 = vld [vmem:[%s1326] sm:$0xf]
      %s1328 = scalar_lea.vmem %s2, 20
      %v1329 = vld [vmem:[%s1328] sm:$0xf]
      %v1330 = vsel %vm757, %v593, 0
      %v1333 = vsel %vm774, %v1329, 0
      %1335 = vmatprep.subr.bf16.mxu0 0
      %1336 = vmatpush1.bf16.msra.mxu0 0
      %1337 = vmatprep.subr.bf16.mxu0 0
      %1338 = vmatpush1.bf16.msra.mxu0 0
      %1339 = vmatprep.subr.bf16.mxu0 0
      %1340 = vmatpush1.bf16.msra.mxu0 0
      %1341 = vmatprep.subr.bf16.mxu0 0
      %1342 = vmatpush1.bf16.msra.mxu0 0
      %1343 = vmatprep.subr.bf16.mxu0 0
      %1344 = vmatpush1.bf16.msra.mxu0 0
      %1345 = vmatprep.subr.bf16.mxu0 0
      %1346 = vmatpush1.bf16.msra.mxu0 0
      %1347 = vmatprep.subr.bf16.mxu0 0
      %1348 = vmatpush1.bf16.msra.mxu0 0
      %1349 = vmatprep.subr.bf16.mxu0 0
      %1350 = vmatpush1.bf16.msra.mxu0 %v1333
      %1351 = vmatprep.subr.bf16.mxu0 0
      %1352 = vmatpush2.bf16.msra.mxu0 0
      %1353 = vmatprep.subr.bf16.mxu0 0
      %1354 = vmatpush2.bf16.msra.mxu0 0
      %1355 = vmatprep.subr.bf16.mxu0 0
      %1356 = vmatpush2.bf16.msra.mxu0 0
      %1357 = vmatprep.subr.bf16.mxu0 0
      %1358 = vmatpush2.bf16.msra.mxu0 0
      %1359 = vmatprep.subr.bf16.mxu0 0
      %1360 = vmatpush2.bf16.msra.mxu0 0
      %1361 = vmatprep.subr.bf16.mxu0 0
      %1362 = vmatpush2.bf16.msra.mxu0 0
      %1363 = vmatprep.subr.bf16.mxu0 0
      %1364 = vmatpush2.bf16.msra.mxu0 0
      %1365 = vmatprep.subr.bf16.mxu0 0
      %1366 = vmatpush2.bf16.msra.mxu0 0
      %1367 = vmatprep.mubr.bf16.mxu0 0
      %1368 = vmatmul.mubr.bf16.gmra.mxu0 %v760
      %v1369 = vpop.f32.mrf.mxu0
      %v1370 = vadd.f32 0.0, %v1369
      %v1371 = vpop.f32.mrf.mxu0
      %v1372 = vpop.f32.mrf.mxu0
      %v1373 = vadd.f32 0.0, %v1372
      %v1374 = vpop.f32.mrf.mxu0
      %1375 = vmatprep.mubr.bf16.mxu0 0
      %1376 = vmatmul.mubr.bf16.gmra.mxu0 %v762
      %v1377 = vpop.f32.mrf.mxu0
      %v1378 = vadd.f32 0.0, %v1377
      %v1379 = vpop.f32.mrf.mxu0
      %v1380 = vpop.f32.mrf.mxu0
      %v1381 = vadd.f32 0.0, %v1380
      %v1382 = vpop.f32.mrf.mxu0
      %1383 = vmatprep.mubr.bf16.mxu0 0
      %1384 = vmatmul.mubr.bf16.gmra.mxu0 %v764
      %v1385 = vpop.f32.mrf.mxu0
      %v1386 = vadd.f32 0.0, %v1385
      %v1387 = vpop.f32.mrf.mxu0
      %v1388 = vpop.f32.mrf.mxu0
      %v1389 = vadd.f32 0.0, %v1388
      %v1390 = vpop.f32.mrf.mxu0
      %1391 = vmatprep.mubr.bf16.mxu0 0
      %1392 = vmatmul.mubr.bf16.gmra.mxu0 %v766
      %v1393 = vpop.f32.mrf.mxu0
      %v1394 = vadd.f32 0.0, %v1393
      %v1395 = vpop.f32.mrf.mxu0
      %v1396 = vpop.f32.mrf.mxu0
      %v1397 = vadd.f32 0.0, %v1396
      %v1398 = vpop.f32.mrf.mxu0
      %1399 = vmatprep.mubr.bf16.mxu0 0
      %1400 = vmatmul.mubr.bf16.gmra.mxu0 %v768
      %v1401 = vpop.f32.mrf.mxu0
      %v1402 = vadd.f32 0.0, %v1401
      %v1403 = vpop.f32.mrf.mxu0
      %v1404 = vpop.f32.mrf.mxu0
      %v1405 = vadd.f32 0.0, %v1404
      %v1406 = vpop.f32.mrf.mxu0
      %1407 = vmatprep.mubr.bf16.mxu0 0
      %1408 = vmatmul.mubr.bf16.gmra.mxu0 %v770
      %v1409 = vpop.f32.mrf.mxu0
      %v1410 = vadd.f32 0.0, %v1409
      %v1411 = vpop.f32.mrf.mxu0
      %v1412 = vpop.f32.mrf.mxu0
      %v1413 = vadd.f32 0.0, %v1412
      %v1414 = vpop.f32.mrf.mxu0
      %1415 = vmatprep.mubr.bf16.mxu0 0
      %1416 = vmatmul.mubr.bf16.gmra.mxu0 %v772
      %v1417 = vpop.f32.mrf.mxu0
      %v1418 = vadd.f32 0.0, %v1417
      %v1419 = vpop.f32.mrf.mxu0
      %v1420 = vpop.f32.mrf.mxu0
      %v1421 = vadd.f32 0.0, %v1420
      %v1422 = vpop.f32.mrf.mxu0
      %1423 = vmatprep.mubr.bf16.mxu0 0
      %1424 = vmatmul.mubr.bf16.gmra.mxu0 %v1330
      %v1425 = vpop.f32.mrf.mxu0
      %v1426 = vadd.f32 0.0, %v1425
      %v1427 = vpop.f32.mrf.mxu0
      %v1428 = vpop.f32.mrf.mxu0
      %v1429 = vadd.f32 0.0, %v1428
      %v1430 = vpop.f32.mrf.mxu0
      %1431 = vdwg.mxu0
      %v1433 = vsel %vm774, %v1327, 0
      %1435 = vmatprep.subr.bf16.mxu0 0
      %1436 = vmatpush1.bf16.msra.mxu0 0
      %1437 = vmatprep.subr.bf16.mxu0 0
      %1438 = vmatpush1.bf16.msra.mxu0 0
      %1439 = vmatprep.subr.bf16.mxu0 0
      %1440 = vmatpush1.bf16.msra.mxu0 0
      %1441 = vmatprep.subr.bf16.mxu0 0
      %1442 = vmatpush1.bf16.msra.mxu0 0
      %1443 = vmatprep.subr.bf16.mxu0 0
      %1444 = vmatpush1.bf16.msra.mxu0 0
      %1445 = vmatprep.subr.bf16.mxu0 0
      %1446 = vmatpush1.bf16.msra.mxu0 0
      %1447 = vmatprep.subr.bf16.mxu0 0
      %1448 = vmatpush1.bf16.msra.mxu0 0
      %1449 = vmatprep.subr.bf16.mxu0 0
      %1450 = vmatpush1.bf16.msra.mxu0 %v1433
      %1451 = vmatprep.subr.bf16.mxu0 0
      %1452 = vmatpush2.bf16.msra.mxu0 0
      %1453 = vmatprep.subr.bf16.mxu0 0
      %1454 = vmatpush2.bf16.msra.mxu0 0
      %1455 = vmatprep.subr.bf16.mxu0 0
      %1456 = vmatpush2.bf16.msra.mxu0 0
      %1457 = vmatprep.subr.bf16.mxu0 0
      %1458 = vmatpush2.bf16.msra.mxu0 0
      %1459 = vmatprep.subr.bf16.mxu0 0
      %1460 = vmatpush2.bf16.msra.mxu0 0
      %1461 = vmatprep.subr.bf16.mxu0 0
      %1462 = vmatpush2.bf16.msra.mxu0 0
      %1463 = vmatprep.subr.bf16.mxu0 0
      %1464 = vmatpush2.bf16.msra.mxu0 0
      %1465 = vmatprep.subr.bf16.mxu0 0
      %1466 = vmatpush2.bf16.msra.mxu0 0
      %1467 = vmatprep.mubr.bf16.mxu0 0
      %1468 = vmatmul.mubr.bf16.gmra.mxu0 %v758
      %v1469 = vpop.f32.mrf.mxu0
      %v1470 = vadd.f32 %v1370, %v1469
      %v1471 = vpop.f32.mrf.mxu0
      %v1472 = vpop.f32.mrf.mxu0
      %v1473 = vadd.f32 %v1373, %v1472
      %v1474 = vpop.f32.mrf.mxu0
      %1475 = vmatprep.mubr.bf16.mxu0 0
      %1476 = vmatmul.mubr.bf16.gmra.mxu0 %v760
      %v1477 = vpop.f32.mrf.mxu0
      %v1478 = vadd.f32 %v1378, %v1477
      %v1479 = vpop.f32.mrf.mxu0
      %v1480 = vpop.f32.mrf.mxu0
      %v1481 = vadd.f32 %v1381, %v1480
      %v1482 = vpop.f32.mrf.mxu0
      %1483 = vmatprep.mubr.bf16.mxu0 0
      %1484 = vmatmul.mubr.bf16.gmra.mxu0 %v762
      %v1485 = vpop.f32.mrf.mxu0
      %v1486 = vadd.f32 %v1386, %v1485
      %v1487 = vpop.f32.mrf.mxu0
      %v1488 = vpop.f32.mrf.mxu0
      %v1489 = vadd.f32 %v1389, %v1488
      %v1490 = vpop.f32.mrf.mxu0
      %1491 = vmatprep.mubr.bf16.mxu0 0
      %1492 = vmatmul.mubr.bf16.gmra.mxu0 %v764
      %v1493 = vpop.f32.mrf.mxu0
      %v1494 = vadd.f32 %v1394, %v1493
      %v1495 = vpop.f32.mrf.mxu0
      %v1496 = vpop.f32.mrf.mxu0
      %v1497 = vadd.f32 %v1397, %v1496
      %v1498 = vpop.f32.mrf.mxu0
      %1499 = vmatprep.mubr.bf16.mxu0 0
      %1500 = vmatmul.mubr.bf16.gmra.mxu0 %v766
      %v1501 = vpop.f32.mrf.mxu0
      %v1502 = vadd.f32 %v1402, %v1501
      %v1503 = vpop.f32.mrf.mxu0
      %v1504 = vpop.f32.mrf.mxu0
      %v1505 = vadd.f32 %v1405, %v1504
      %v1506 = vpop.f32.mrf.mxu0
      %1507 = vmatprep.mubr.bf16.mxu0 0
      %1508 = vmatmul.mubr.bf16.gmra.mxu0 %v768
      %v1509 = vpop.f32.mrf.mxu0
      %v1510 = vadd.f32 %v1410, %v1509
      %v1511 = vpop.f32.mrf.mxu0
      %v1512 = vpop.f32.mrf.mxu0
      %v1513 = vadd.f32 %v1413, %v1512
      %v1514 = vpop.f32.mrf.mxu0
      %1515 = vmatprep.mubr.bf16.mxu0 0
      %1516 = vmatmul.mubr.bf16.gmra.mxu0 %v770
      %v1517 = vpop.f32.mrf.mxu0
      %v1518 = vadd.f32 %v1418, %v1517
      %v1519 = vpop.f32.mrf.mxu0
      %v1520 = vpop.f32.mrf.mxu0
      %v1521 = vadd.f32 %v1421, %v1520
      %v1522 = vpop.f32.mrf.mxu0
      %1523 = vmatprep.mubr.bf16.mxu0 0
      %1524 = vmatmul.mubr.bf16.gmra.mxu0 %v772
      %v1525 = vpop.f32.mrf.mxu0
      %v1526 = vadd.f32 %v1426, %v1525
      %v1527 = vpop.f32.mrf.mxu0
      %v1528 = vpop.f32.mrf.mxu0
      %v1529 = vadd.f32 %v1429, %v1528
      %v1530 = vpop.f32.mrf.mxu0
      %1531 = vdwg.mxu0
      %s1532 = scalar_lea.vmem %s2, 24
      %v1533 = vld [vmem:[%s1532] sm:$0xf]
      %s1534 = scalar_lea.vmem %s2, 28
      %v1535 = vld [vmem:[%s1534] sm:$0xf]
      %v1537 = vsel %vm757, %v753, 0
      %v1540 = vsel %vm774, %v1535, 0
      %1542 = vmatprep.subr.bf16.mxu0 0
      %1543 = vmatpush1.bf16.msra.mxu0 0
      %1544 = vmatprep.subr.bf16.mxu0 0
      %1545 = vmatpush1.bf16.msra.mxu0 0
      %1546 = vmatprep.subr.bf16.mxu0 0
      %1547 = vmatpush1.bf16.msra.mxu0 0
      %1548 = vmatprep.subr.bf16.mxu0 0
      %1549 = vmatpush1.bf16.msra.mxu0 0
      %1550 = vmatprep.subr.bf16.mxu0 0
      %1551 = vmatpush1.bf16.msra.mxu0 0
      %1552 = vmatprep.subr.bf16.mxu0 0
      %1553 = vmatpush1.bf16.msra.mxu0 0
      %1554 = vmatprep.subr.bf16.mxu0 0
      %1555 = vmatpush1.bf16.msra.mxu0 0
      %1556 = vmatprep.subr.bf16.mxu0 0
      %1557 = vmatpush1.bf16.msra.mxu0 %v1540
      %1558 = vmatprep.subr.bf16.mxu0 0
      %1559 = vmatpush2.bf16.msra.mxu0 0
      %1560 = vmatprep.subr.bf16.mxu0 0
      %1561 = vmatpush2.bf16.msra.mxu0 0
      %1562 = vmatprep.subr.bf16.mxu0 0
      %1563 = vmatpush2.bf16.msra.mxu0 0
      %1564 = vmatprep.subr.bf16.mxu0 0
      %1565 = vmatpush2.bf16.msra.mxu0 0
      %1566 = vmatprep.subr.bf16.mxu0 0
      %1567 = vmatpush2.bf16.msra.mxu0 0
      %1568 = vmatprep.subr.bf16.mxu0 0
      %1569 = vmatpush2.bf16.msra.mxu0 0
      %1570 = vmatprep.subr.bf16.mxu0 0
      %1571 = vmatpush2.bf16.msra.mxu0 0
      %1572 = vmatprep.subr.bf16.mxu0 0
      %1573 = vmatpush2.bf16.msra.mxu0 0
      %1574 = vmatprep.mubr.bf16.mxu0 0
      %1575 = vmatmul.mubr.bf16.gmra.mxu0 %v985
      %v1576 = vpop.f32.mrf.mxu0
      %v1577 = vadd.f32 0.0, %v1576
      %v1578 = vpop.f32.mrf.mxu0
      %v1579 = vpop.f32.mrf.mxu0
      %v1580 = vadd.f32 0.0, %v1579
      %v1581 = vpop.f32.mrf.mxu0
      %1582 = vmatprep.mubr.bf16.mxu0 0
      %1583 = vmatmul.mubr.bf16.gmra.mxu0 %v988
      %v1584 = vpop.f32.mrf.mxu0
      %v1585 = vadd.f32 0.0, %v1584
      %v1586 = vpop.f32.mrf.mxu0
      %v1587 = vpop.f32.mrf.mxu0
      %v1588 = vadd.f32 0.0, %v1587
      %v1589 = vpop.f32.mrf.mxu0
      %1590 = vmatprep.mubr.bf16.mxu0 0
      %1591 = vmatmul.mubr.bf16.gmra.mxu0 %v991
      %v1592 = vpop.f32.mrf.mxu0
      %v1593 = vadd.f32 0.0, %v1592
      %v1594 = vpop.f32.mrf.mxu0
      %v1595 = vpop.f32.mrf.mxu0
      %v1596 = vadd.f32 0.0, %v1595
      %v1597 = vpop.f32.mrf.mxu0
      %1598 = vmatprep.mubr.bf16.mxu0 0
      %1599 = vmatmul.mubr.bf16.gmra.mxu0 %v994
      %v1600 = vpop.f32.mrf.mxu0
      %v1601 = vadd.f32 0.0, %v1600
      %v1602 = vpop.f32.mrf.mxu0
      %v1603 = vpop.f32.mrf.mxu0
      %v1604 = vadd.f32 0.0, %v1603
      %v1605 = vpop.f32.mrf.mxu0
      %1606 = vmatprep.mubr.bf16.mxu0 0
      %1607 = vmatmul.mubr.bf16.gmra.mxu0 %v997
      %v1608 = vpop.f32.mrf.mxu0
      %v1609 = vadd.f32 0.0, %v1608
      %v1610 = vpop.f32.mrf.mxu0
      %v1611 = vpop.f32.mrf.mxu0
      %v1612 = vadd.f32 0.0, %v1611
      %v1613 = vpop.f32.mrf.mxu0
      %1614 = vmatprep.mubr.bf16.mxu0 0
      %1615 = vmatmul.mubr.bf16.gmra.mxu0 %v1000
      %v1616 = vpop.f32.mrf.mxu0
      %v1617 = vadd.f32 0.0, %v1616
      %v1618 = vpop.f32.mrf.mxu0
      %v1619 = vpop.f32.mrf.mxu0
      %v1620 = vadd.f32 0.0, %v1619
      %v1621 = vpop.f32.mrf.mxu0
      %1622 = vmatprep.mubr.bf16.mxu0 0
      %1623 = vmatmul.mubr.bf16.gmra.mxu0 %v1003
      %v1624 = vpop.f32.mrf.mxu0
      %v1625 = vadd.f32 0.0, %v1624
      %v1626 = vpop.f32.mrf.mxu0
      %v1627 = vpop.f32.mrf.mxu0
      %v1628 = vadd.f32 0.0, %v1627
      %v1629 = vpop.f32.mrf.mxu0
      %1630 = vmatprep.mubr.bf16.mxu0 0
      %1631 = vmatmul.mubr.bf16.gmra.mxu0 %v1537
      %v1632 = vpop.f32.mrf.mxu0
      %v1633 = vadd.f32 0.0, %v1632
      %v1634 = vpop.f32.mrf.mxu0
      %v1635 = vpop.f32.mrf.mxu0
      %v1636 = vadd.f32 0.0, %v1635
      %v1637 = vpop.f32.mrf.mxu0
      %1638 = vdwg.mxu0
      %v1640 = vsel %vm774, %v1533, 0
      %1642 = vmatprep.subr.bf16.mxu0 0
      %1643 = vmatpush1.bf16.msra.mxu0 0
      %1644 = vmatprep.subr.bf16.mxu0 0
      %1645 = vmatpush1.bf16.msra.mxu0 0
      %1646 = vmatprep.subr.bf16.mxu0 0
      %1647 = vmatpush1.bf16.msra.mxu0 0
      %1648 = vmatprep.subr.bf16.mxu0 0
      %1649 = vmatpush1.bf16.msra.mxu0 0
      %1650 = vmatprep.subr.bf16.mxu0 0
      %1651 = vmatpush1.bf16.msra.mxu0 0
      %1652 = vmatprep.subr.bf16.mxu0 0
      %1653 = vmatpush1.bf16.msra.mxu0 0
      %1654 = vmatprep.subr.bf16.mxu0 0
      %1655 = vmatpush1.bf16.msra.mxu0 0
      %1656 = vmatprep.subr.bf16.mxu0 0
      %1657 = vmatpush1.bf16.msra.mxu0 %v1640
      %1658 = vmatprep.subr.bf16.mxu0 0
      %1659 = vmatpush2.bf16.msra.mxu0 0
      %1660 = vmatprep.subr.bf16.mxu0 0
      %1661 = vmatpush2.bf16.msra.mxu0 0
      %1662 = vmatprep.subr.bf16.mxu0 0
      %1663 = vmatpush2.bf16.msra.mxu0 0
      %1664 = vmatprep.subr.bf16.mxu0 0
      %1665 = vmatpush2.bf16.msra.mxu0 0
      %1666 = vmatprep.subr.bf16.mxu0 0
      %1667 = vmatpush2.bf16.msra.mxu0 0
      %1668 = vmatprep.subr.bf16.mxu0 0
      %1669 = vmatpush2.bf16.msra.mxu0 0
      %1670 = vmatprep.subr.bf16.mxu0 0
      %1671 = vmatpush2.bf16.msra.mxu0 0
      %1672 = vmatprep.subr.bf16.mxu0 0
      %1673 = vmatpush2.bf16.msra.mxu0 0
      %1674 = vmatprep.mubr.bf16.mxu0 0
      %1675 = vmatmul.mubr.bf16.gmra.mxu0 %v982
      %v1676 = vpop.f32.mrf.mxu0
      %v1677 = vadd.f32 %v1577, %v1676
      %v1678 = vpop.f32.mrf.mxu0
      %v1679 = vpop.f32.mrf.mxu0
      %v1680 = vadd.f32 %v1580, %v1679
      %v1681 = vpop.f32.mrf.mxu0
      %1682 = vmatprep.mubr.bf16.mxu0 0
      %1683 = vmatmul.mubr.bf16.gmra.mxu0 %v985
      %v1684 = vpop.f32.mrf.mxu0
      %v1685 = vadd.f32 %v1585, %v1684
      %v1686 = vpop.f32.mrf.mxu0
      %v1687 = vpop.f32.mrf.mxu0
      %v1688 = vadd.f32 %v1588, %v1687
      %v1689 = vpop.f32.mrf.mxu0
      %1690 = vmatprep.mubr.bf16.mxu0 0
      %1691 = vmatmul.mubr.bf16.gmra.mxu0 %v988
      %v1692 = vpop.f32.mrf.mxu0
      %v1693 = vadd.f32 %v1593, %v1692
      %v1694 = vpop.f32.mrf.mxu0
      %v1695 = vpop.f32.mrf.mxu0
      %v1696 = vadd.f32 %v1596, %v1695
      %v1697 = vpop.f32.mrf.mxu0
      %1698 = vmatprep.mubr.bf16.mxu0 0
      %1699 = vmatmul.mubr.bf16.gmra.mxu0 %v991
      %v1700 = vpop.f32.mrf.mxu0
      %v1701 = vadd.f32 %v1601, %v1700
      %v1702 = vpop.f32.mrf.mxu0
      %v1703 = vpop.f32.mrf.mxu0
      %v1704 = vadd.f32 %v1604, %v1703
      %v1705 = vpop.f32.mrf.mxu0
      %1706 = vmatprep.mubr.bf16.mxu0 0
      %1707 = vmatmul.mubr.bf16.gmra.mxu0 %v994
      %v1708 = vpop.f32.mrf.mxu0
      %v1709 = vadd.f32 %v1609, %v1708
      %v1710 = vpop.f32.mrf.mxu0
      %v1711 = vpop.f32.mrf.mxu0
      %v1712 = vadd.f32 %v1612, %v1711
      %v1713 = vpop.f32.mrf.mxu0
      %1714 = vmatprep.mubr.bf16.mxu0 0
      %1715 = vmatmul.mubr.bf16.gmra.mxu0 %v997
      %v1716 = vpop.f32.mrf.mxu0
      %v1717 = vadd.f32 %v1617, %v1716
      %v1718 = vpop.f32.mrf.mxu0
      %v1719 = vpop.f32.mrf.mxu0
      %v1720 = vadd.f32 %v1620, %v1719
      %v1721 = vpop.f32.mrf.mxu0
      %1722 = vmatprep.mubr.bf16.mxu0 0
      %1723 = vmatmul.mubr.bf16.gmra.mxu0 %v1000
      %v1724 = vpop.f32.mrf.mxu0
      %v1725 = vadd.f32 %v1625, %v1724
      %v1726 = vpop.f32.mrf.mxu0
      %v1727 = vpop.f32.mrf.mxu0
      %v1728 = vadd.f32 %v1628, %v1727
      %v1729 = vpop.f32.mrf.mxu0
      %1730 = vmatprep.mubr.bf16.mxu0 0
      %1731 = vmatmul.mubr.bf16.gmra.mxu0 %v1003
      %v1732 = vpop.f32.mrf.mxu0
      %v1733 = vadd.f32 %v1633, %v1732
      %v1734 = vpop.f32.mrf.mxu0
      %v1735 = vpop.f32.mrf.mxu0
      %v1736 = vadd.f32 %v1636, %v1735
      %v1737 = vpop.f32.mrf.mxu0
      %1738 = vdwg.mxu0
      %1755 = vrot.lane.b32.xlu0 %v1677, 4
      %v1756 = vpop.permute.xlu0 %1755
      %1757 = vrot.lane.b32.xlu0 %v1680, 4
      %v1758 = vpop.permute.xlu0 %1757
      %1759 = vrot.lane.b32.xlu0 %v1685, 4
      %v1760 = vpop.permute.xlu0 %1759
      %1761 = vrot.lane.b32.xlu0 %v1688, 4
      %v1762 = vpop.permute.xlu0 %1761
      %1763 = vrot.lane.b32.xlu0 %v1693, 4
      %v1764 = vpop.permute.xlu0 %1763
      %1765 = vrot.lane.b32.xlu0 %v1696, 4
      %v1766 = vpop.permute.xlu0 %1765
      %1767 = vrot.lane.b32.xlu0 %v1701, 4
      %v1768 = vpop.permute.xlu0 %1767
      %1769 = vrot.lane.b32.xlu0 %v1704, 4
      %v1770 = vpop.permute.xlu0 %1769
      %1771 = vrot.lane.b32.xlu0 %v1709, 4
      %v1772 = vpop.permute.xlu0 %1771
      %1773 = vrot.lane.b32.xlu0 %v1712, 4
      %v1774 = vpop.permute.xlu0 %1773
      %1775 = vrot.lane.b32.xlu0 %v1717, 4
      %v1776 = vpop.permute.xlu0 %1775
      %1777 = vrot.lane.b32.xlu0 %v1720, 4
      %v1778 = vpop.permute.xlu0 %1777
      %1779 = vrot.lane.b32.xlu0 %v1725, 4
      %v1780 = vpop.permute.xlu0 %1779
      %1781 = vrot.lane.b32.xlu0 %v1728, 4
      %v1782 = vpop.permute.xlu0 %1781
      %1783 = vrot.lane.b32.xlu0 %v1733, 4
      %v1784 = vpop.permute.xlu0 %1783
      %1785 = vrot.lane.b32.xlu0 %v1736, 4
      %v1786 = vpop.permute.xlu0 %1785
      %v1803 = vsel %vm529, %v1470, %v1756
      %v1804 = vsel %vm529, %v1473, %v1758
      %v1805 = vsel %vm529, %v1478, %v1760
      %v1806 = vsel %vm529, %v1481, %v1762
      %v1807 = vsel %vm529, %v1486, %v1764
      %v1808 = vsel %vm529, %v1489, %v1766
      %v1809 = vsel %vm529, %v1494, %v1768
      %v1810 = vsel %vm529, %v1497, %v1770
      %v1811 = vsel %vm529, %v1502, %v1772
      %v1812 = vsel %vm529, %v1505, %v1774
      %v1813 = vsel %vm529, %v1510, %v1776
      %v1814 = vsel %vm529, %v1513, %v1778
      %v1815 = vsel %vm529, %v1518, %v1780
      %v1816 = vsel %vm529, %v1521, %v1782
      %v1817 = vsel %vm529, %v1526, %v1784
      %v1818 = vsel %vm529, %v1529, %v1786
      %v1819 = vadd.f32 %v1803, %v1292
      %v1820 = vadd.f32 %v1804, %v1292
      %v1821 = vadd.f32 %v1805, %v1292
      %v1822 = vadd.f32 %v1806, %v1292
      %v1823 = vadd.f32 %v1807, %v1292
      %v1824 = vadd.f32 %v1808, %v1292
      %v1825 = vadd.f32 %v1809, %v1292
      %v1826 = vadd.f32 %v1810, %v1292
      %v1827 = vadd.f32 %v1811, %v1292
      %v1828 = vadd.f32 %v1812, %v1292
      %v1829 = vadd.f32 %v1813, %v1292
      %v1830 = vadd.f32 %v1814, %v1292
      %v1831 = vadd.f32 %v1815, %v1292
      %v1832 = vadd.f32 %v1816, %v1292
      %v1833 = vadd.f32 %v1817, %v1292
      %v1834 = vadd.f32 %v1818, %v1292
      %s1835 = scalar_lea.vmem %s318, 16
      %1836 = vst.msk [vmem:[%s1835] sm:$0xff] %vm757, %v1819
      %1837 = vst.msk [vmem:[%s1835 + $0x8] sm:$0xff] %vm757, %v1820
      %1838 = vst.msk [vmem:[%s1835 + $0x20] sm:$0xff] %vm757, %v1821
      %1839 = vst.msk [vmem:[%s1835 + $0x28] sm:$0xff] %vm757, %v1822
      %1840 = vst.msk [vmem:[%s1835 + $0x40] sm:$0xff] %vm757, %v1823
      %1841 = vst.msk [vmem:[%s1835 + $0x48] sm:$0xff] %vm757, %v1824
      %1842 = vst.msk [vmem:[%s1835 + $0x60] sm:$0xff] %vm757, %v1825
      %1843 = vst.msk [vmem:[%s1835 + $0x68] sm:$0xff] %vm757, %v1826
      %1844 = vst.msk [vmem:[%s1835 + $0x80] sm:$0xff] %vm757, %v1827
      %1845 = vst.msk [vmem:[%s1835 + $0x88] sm:$0xff] %vm757, %v1828
      %1846 = vst.msk [vmem:[%s1835 + $0xa0] sm:$0xff] %vm757, %v1829
      %1847 = vst.msk [vmem:[%s1835 + $0xa8] sm:$0xff] %vm757, %v1830
      %1848 = vst.msk [vmem:[%s1835 + $0xc0] sm:$0xff] %vm757, %v1831
      %1849 = vst.msk [vmem:[%s1835 + $0xc8] sm:$0xff] %vm757, %v1832
      %1850 = vst.msk [vmem:[%s1835 + $0xe0] sm:$0xff] %vm757, %v1833
      %1851 = vst.msk [vmem:[%s1835 + $0xe8] sm:$0xff] %vm757, %v1834
      %s1852 = smul.u32 8, %s20
      %p1853 = scmp.lt.s32.totalorder %s19, 1
      %s1854 = scalar_select %p1853, %s19, 1
      %p1855 = scmp.lt.s32.totalorder %s1852, 15
      %s1856 = scalar_select %p1855, %s1852, 15
      %s1857 = smul.addr %s1856, 4
      %s1858 = smul.addr %s1854, 64
      %s1859 = sadd.s32 %s1857, %s1858
      %s1860 = smul.addr %s1859, 8
      %s1861 = scalar_lea.vmem %s4, %s1860
      // Predicated region
      $region37: #{tpu_custom_call.1} parent=35 // pred_check
        %p1862 = pneg %p149
      $region38: #{tpu_custom_call.1} parent=35 // pred_check_branch
        %1864 = sbr.rel (%p1862) target = $region40
      $region39: #{tpu_custom_call.1} parent=35 // pred_region
        %s1865 = smul.u32 8, %s20
      $region40: #{tpu_custom_call.1} parent=35 // pred_fallthru
        _
    $region36: #{tpu_custom_call.1} parent=5 // pred_fallthru
      _
    %p1866 = scmp.le.s32.totalorder 2, %s10
    // Predicated region
    $region41: #{tpu_custom_call.1} parent=5 // pred_check
      %p1867 = pneg %p1866
    $region42: #{tpu_custom_call.1} parent=5 // pred_check_branch
      %1869 = sbr.rel (%p1867) target = $region44
    $region43: #{tpu_custom_call.1} parent=5 // pred_region
      %s1870 = ssub.s32 %s10, 2
      // Predicated region
      $region45: #{tpu_custom_call.1} parent=43 // pred_check
        %p1871 = pneg %p155
      $region46: #{tpu_custom_call.1} parent=43 // pred_check_branch
        %1873 = sbr.rel (%p1871) target = $region48
      $region47: #{tpu_custom_call.1} parent=43 // pred_region
        %s1874 = smul.u32 8, %s22
        %p1875 = scmp.lt.s32.totalorder %s21, 1
        %s1876 = scalar_select %p1875, %s21, 1
        %p1877 = scmp.lt.s32.totalorder %s1874, 15
        %s1878 = scalar_select %p1877, %s1874, 15
        %s1879 = smul.addr %s1878, 4
        %s1880 = smul.addr %s1876, 64
        %s1881 = sadd.s32 %s1879, %s1880
        %s1882 = smul.addr %s1881, 8
        %s1883 = scalar_lea.vmem %s4, %s1882
      $region48: #{tpu_custom_call.1} parent=43 // pred_fallthru
        _
    $region44: #{tpu_custom_call.1} parent=5 // pred_fallthru
      _
  $region6: #{tpu_custom_call.1} parent=0 // loop_footer
    %s14 = sadd.s32 1, %s10
  $region7: #{tpu_custom_call.1} parent=0 // loop_footer_branch
    %9 = sbr.rel target = $region3
  $region8: #{tpu_custom_call.1} parent=0 // loop_exit
    _

</llo_original>
